<compile_context>
chip_gen: v7x
topology: tpu7x:2x2x1
jax: 0.10.0
libtpu: 0.0.40
codegen_flags: <defaults>
</compile_context>

<pallas_src>
import functools

import jax
import jax.numpy as jnp
from jax.experimental import pallas as pl
from jax.experimental.pallas import tpu as pltpu


_STATS_LANES = 128  # lane-dense (padded) width of the fused [mean | logvar] projection


def _round_up(a, m):
    return ((a + m - 1) // m) * m


def _vae_kernel(*refs, latent, sample):
    """One batch tile: encoder MLP -> reparameterize -> decoder MLP, all in VMEM."""
    if sample:
        (x_ref, eps_ref, w1_ref, b1_ref, wml_ref, bml_ref,
         wd1_ref, bd1_ref, wd2_ref, bd2_ref, xrec_ref, stats_ref) = refs
    else:
        (x_ref, w1_ref, b1_ref, wml_ref, bml_ref,
         wd1_ref, bd1_ref, wd2_ref, bd2_ref, xrec_ref, stats_ref) = refs
        eps_ref = None

    # x arrives as f32 (single HBM read); cast to bf16 in VMEM right before the MXU dot.
    x = x_ref[...].astype(jnp.bfloat16)                                 # [TB, Din]

    # ---- encode: Linear(Din, H) + ReLU ----
    h = jnp.dot(x, w1_ref[...], preferred_element_type=jnp.float32) + b1_ref[...]
    h = jnp.maximum(h, 0.0)                                             # [TB, H] f32

    # ---- fused (mean | logvar) projection, lane-padded to 128 ----
    stats = jnp.dot(h.astype(jnp.bfloat16), wml_ref[...],
                    preferred_element_type=jnp.float32) + bml_ref[...]  # [TB, 128]
    stats_ref[...] = stats                                              # lane-dense store

    # ---- reparameterize without narrow lane slices ----
    # lanes [0,Z): mean ; lanes [Z,2Z): eps * exp(0.5*logvar) (eps pre-placed there) ; rest 0.
    lane = jax.lax.broadcasted_iota(jnp.int32, stats.shape, 1)
    if sample:
        z_full = jnp.where(lane < latent, stats, eps_ref[...] * jnp.exp(0.5 * stats))
    else:
        z_full = jnp.where(lane < latent, stats, 0.0)

    # ---- decode: Linear(Z, H) + ReLU -> Linear(H, Din) ----
    # wd1 rows are duplicated onto the mean lanes and the noise lanes, so this K=128
    # lane-dense matmul equals (mean + eps*std) @ wd1 (up to bf16 rounding order).
    hd = jnp.dot(z_full.astype(jnp.bfloat16), wd1_ref[...],
                 preferred_element_type=jnp.float32) + bd1_ref[...]
    hd = jnp.maximum(hd, 0.0)                                           # [TB, H]
    xrec = jnp.dot(hd.astype(jnp.bfloat16), wd2_ref[...],
                   preferred_element_type=jnp.float32) + bd2_ref[...]   # [TB, Din]
    xrec_ref[...] = xrec.astype(xrec_ref.dtype)                         # bf16 writeback


def make_params(key, din, hidden, latent):
    """Deterministic synthetic parameters. Weights bf16, biases f32 [1, n]."""
    ks = jax.random.split(key, 10)
    s = lambda fan_in: 1.0 / jnp.sqrt(jnp.float32(fan_in))
    w1 = (jax.random.normal(ks[0], (din, hidden), jnp.float32) * s(din)).astype(jnp.bfloat16)
    b1 = jax.random.normal(ks[1], (1, hidden), jnp.float32) * 0.01
    wmu = (jax.random.normal(ks[2], (hidden, latent), jnp.float32) * s(hidden)).astype(jnp.bfloat16)
    bmu = jax.random.normal(ks[3], (1, latent), jnp.float32) * 0.01
    wlv = (jax.random.normal(ks[4], (hidden, latent), jnp.float32) * s(hidden)).astype(jnp.bfloat16)
    blv = jax.random.normal(ks[5], (1, latent), jnp.float32) * 0.01
    wd1 = (jax.random.normal(ks[6], (latent, hidden), jnp.float32) * s(latent)).astype(jnp.bfloat16)
    bd1 = jax.random.normal(ks[7], (1, hidden), jnp.float32) * 0.01
    wd2 = (jax.random.normal(ks[8], (hidden, din), jnp.float32) * s(hidden)).astype(jnp.bfloat16)
    bd2 = jax.random.normal(ks[9], (1, din), jnp.float32) * 0.01
    return (w1, b1, wmu, bmu, wlv, blv, wd1, bd1, wd2, bd2)


def prepare_params(params, latent):
    """One-time parameter prep (hoisted out of the forward pass).

    Fuses and lane-pads the (mean|logvar) projection to [H, 128], builds the lane-dense
    decoder-in weight [128, H] with wd1 duplicated on mean/noise lane groups, and fixes dtypes.
    """
    (w1, b1, wmu, bmu, wlv, blv, wd1, bd1, wd2, bd2) = params
    hidden = w1.shape[1]
    assert 2 * latent <= _STATS_LANES, "latent too large for fused/padded stats layout"
    pad = _STATS_LANES - 2 * latent

    wml = jnp.pad(jnp.concatenate([wmu, wlv], axis=1), ((0, 0), (0, pad))).astype(jnp.bfloat16)
    bml = jnp.pad(jnp.concatenate([bmu, blv], axis=1), ((0, 0), (0, pad))).astype(jnp.float32)

    wd1_16 = wd1.astype(jnp.bfloat16)
    wd1f = jnp.zeros((_STATS_LANES, hidden), jnp.bfloat16)
    wd1f = wd1f.at[:latent].set(wd1_16).at[latent:2 * latent].set(wd1_16)

    return dict(
        w1=w1.astype(jnp.bfloat16), b1=b1.astype(jnp.float32),
        wml=wml, bml=bml,
        wd1f=wd1f, bd1=bd1.astype(jnp.float32),
        wd2=wd2.astype(jnp.bfloat16), bd2=bd2.astype(jnp.float32),
        latent=latent,
    )


def vae_forward(x_nchw, sid_nums, fused, eps=None, sample_from_latent=True, tb=128):
    """Fused VAE forward. Returns (x_recon [B,C,H,W] bf16, mean [B,Z] f32, logvar [B,Z] f32).

    tb: batch tile (multiple of 16). 128 default; 256 pays off on v6e/v7x at large B; keep
    enough tiles (>=4 per core) on v7x so the BlockSpec pipeline overlaps DMA with compute.
    """
    # TODO(synk): sid_nums has no defined compute (abstract decode() would consume it).
    B, C, Hh, Ww = x_nchw.shape
    Din = C * Hh * Ww
    Z = fused["latent"]
    sample = bool(sample_from_latent)

    tb = max(16, min(_round_up(tb, 16), _round_up(B, 16)))
    B_pad = _round_up(B, tb)
    nb = B_pad // tb

    x_flat = x_nchw.reshape(B, Din)                 # stays f32; kernel casts to bf16 in VMEM
    if B_pad != B:
        x_flat = jnp.pad(x_flat, ((0, B_pad - B), (0, 0)))

    row_spec = lambda n: pl.BlockSpec((tb, n), lambda i: (i, 0))    # batch-tiled operands

    operands = [x_flat]
    op_specs = [row_spec(Din)]
    if sample:
        assert eps is not None, "eps is required when sample_from_latent=True"
        # Place eps on the logvar lanes [Z, 2Z) of the padded stats layout; zeros elsewhere.
        eps_pad = jnp.pad(eps.astype(jnp.float32),
                          ((0, B_pad - B), (Z, _STATS_LANES - 2 * Z)))
        operands.append(eps_pad)
        op_specs.append(row_spec(_STATS_LANES))

    weights = [fused["w1"], fused["b1"], fused["wml"], fused["bml"],
               fused["wd1f"], fused["bd1"], fused["wd2"], fused["bd2"]]

    kernel = functools.partial(_vae_kernel, latent=Z, sample=sample)
    out_shape = (
        jax.ShapeDtypeStruct((B_pad, Din), jnp.bfloat16),           # bf16 recon writeback
        jax.ShapeDtypeStruct((B_pad, _STATS_LANES), jnp.float32),   # fused [mean|logvar|0]
    )
    out_specs = (row_spec(Din), row_spec(_STATS_LANES))

    def run(pinned_mode):
        def pinned(a):
            if pinned_mode is None:
                return pl.BlockSpec(a.shape, lambda i: (0, 0))
            return pl.BlockSpec(a.shape, lambda i: (0, 0), pipeline_mode=pinned_mode)
        return pl.pallas_call(
            kernel,
            grid=(nb,),
            out_shape=out_shape,
            in_specs=op_specs + [pinned(w) for w in weights],
            out_specs=out_specs,
            compiler_params=pltpu.CompilerParams(
                dimension_semantics=("parallel",),   # batch tiles across TCs (v7x megacore)
            ),
        )(*operands, *weights)

    try:
        # Grid-invariant weights: single VMEM buffer (double-buffering them is pure waste).
        xrec, stats = run(pl.Buffered(1))
    except Exception:
        xrec, stats = run(None)      # fallback: default buffering if Buffered(1) is rejected

    xrec = xrec[:B].reshape(B, C, Hh, Ww)
    mean = stats[:B, :Z]
    logvar = stats[:B, Z:2 * Z]
    return xrec, mean, logvar


def reference_forward(x_nchw, params, eps, sample_from_latent=True):
    """Pure-JAX reference mirroring the kernel numerics (bf16 matmul inputs, f32 accumulation).

    The decoder input is formed as mean-contribution + noise-contribution, which equals
    relu(z @ wd1 + bd1) with z = eps*exp(0.5*logvar) + mean, up to bf16 rounding order.
    """
    (w1, b1, wmu, bmu, wlv, blv, wd1, bd1, wd2, bd2) = params
    f32, bf16 = jnp.float32, jnp.bfloat16
    B = x_nchw.shape[0]
    x = x_nchw.reshape(B, -1).astype(bf16)
    h = jnp.maximum(jnp.dot(x, w1.astype(bf16), preferred_element_type=f32) + b1, 0.0)
    h16 = h.astype(bf16)
    mean = jnp.dot(h16, wmu.astype(bf16), preferred_element_type=f32) + bmu
    logvar = jnp.dot(h16, wlv.astype(bf16), preferred_element_type=f32) + blv
    wd1_16 = wd1.astype(bf16)
    pre = jnp.dot(mean.astype(bf16), wd1_16, preferred_element_type=f32) + bd1
    if sample_from_latent:
        noise = (eps * jnp.exp(0.5 * logvar)).astype(bf16)
        pre = pre + jnp.dot(noise, wd1_16, preferred_element_type=f32)
    hd = jnp.maximum(pre, 0.0)
    xrec = jnp.dot(hd.astype(bf16), wd2.astype(bf16), preferred_element_type=f32) + bd2
    return xrec.reshape(x_nchw.shape), mean, logvar


if __name__ == "__main__":
    key = jax.random.PRNGKey(0)
    k_x, k_p, k_e, k_x2, k_e2 = jax.random.split(key, 5)

    # Small shapes consistent with the module: NCHW image batch -> flatten -> MLP VAE.
    B, C, H, W = 2, 4, 16, 16
    Din, HID, Z = C * H * W, 128, 32          # Din = 1024

    x = jax.random.normal(k_x, (B, C, H, W), jnp.float32)
    sid_nums = jnp.arange(B, dtype=jnp.int32)                 # passed through, unused
    params = make_params(k_p, Din, HID, Z)
    fused = prepare_params(params, Z)                         # one-time param prep (hoisted)
    eps = jax.random.normal(k_e, (B, Z), jnp.float32)

    # Stochastic (reparameterized) path.
    xrec, mean, logvar = vae_forward(x, sid_nums, fused, eps, sample_from_latent=True)
    jax.block_until_ready((xrec, mean, logvar))
    xr_r, m_r, lv_r = reference_forward(x, params, eps, sample_from_latent=True)
    assert jnp.allclose(mean, m_r, atol=5e-3, rtol=5e-3)
    assert jnp.allclose(logvar, lv_r, atol=5e-3, rtol=5e-3)
    assert jnp.allclose(xrec.astype(jnp.float32), xr_r, atol=2e-2, rtol=2e-2)

    # Deterministic path (z = mean): separate kernel variant, no eps operand / DMA at all.
    xrec_d, mean_d, logvar_d = vae_forward(x, sid_nums, fused, None, sample_from_latent=False)
    jax.block_until_ready((xrec_d, mean_d, logvar_d))
    xr_dr, _, _ = reference_forward(x, params, eps, sample_from_latent=False)
    assert jnp.allclose(xrec_d.astype(jnp.float32), xr_dr, atol=2e-2, rtol=2e-2)

    # Multi-tile grid with a ragged batch (exercises padding + the parallel batch grid).
    B2 = 20
    x2 = jax.random.normal(k_x2, (B2, C, H, W), jnp.float32)
    eps2 = jax.random.normal(k_e2, (B2, Z), jnp.float32)
    sid2 = jnp.arange(B2, dtype=jnp.int32)
    xrec2, mean2, logvar2 = vae_forward(x2, sid2, fused, eps2, sample_from_latent=True, tb=16)
    jax.block_until_ready((xrec2, mean2, logvar2))
    xr2_r, m2_r, lv2_r = reference_forward(x2, params, eps2, sample_from_latent=True)
    assert jnp.allclose(mean2, m2_r, atol=5e-3, rtol=5e-3)
    assert jnp.allclose(logvar2, lv2_r, atol=5e-3, rtol=5e-3)
    assert jnp.allclose(xrec2.astype(jnp.float32), xr2_r, atol=2e-2, rtol=2e-2)

    print("KERNEL_OK")
</pallas_src>

<mosaic_0001>
module attributes {stable_mosaic.version = 11 : i64} {
  func.func @_vae_kernel(%arg0: i32, %arg1: memref<16x1024xf32, #tpu.memory_space<vmem>>, %arg2: memref<16x128xf32, #tpu.memory_space<vmem>>, %arg3: memref<1024x128xbf16, #tpu.memory_space<vmem>>, %arg4: memref<1x128xf32, #tpu.memory_space<vmem>>, %arg5: memref<128x128xbf16, #tpu.memory_space<vmem>>, %arg6: memref<1x128xf32, #tpu.memory_space<vmem>>, %arg7: memref<128x128xbf16, #tpu.memory_space<vmem>>, %arg8: memref<1x128xf32, #tpu.memory_space<vmem>>, %arg9: memref<128x1024xbf16, #tpu.memory_space<vmem>>, %arg10: memref<1x1024xf32, #tpu.memory_space<vmem>>, %arg11: memref<16x1024xbf16, #tpu.memory_space<vmem>>, %arg12: memref<16x128xf32, #tpu.memory_space<vmem>>) attributes {dimension_semantics = [#tpu.dimension_semantics<parallel>], iteration_bounds = array<i64: 1>, scalar_prefetch = 0 : i64, scratch_operands = 0 : i64, tpu.core_type = #tpu.core_type<tc>, window_params = [{transform_indices = @transform_0, window_bounds = array<i64: 16, 1024>}, {transform_indices = @transform_1, window_bounds = array<i64: 16, 128>}, {pipeline_mode = #tpu.pipeline_mode<synchronous>, transform_indices = @transform_2, window_bounds = array<i64: 1024, 128>}, {pipeline_mode = #tpu.pipeline_mode<synchronous>, transform_indices = @transform_3, window_bounds = array<i64: 1, 128>}, {pipeline_mode = #tpu.pipeline_mode<synchronous>, transform_indices = @transform_4, window_bounds = array<i64: 128, 128>}, {pipeline_mode = #tpu.pipeline_mode<synchronous>, transform_indices = @transform_5, window_bounds = array<i64: 1, 128>}, {pipeline_mode = #tpu.pipeline_mode<synchronous>, transform_indices = @transform_6, window_bounds = array<i64: 128, 128>}, {pipeline_mode = #tpu.pipeline_mode<synchronous>, transform_indices = @transform_7, window_bounds = array<i64: 1, 128>}, {pipeline_mode = #tpu.pipeline_mode<synchronous>, transform_indices = @transform_8, window_bounds = array<i64: 128, 1024>}, {pipeline_mode = #tpu.pipeline_mode<synchronous>, transform_indices = @transform_9, window_bounds = array<i64: 1, 1024>}, {transform_indices = @transform_10, window_bounds = array<i64: 16, 1024>}, {transform_indices = @transform_11, window_bounds = array<i64: 16, 128>}]} {
    %c0 = arith.constant 0 : index
    %c0_0 = arith.constant 0 : index
    %0 = vector.load %arg1[%c0, %c0_0] : memref<16x1024xf32, #tpu.memory_space<vmem>>, vector<16x1024xf32>
    %1 = arith.truncf %0 : vector<16x1024xf32> to vector<16x1024xbf16>
    %c0_1 = arith.constant 0 : index
    %c0_2 = arith.constant 0 : index
    %2 = vector.load %arg3[%c0_1, %c0_2] : memref<1024x128xbf16, #tpu.memory_space<vmem>>, vector<1024x128xbf16>
    %cst = arith.constant dense<0.000000e+00> : vector<16x128xf32>
    %3 = tpu.matmul %1, %2, %cst {dimension_numbers = #tpu.dot_dimension_numbers<[1], [0], [0], [1], [0, 0, 1, 1], [], []>} : vector<16x1024xbf16>, vector<1024x128xbf16>, vector<16x128xf32> -> vector<16x128xf32>
    %c0_3 = arith.constant 0 : index
    %c0_4 = arith.constant 0 : index
    %4 = vector.load %arg4[%c0_3, %c0_4] : memref<1x128xf32, #tpu.memory_space<vmem>>, vector<1x128xf32>
    %5 = vector.broadcast %4 : vector<1x128xf32> to vector<16x128xf32>
    %6 = arith.addf %3, %5 : vector<16x128xf32>
    %cst_5 = arith.constant 0.000000e+00 : f32
    %7 = vector.broadcast %cst_5 : f32 to vector<16x128xf32>
    %8 = arith.maximumf %6, %7 : vector<16x128xf32>
    %9 = arith.truncf %8 : vector<16x128xf32> to vector<16x128xbf16>
    %c0_6 = arith.constant 0 : index
    %c0_7 = arith.constant 0 : index
    %10 = vector.load %arg5[%c0_6, %c0_7] : memref<128x128xbf16, #tpu.memory_space<vmem>>, vector<128x128xbf16>
    %cst_8 = arith.constant dense<0.000000e+00> : vector<16x128xf32>
    %11 = tpu.matmul %9, %10, %cst_8 {dimension_numbers = #tpu.dot_dimension_numbers<[1], [0], [0], [1], [0, 0, 1, 1], [], []>} : vector<16x128xbf16>, vector<128x128xbf16>, vector<16x128xf32> -> vector<16x128xf32>
    %c0_9 = arith.constant 0 : index
    %c0_10 = arith.constant 0 : index
    %12 = vector.load %arg6[%c0_9, %c0_10] : memref<1x128xf32, #tpu.memory_space<vmem>>, vector<1x128xf32>
    %13 = vector.broadcast %12 : vector<1x128xf32> to vector<16x128xf32>
    %14 = arith.addf %11, %13 : vector<16x128xf32>
    %c0_11 = arith.constant 0 : index
    %c0_12 = arith.constant 0 : index
    %15 = vector.load %arg12[%c0_11, %c0_12] : memref<16x128xf32, #tpu.memory_space<vmem>>, vector<16x128xf32>
    tpu.vector_store %arg12[%c0_11, %c0_12], %14 {strides = array<i32>} : memref<16x128xf32, #tpu.memory_space<vmem>>, vector<16x128xf32>,
    %16 = tpu.iota {dimensions = array<i32: 1>} : vector<16x128xi32>
    %c32_i32 = arith.constant 32 : i32
    %17 = vector.broadcast %c32_i32 : i32 to vector<16x128xi32>
    %18 = arith.cmpi slt, %16, %17 : vector<16x128xi32>
    %c0_13 = arith.constant 0 : index
    %c0_14 = arith.constant 0 : index
    %19 = vector.load %arg2[%c0_13, %c0_14] : memref<16x128xf32, #tpu.memory_space<vmem>>, vector<16x128xf32>
    %cst_15 = arith.constant 5.000000e-01 : f32
    %20 = vector.broadcast %cst_15 : f32 to vector<16x128xf32>
    %21 = arith.mulf %20, %14 : vector<16x128xf32>
    %22 = math.exp %21 : vector<16x128xf32>
    %23 = arith.mulf %19, %22 : vector<16x128xf32>
    %24 = arith.select %18, %14, %23 : vector<16x128xi1>, vector<16x128xf32>
    %25 = arith.truncf %24 : vector<16x128xf32> to vector<16x128xbf16>
    %c0_16 = arith.constant 0 : index
    %c0_17 = arith.constant 0 : index
    %26 = vector.load %arg7[%c0_16, %c0_17] : memref<128x128xbf16, #tpu.memory_space<vmem>>, vector<128x128xbf16>
    %cst_18 = arith.constant dense<0.000000e+00> : vector<16x128xf32>
    %27 = tpu.matmul %25, %26, %cst_18 {dimension_numbers = #tpu.dot_dimension_numbers<[1], [0], [0], [1], [0, 0, 1, 1], [], []>} : vector<16x128xbf16>, vector<128x128xbf16>, vector<16x128xf32> -> vector<16x128xf32>
    %c0_19 = arith.constant 0 : index
    %c0_20 = arith.constant 0 : index
    %28 = vector.load %arg8[%c0_19, %c0_20] : memref<1x128xf32, #tpu.memory_space<vmem>>, vector<1x128xf32>
    %29 = vector.broadcast %28 : vector<1x128xf32> to vector<16x128xf32>
    %30 = arith.addf %27, %29 : vector<16x128xf32>
    %cst_21 = arith.constant 0.000000e+00 : f32
    %31 = vector.broadcast %cst_21 : f32 to vector<16x128xf32>
    %32 = arith.maximumf %30, %31 : vector<16x128xf32>
    %33 = arith.truncf %32 : vector<16x128xf32> to vector<16x128xbf16>
    %c0_22 = arith.constant 0 : index
    %c0_23 = arith.constant 0 : index
    %34 = vector.load %arg9[%c0_22, %c0_23] : memref<128x1024xbf16, #tpu.memory_space<vmem>>, vector<128x1024xbf16>
    %cst_24 = arith.constant dense<0.000000e+00> : vector<16x1024xf32>
    %35 = tpu.matmul %33, %34, %cst_24 {dimension_numbers = #tpu.dot_dimension_numbers<[1], [0], [0], [1], [0, 0, 1, 1], [], []>} : vector<16x128xbf16>, vector<128x1024xbf16>, vector<16x1024xf32> -> vector<16x1024xf32>
    %c0_25 = arith.constant 0 : index
    %c0_26 = arith.constant 0 : index
    %36 = vector.load %arg10[%c0_25, %c0_26] : memref<1x1024xf32, #tpu.memory_space<vmem>>, vector<1x1024xf32>
    %37 = vector.broadcast %36 : vector<1x1024xf32> to vector<16x1024xf32>
    %38 = arith.addf %35, %37 : vector<16x1024xf32>
    %39 = arith.truncf %38 : vector<16x1024xf32> to vector<16x1024xbf16>
    %c0_27 = arith.constant 0 : index
    %c0_28 = arith.constant 0 : index
    %40 = vector.load %arg11[%c0_27, %c0_28] : memref<16x1024xbf16, #tpu.memory_space<vmem>>, vector<16x1024xbf16>
    tpu.vector_store %arg11[%c0_27, %c0_28], %39 {strides = array<i32>} : memref<16x1024xbf16, #tpu.memory_space<vmem>>, vector<16x1024xbf16>,
    return
  }
  func.func @transform_0(%arg0: i32) -> (i32, i32) {
    %c0_i32 = arith.constant 0 : i32
    %c0_i32_0 = arith.constant 0 : i32
    return %arg0, %c0_i32 : i32, i32
  }
  func.func @transform_1(%arg0: i32) -> (i32, i32) {
    %c0_i32 = arith.constant 0 : i32
    %c0_i32_0 = arith.constant 0 : i32
    return %arg0, %c0_i32 : i32, i32
  }
  func.func @transform_2(%arg0: i32) -> (i32, i32) {
    %c0_i32 = arith.constant 0 : i32
    %c0_i32_0 = arith.constant 0 : i32
    %c0_i32_1 = arith.constant 0 : i32
    return %c0_i32, %c0_i32_0 : i32, i32
  }
  func.func @transform_3(%arg0: i32) -> (i32, i32) {
    %c0_i32 = arith.constant 0 : i32
    %c0_i32_0 = arith.constant 0 : i32
    %c0_i32_1 = arith.constant 0 : i32
    return %c0_i32, %c0_i32_0 : i32, i32
  }
  func.func @transform_4(%arg0: i32) -> (i32, i32) {
    %c0_i32 = arith.constant 0 : i32
    %c0_i32_0 = arith.constant 0 : i32
    %c0_i32_1 = arith.constant 0 : i32
    return %c0_i32, %c0_i32_0 : i32, i32
  }
  func.func @transform_5(%arg0: i32) -> (i32, i32) {
    %c0_i32 = arith.constant 0 : i32
    %c0_i32_0 = arith.constant 0 : i32
    %c0_i32_1 = arith.constant 0 : i32
    return %c0_i32, %c0_i32_0 : i32, i32
  }
  func.func @transform_6(%arg0: i32) -> (i32, i32) {
    %c0_i32 = arith.constant 0 : i32
    %c0_i32_0 = arith.constant 0 : i32
    %c0_i32_1 = arith.constant 0 : i32
    return %c0_i32, %c0_i32_0 : i32, i32
  }
  func.func @transform_7(%arg0: i32) -> (i32, i32) {
    %c0_i32 = arith.constant 0 : i32
    %c0_i32_0 = arith.constant 0 : i32
    %c0_i32_1 = arith.constant 0 : i32
    return %c0_i32, %c0_i32_0 : i32, i32
  }
  func.func @transform_8(%arg0: i32) -> (i32, i32) {
    %c0_i32 = arith.constant 0 : i32
    %c0_i32_0 = arith.constant 0 : i32
    %c0_i32_1 = arith.constant 0 : i32
    return %c0_i32, %c0_i32_0 : i32, i32
  }
  func.func @transform_9(%arg0: i32) -> (i32, i32) {
    %c0_i32 = arith.constant 0 : i32
    %c0_i32_0 = arith.constant 0 : i32
    %c0_i32_1 = arith.constant 0 : i32
    return %c0_i32, %c0_i32_0 : i32, i32
  }
  func.func @transform_10(%arg0: i32) -> (i32, i32) {
    %c0_i32 = arith.constant 0 : i32
    %c0_i32_0 = arith.constant 0 : i32
    return %arg0, %c0_i32 : i32, i32
  }
  func.func @transform_11(%arg0: i32) -> (i32, i32) {
    %c0_i32 = arith.constant 0 : i32
    %c0_i32_0 = arith.constant 0 : i32
    return %arg0, %c0_i32 : i32, i32
  }
}

module attributes {stable_mosaic.version = 11 : i64} {
  func.func @_vae_kernel(%arg0: i32, %arg1: memref<16x1024xf32, #tpu.memory_space<vmem>>, %arg2: memref<16x128xf32, #tpu.memory_space<vmem>>, %arg3: memref<1024x128xbf16, #tpu.memory_space<vmem>>, %arg4: memref<1x128xf32, #tpu.memory_space<vmem>>, %arg5: memref<128x128xbf16, #tpu.memory_space<vmem>>, %arg6: memref<1x128xf32, #tpu.memory_space<vmem>>, %arg7: memref<128x128xbf16, #tpu.memory_space<vmem>>, %arg8: memref<1x128xf32, #tpu.memory_space<vmem>>, %arg9: memref<128x1024xbf16, #tpu.memory_space<vmem>>, %arg10: memref<1x1024xf32, #tpu.memory_space<vmem>>, %arg11: memref<16x1024xbf16, #tpu.memory_space<vmem>>, %arg12: memref<16x128xf32, #tpu.memory_space<vmem>>) attributes {dimension_semantics = [#tpu.dimension_semantics<parallel>], iteration_bounds = array<i64: 1>, scalar_prefetch = 0 : i64, scratch_operands = 0 : i64, tpu.core_type = #tpu.core_type<tc>, window_params = [{transform_indices = @transform_0, window_bounds = array<i64: 16, 1024>}, {transform_indices = @transform_1, window_bounds = array<i64: 16, 128>}, {pipeline_mode = #tpu.pipeline_mode<synchronous>, transform_indices = @transform_2, window_bounds = array<i64: 1024, 128>}, {pipeline_mode = #tpu.pipeline_mode<synchronous>, transform_indices = @transform_3, window_bounds = array<i64: 1, 128>}, {pipeline_mode = #tpu.pipeline_mode<synchronous>, transform_indices = @transform_4, window_bounds = array<i64: 128, 128>}, {pipeline_mode = #tpu.pipeline_mode<synchronous>, transform_indices = @transform_5, window_bounds = array<i64: 1, 128>}, {pipeline_mode = #tpu.pipeline_mode<synchronous>, transform_indices = @transform_6, window_bounds = array<i64: 128, 128>}, {pipeline_mode = #tpu.pipeline_mode<synchronous>, transform_indices = @transform_7, window_bounds = array<i64: 1, 128>}, {pipeline_mode = #tpu.pipeline_mode<synchronous>, transform_indices = @transform_8, window_bounds = array<i64: 128, 1024>}, {pipeline_mode = #tpu.pipeline_mode<synchronous>, transform_indices = @transform_9, window_bounds = array<i64: 1, 1024>}, {transform_indices = @transform_10, window_bounds = array<i64: 16, 1024>}, {transform_indices = @transform_11, window_bounds = array<i64: 16, 128>}]} {
    %c0 = arith.constant 0 : index
    %c0_0 = arith.constant 0 : index
    %0 = vector.load %arg1[%c0, %c0_0] : memref<16x1024xf32, #tpu.memory_space<vmem>>, vector<16x1024xf32>
    %1 = arith.truncf %0 : vector<16x1024xf32> to vector<16x1024xbf16>
    %c0_1 = arith.constant 0 : index
    %c0_2 = arith.constant 0 : index
    %2 = vector.load %arg3[%c0_1, %c0_2] : memref<1024x128xbf16, #tpu.memory_space<vmem>>, vector<1024x128xbf16>
    %cst = arith.constant dense<0.000000e+00> : vector<16x128xf32>
    %3 = tpu.matmul %1, %2, %cst {dimension_numbers = #tpu.dot_dimension_numbers<[1], [0], [0], [1], [0, 0, 1, 1], [], []>} : vector<16x1024xbf16>, vector<1024x128xbf16>, vector<16x128xf32> -> vector<16x128xf32>
    %c0_3 = arith.constant 0 : index
    %c0_4 = arith.constant 0 : index
    %4 = vector.load %arg4[%c0_3, %c0_4] : memref<1x128xf32, #tpu.memory_space<vmem>>, vector<1x128xf32>
    %5 = vector.broadcast %4 : vector<1x128xf32> to vector<16x128xf32>
    %6 = arith.addf %3, %5 : vector<16x128xf32>
    %cst_5 = arith.constant 0.000000e+00 : f32
    %7 = vector.broadcast %cst_5 : f32 to vector<16x128xf32>
    %8 = arith.maximumf %6, %7 : vector<16x128xf32>
    %9 = arith.truncf %8 : vector<16x128xf32> to vector<16x128xbf16>
    %c0_6 = arith.constant 0 : index
    %c0_7 = arith.constant 0 : index
    %10 = vector.load %arg5[%c0_6, %c0_7] : memref<128x128xbf16, #tpu.memory_space<vmem>>, vector<128x128xbf16>
    %cst_8 = arith.constant dense<0.000000e+00> : vector<16x128xf32>
    %11 = tpu.matmul %9, %10, %cst_8 {dimension_numbers = #tpu.dot_dimension_numbers<[1], [0], [0], [1], [0, 0, 1, 1], [], []>} : vector<16x128xbf16>, vector<128x128xbf16>, vector<16x128xf32> -> vector<16x128xf32>
    %c0_9 = arith.constant 0 : index
    %c0_10 = arith.constant 0 : index
    %12 = vector.load %arg6[%c0_9, %c0_10] : memref<1x128xf32, #tpu.memory_space<vmem>>, vector<1x128xf32>
    %13 = vector.broadcast %12 : vector<1x128xf32> to vector<16x128xf32>
    %14 = arith.addf %11, %13 : vector<16x128xf32>
    %c0_11 = arith.constant 0 : index
    %c0_12 = arith.constant 0 : index
    %15 = vector.load %arg12[%c0_11, %c0_12] : memref<16x128xf32, #tpu.memory_space<vmem>>, vector<16x128xf32>
    tpu.vector_store %arg12[%c0_11, %c0_12], %14 {strides = array<i32>} : memref<16x128xf32, #tpu.memory_space<vmem>>, vector<16x128xf32>,
    %16 = tpu.iota {dimensions = array<i32: 1>} : vector<16x128xi32>
    %c32_i32 = arith.constant 32 : i32
    %17 = vector.broadcast %c32_i32 : i32 to vector<16x128xi32>
    %18 = arith.cmpi slt, %16, %17 : vector<16x128xi32>
    %c0_13 = arith.constant 0 : index
    %c0_14 = arith.constant 0 : index
    %19 = vector.load %arg2[%c0_13, %c0_14] : memref<16x128xf32, #tpu.memory_space<vmem>>, vector<16x128xf32>
    %cst_15 = arith.constant 5.000000e-01 : f32
    %20 = vector.broadcast %cst_15 : f32 to vector<16x128xf32>
    %21 = arith.mulf %20, %14 : vector<16x128xf32>
    %22 = math.exp %21 : vector<16x128xf32>
    %23 = arith.mulf %19, %22 : vector<16x128xf32>
    %24 = arith.select %18, %14, %23 : vector<16x128xi1>, vector<16x128xf32>
    %25 = arith.truncf %24 : vector<16x128xf32> to vector<16x128xbf16>
    %c0_16 = arith.constant 0 : index
    %c0_17 = arith.constant 0 : index
    %26 = vector.load %arg7[%c0_16, %c0_17] : memref<128x128xbf16, #tpu.memory_space<vmem>>, vector<128x128xbf16>
    %cst_18 = arith.constant dense<0.000000e+00> : vector<16x128xf32>
    %27 = tpu.matmul %25, %26, %cst_18 {dimension_numbers = #tpu.dot_dimension_numbers<[1], [0], [0], [1], [0, 0, 1, 1], [], []>} : vector<16x128xbf16>, vector<128x128xbf16>, vector<16x128xf32> -> vector<16x128xf32>
    %c0_19 = arith.constant 0 : index
    %c0_20 = arith.constant 0 : index
    %28 = vector.load %arg8[%c0_19, %c0_20] : memref<1x128xf32, #tpu.memory_space<vmem>>, vector<1x128xf32>
    %29 = vector.broadcast %28 : vector<1x128xf32> to vector<16x128xf32>
    %30 = arith.addf %27, %29 : vector<16x128xf32>
    %cst_21 = arith.constant 0.000000e+00 : f32
    %31 = vector.broadcast %cst_21 : f32 to vector<16x128xf32>
    %32 = arith.maximumf %30, %31 : vector<16x128xf32>
    %33 = arith.truncf %32 : vector<16x128xf32> to vector<16x128xbf16>
    %c0_22 = arith.constant 0 : index
    %c0_23 = arith.constant 0 : index
    %34 = vector.load %arg9[%c0_22, %c0_23] : memref<128x1024xbf16, #tpu.memory_space<vmem>>, vector<128x1024xbf16>
    %cst_24 = arith.constant dense<0.000000e+00> : vector<16x1024xf32>
    %35 = tpu.matmul %33, %34, %cst_24 {dimension_numbers = #tpu.dot_dimension_numbers<[1], [0], [0], [1], [0, 0, 1, 1], [], []>} : vector<16x128xbf16>, vector<128x1024xbf16>, vector<16x1024xf32> -> vector<16x1024xf32>
    %c0_25 = arith.constant 0 : index
    %c0_26 = arith.constant 0 : index
    %36 = vector.load %arg10[%c0_25, %c0_26] : memref<1x1024xf32, #tpu.memory_space<vmem>>, vector<1x1024xf32>
    %37 = vector.broadcast %36 : vector<1x1024xf32> to vector<16x1024xf32>
    %38 = arith.addf %35, %37 : vector<16x1024xf32>
    %39 = arith.truncf %38 : vector<16x1024xf32> to vector<16x1024xbf16>
    %c0_27 = arith.constant 0 : index
    %c0_28 = arith.constant 0 : index
    %40 = vector.load %arg11[%c0_27, %c0_28] : memref<16x1024xbf16, #tpu.memory_space<vmem>>, vector<16x1024xbf16>
    tpu.vector_store %arg11[%c0_27, %c0_28], %39 {strides = array<i32>} : memref<16x1024xbf16, #tpu.memory_space<vmem>>, vector<16x1024xbf16>,
    return
  }
  func.func @transform_0(%arg0: i32) -> (i32, i32) {
    %c0_i32 = arith.constant 0 : i32
    %c0_i32_0 = arith.constant 0 : i32
    return %arg0, %c0_i32 : i32, i32
  }
  func.func @transform_1(%arg0: i32) -> (i32, i32) {
    %c0_i32 = arith.constant 0 : i32
    %c0_i32_0 = arith.constant 0 : i32
    return %arg0, %c0_i32 : i32, i32
  }
  func.func @transform_2(%arg0: i32) -> (i32, i32) {
    %c0_i32 = arith.constant 0 : i32
    %c0_i32_0 = arith.constant 0 : i32
    %c0_i32_1 = arith.constant 0 : i32
    return %c0_i32, %c0_i32_0 : i32, i32
  }
  func.func @transform_3(%arg0: i32) -> (i32, i32) {
    %c0_i32 = arith.constant 0 : i32
    %c0_i32_0 = arith.constant 0 : i32
    %c0_i32_1 = arith.constant 0 : i32
    return %c0_i32, %c0_i32_0 : i32, i32
  }
  func.func @transform_4(%arg0: i32) -> (i32, i32) {
    %c0_i32 = arith.constant 0 : i32
    %c0_i32_0 = arith.constant 0 : i32
    %c0_i32_1 = arith.constant 0 : i32
    return %c0_i32, %c0_i32_0 : i32, i32
  }
  func.func @transform_5(%arg0: i32) -> (i32, i32) {
    %c0_i32 = arith.constant 0 : i32
    %c0_i32_0 = arith.constant 0 : i32
    %c0_i32_1 = arith.constant 0 : i32
    return %c0_i32, %c0_i32_0 : i32, i32
  }
  func.func @transform_6(%arg0: i32) -> (i32, i32) {
    %c0_i32 = arith.constant 0 : i32
    %c0_i32_0 = arith.constant 0 : i32
    %c0_i32_1 = arith.constant 0 : i32
    return %c0_i32, %c0_i32_0 : i32, i32
  }
  func.func @transform_7(%arg0: i32) -> (i32, i32) {
    %c0_i32 = arith.constant 0 : i32
    %c0_i32_0 = arith.constant 0 : i32
    %c0_i32_1 = arith.constant 0 : i32
    return %c0_i32, %c0_i32_0 : i32, i32
  }
  func.func @transform_8(%arg0: i32) -> (i32, i32) {
    %c0_i32 = arith.constant 0 : i32
    %c0_i32_0 = arith.constant 0 : i32
    %c0_i32_1 = arith.constant 0 : i32
    return %c0_i32, %c0_i32_0 : i32, i32
  }
  func.func @transform_9(%arg0: i32) -> (i32, i32) {
    %c0_i32 = arith.constant 0 : i32
    %c0_i32_0 = arith.constant 0 : i32
    %c0_i32_1 = arith.constant 0 : i32
    return %c0_i32, %c0_i32_0 : i32, i32
  }
  func.func @transform_10(%arg0: i32) -> (i32, i32) {
    %c0_i32 = arith.constant 0 : i32
    %c0_i32_0 = arith.constant 0 : i32
    return %arg0, %c0_i32 : i32, i32
  }
  func.func @transform_11(%arg0: i32) -> (i32, i32) {
    %c0_i32 = arith.constant 0 : i32
    %c0_i32_0 = arith.constant 0 : i32
    return %arg0, %c0_i32 : i32, i32
  }
}

</mosaic_0001>

<llo_original>
// kernel: tpu_custom_call.1
$region0: #{tpu_custom_call.1}
  #allocation0 [shape = 'u32[]', space=smem, size = 0x4, offset = 0x4, fixed_abs, tag = 'smem constant byte address 0x4 - core index']
  #allocation1 [shape = 'u32[144,128]{1,0:T(1,128)}', space=vmem, size = 0x12000, scoped, tag = 'internal scratch']
  %s0 = inlined_call_operand.hbm [shape: f32[16,1024], index: 0, kind: input, shape index: {}]
  %s1 = inlined_call_operand.hbm [shape: f32[16,128], index: 1, kind: input, shape index: {}]
  %s2 = inlined_call_operand.hbm [shape: bf16[1024,128], index: 2, kind: input, shape index: {}]
  %s3 = inlined_call_operand.vmem [shape: f32[1,128], index: 3, kind: input, shape index: {}]
  %s4 = inlined_call_operand.hbm [shape: bf16[128,128], index: 4, kind: input, shape index: {}]
  %s5 = inlined_call_operand.vmem [shape: f32[1,128], index: 5, kind: input, shape index: {}]
  %s6 = inlined_call_operand.hbm [shape: bf16[128,128], index: 6, kind: input, shape index: {}]
  %s7 = inlined_call_operand.vmem [shape: f32[1,128], index: 7, kind: input, shape index: {}]
  %s8 = inlined_call_operand.hbm [shape: bf16[128,1024], index: 8, kind: input, shape index: {}]
  %s9 = inlined_call_operand.vmem [shape: f32[1,1024], index: 9, kind: input, shape index: {}]
  %s10 = inlined_call_operand.hbm [shape: bf16[16,1024], index: 10, kind: output, shape index: {0}]
  %s11 = inlined_call_operand.hbm [shape: f32[16,128], index: 11, kind: output, shape index: {1}]
  %12 = xla_tuple %s10, %s11
  %s13 = sld [smem:[#allocation0]]
  $region82: #{tpu_custom_call.1} parent=0
    _
  %s15 = ssub.s32 1, %s13
  %s16 = scalar_select 0, %s15, %s13
  $region1: #{tpu_custom_call.1} parent=0
    #allocation2 [shape = 'u8[65536]{0}', space=vmem, size = 0x10000, scoped, tag = 'input window, operand 0, single buffered']
    #allocation3 [shape = 's32[1]{0}', space=sflag, size = 0x4, scoped, tag = 'scoped memory for tpu_custom_call.1']
    #allocation4 [shape = 's32[1]{0}', space=sflag, size = 0x4, scoped, tag = 'scoped memory for tpu_custom_call.1']
    #allocation5 [shape = 'u8[8192]{0}', space=vmem, size = 0x2000, scoped, tag = 'input window, operand 1, single buffered']
    #allocation6 [shape = 's32[1]{0}', space=sflag, size = 0x4, scoped, tag = 'scoped memory for tpu_custom_call.1']
    #allocation7 [shape = 'u8[262144]{0}', space=vmem, size = 0x40000, scoped, tag = 'input window, operand 2, single buffered']
    #allocation8 [shape = 'u8[32768]{0}', space=vmem, size = 0x8000, scoped, tag = 'input window, operand 4, single buffered']
    #allocation9 [shape = 's32[1]{0}', space=sflag, size = 0x4, scoped, tag = 'scoped memory for tpu_custom_call.1']
    #allocation10 [shape = 'u8[32768]{0}', space=vmem, size = 0x8000, scoped, tag = 'input window, operand 6, single buffered']
    #allocation11 [shape = 'u8[262144]{0}', space=vmem, size = 0x40000, scoped, tag = 'input window, operand 8, single buffered']
    #allocation12 [shape = 's32[1]{0}', space=sflag, size = 0x4, scoped, tag = 'scoped memory for tpu_custom_call.1']
    #allocation13 [shape = 'u8[32768]{0}', space=vmem, size = 0x8000, scoped, tag = 'output window, operand 0, single buffered']
    #allocation14 [shape = 'u8[8192]{0}', space=vmem, size = 0x2000, scoped, tag = 'output window, operand 1, single buffered']
    #allocation15 [shape = 's32[1]{0}', space=sflag, size = 0x4, scoped, tag = 'scoped memory for tpu_custom_call.1']
    %17 = vsyncpa [#allocation3], 0
    %18 = vsyncpa [#allocation6], 0
    %19 = vsyncpa [#allocation9], 0
    %20 = vsyncpa [#allocation12], 0
    %21 = vsyncpa [#allocation4], 0
    %22 = vsyncpa [#allocation15], 0
    // Predicated region
    $region2: #{tpu_custom_call.1} parent=1 // pred_check
      _
    $region3: #{tpu_custom_call.1} parent=1 // pred_check_branch
      %24 = sbr.rel (0) target = $region5
    $region4: #{tpu_custom_call.1} parent=1 // pred_region
      %s26 = ssub.s32 2048, 2048
      %27 = vsyncadd [#allocation3], %s26
      %s28 = sshll.u32 [#allocation2], 4
      %s29 = int_to_ptr.vmem [resolvable:$true] %s28
      %34 = dma.hbm_to_vmem [thread:$0]  %s0, 2048, %s29, [#allocation3], 1024, 1024, 64
    $region5: #{tpu_custom_call.1} parent=1 // pred_fallthru
      _
    // Predicated region
    $region6: #{tpu_custom_call.1} parent=1 // pred_check
      _
    $region7: #{tpu_custom_call.1} parent=1 // pred_check_branch
      %36 = sbr.rel (0) target = $region9
    $region8: #{tpu_custom_call.1} parent=1 // pred_region
      %s38 = ssub.s32 256, 256
      %39 = vsyncadd [#allocation6], %s38
      %s40 = sshll.u32 [#allocation5], 4
      %s41 = int_to_ptr.vmem [resolvable:$true] %s40
      %46 = dma.hbm_to_vmem [thread:$0]  %s1, 256, %s41, [#allocation6], 128, 128, 8
    $region9: #{tpu_custom_call.1} parent=1 // pred_fallthru
      _
    // Predicated region
    $region10: #{tpu_custom_call.1} parent=1 // pred_check
      _
    $region11: #{tpu_custom_call.1} parent=1 // pred_check_branch
      %48 = sbr.rel (0) target = $region13
    $region12: #{tpu_custom_call.1} parent=1 // pred_region
      %s50 = ssub.s32 8192, 8192
      %51 = vsyncadd [#allocation6], %s50
      %s52 = sshll.u32 [#allocation7], 4
      %s53 = int_to_ptr.vmem [resolvable:$true] %s52
      %58 = dma.hbm_to_vmem [thread:$0]  %s2, 8192, %s53, [#allocation6], 64, 64, 4
    $region13: #{tpu_custom_call.1} parent=1 // pred_fallthru
      _
    // Predicated region
    $region14: #{tpu_custom_call.1} parent=1 // pred_check
      _
    $region15: #{tpu_custom_call.1} parent=1 // pred_check_branch
      %60 = sbr.rel (0) target = $region17
    $region16: #{tpu_custom_call.1} parent=1 // pred_region
      _
    $region17: #{tpu_custom_call.1} parent=1 // pred_fallthru
      _
    // Predicated region
    $region18: #{tpu_custom_call.1} parent=1 // pred_check
      _
    $region19: #{tpu_custom_call.1} parent=1 // pred_check_branch
      %62 = sbr.rel (0) target = $region21
    $region20: #{tpu_custom_call.1} parent=1 // pred_region
      %s64 = ssub.s32 1024, 1024
      %65 = vsyncadd [#allocation9], %s64
      %s66 = sshll.u32 [#allocation8], 4
      %s67 = int_to_ptr.vmem [resolvable:$true] %s66
      %72 = dma.hbm_to_vmem [thread:$0]  %s4, 1024, %s67, [#allocation9], 64, 64, 4
    $region21: #{tpu_custom_call.1} parent=1 // pred_fallthru
      _
    // Predicated region
    $region22: #{tpu_custom_call.1} parent=1 // pred_check
      _
    $region23: #{tpu_custom_call.1} parent=1 // pred_check_branch
      %74 = sbr.rel (0) target = $region25
    $region24: #{tpu_custom_call.1} parent=1 // pred_region
      _
    $region25: #{tpu_custom_call.1} parent=1 // pred_fallthru
      _
    // Predicated region
    $region26: #{tpu_custom_call.1} parent=1 // pred_check
      _
    $region27: #{tpu_custom_call.1} parent=1 // pred_check_branch
      %76 = sbr.rel (0) target = $region29
    $region28: #{tpu_custom_call.1} parent=1 // pred_region
      %s78 = ssub.s32 1024, 1024
      %79 = vsyncadd [#allocation9], %s78
      %s80 = sshll.u32 [#allocation10], 4
      %s81 = int_to_ptr.vmem [resolvable:$true] %s80
      %86 = dma.hbm_to_vmem [thread:$0]  %s6, 1024, %s81, [#allocation9], 64, 64, 4
    $region29: #{tpu_custom_call.1} parent=1 // pred_fallthru
      _
    // Predicated region
    $region30: #{tpu_custom_call.1} parent=1 // pred_check
      _
    $region31: #{tpu_custom_call.1} parent=1 // pred_check_branch
      %88 = sbr.rel (0) target = $region33
    $region32: #{tpu_custom_call.1} parent=1 // pred_region
      _
    $region33: #{tpu_custom_call.1} parent=1 // pred_fallthru
      _
    // Predicated region
    $region34: #{tpu_custom_call.1} parent=1 // pred_check
      _
    $region35: #{tpu_custom_call.1} parent=1 // pred_check_branch
      %90 = sbr.rel (0) target = $region37
    $region36: #{tpu_custom_call.1} parent=1 // pred_region
      %s92 = ssub.s32 8192, 8192
      %93 = vsyncadd [#allocation12], %s92
      %s94 = sshll.u32 [#allocation11], 4
      %s95 = int_to_ptr.vmem [resolvable:$true] %s94
      %100 = dma.hbm_to_vmem [thread:$0]  %s8, 8192, %s95, [#allocation12], 512, 512, 32
    $region37: #{tpu_custom_call.1} parent=1 // pred_fallthru
      _
    // Predicated region
    $region38: #{tpu_custom_call.1} parent=1 // pred_check
      _
    $region39: #{tpu_custom_call.1} parent=1 // pred_check_branch
      %102 = sbr.rel (0) target = $region41
    $region40: #{tpu_custom_call.1} parent=1 // pred_region
      _
    $region41: #{tpu_custom_call.1} parent=1 // pred_fallthru
      _
    // Predicated region
    $region42: #{tpu_custom_call.1} parent=1 // pred_check
      _
    $region43: #{tpu_custom_call.1} parent=1 // pred_check_branch
      %104 = sbr.rel (0) target = $region45
    $region44: #{tpu_custom_call.1} parent=1 // pred_region
      %105 = dma.done [#allocation3], 2048
    $region45: #{tpu_custom_call.1} parent=1 // pred_fallthru
      _
    // Predicated region
    $region46: #{tpu_custom_call.1} parent=1 // pred_check
      _
    $region47: #{tpu_custom_call.1} parent=1 // pred_check_branch
      %107 = sbr.rel (0) target = $region49
    $region48: #{tpu_custom_call.1} parent=1 // pred_region
      %108 = dma.done [#allocation6], 256
    $region49: #{tpu_custom_call.1} parent=1 // pred_fallthru
      _
    // Predicated region
    $region50: #{tpu_custom_call.1} parent=1 // pred_check
      _
    $region51: #{tpu_custom_call.1} parent=1 // pred_check_branch
      %110 = sbr.rel (0) target = $region53
    $region52: #{tpu_custom_call.1} parent=1 // pred_region
      %111 = dma.done [#allocation6], 8192
    $region53: #{tpu_custom_call.1} parent=1 // pred_fallthru
      _
    // Predicated region
    $region54: #{tpu_custom_call.1} parent=1 // pred_check
      _
    $region55: #{tpu_custom_call.1} parent=1 // pred_check_branch
      %113 = sbr.rel (0) target = $region57
    $region56: #{tpu_custom_call.1} parent=1 // pred_region
      %114 = dma.done [#allocation9], 1024
    $region57: #{tpu_custom_call.1} parent=1 // pred_fallthru
      _
    // Predicated region
    $region58: #{tpu_custom_call.1} parent=1 // pred_check
      _
    $region59: #{tpu_custom_call.1} parent=1 // pred_check_branch
      %116 = sbr.rel (0) target = $region61
    $region60: #{tpu_custom_call.1} parent=1 // pred_region
      %117 = dma.done [#allocation9], 1024
    $region61: #{tpu_custom_call.1} parent=1 // pred_fallthru
      _
    // Predicated region
    $region62: #{tpu_custom_call.1} parent=1 // pred_check
      _
    $region63: #{tpu_custom_call.1} parent=1 // pred_check_branch
      %119 = sbr.rel (0) target = $region65
    $region64: #{tpu_custom_call.1} parent=1 // pred_region
      %120 = dma.done [#allocation12], 8192
    $region65: #{tpu_custom_call.1} parent=1 // pred_fallthru
      _
    %v122 = vld [vmem:[#allocation2] sm:$0xff]
    %v123 = vld [vmem:[#allocation2 + $0x8] sm:$0xff]
    %v124 = vld [vmem:[#allocation2 + $0x10] sm:$0xff]
    %v125 = vld [vmem:[#allocation2 + $0x18] sm:$0xff]
    %v126 = vld [vmem:[#allocation2 + $0x20] sm:$0xff]
    %v127 = vld [vmem:[#allocation2 + $0x28] sm:$0xff]
    %v128 = vld [vmem:[#allocation2 + $0x30] sm:$0xff]
    %v129 = vld [vmem:[#allocation2 + $0x38] sm:$0xff]
    %v130 = vld [vmem:[#allocation2 + $0x40] sm:$0xff]
    %v131 = vld [vmem:[#allocation2 + $0x48] sm:$0xff]
    %v132 = vld [vmem:[#allocation2 + $0x50] sm:$0xff]
    %v133 = vld [vmem:[#allocation2 + $0x58] sm:$0xff]
    %v134 = vld [vmem:[#allocation2 + $0x60] sm:$0xff]
    %v135 = vld [vmem:[#allocation2 + $0x68] sm:$0xff]
    %v136 = vld [vmem:[#allocation2 + $0x70] sm:$0xff]
    %v137 = vld [vmem:[#allocation2 + $0x78] sm:$0xff]
    %v138 = vpack.c.bf16 %v130, %v122
    %v139 = vpack.c.bf16 %v131, %v123
    %v140 = vpack.c.bf16 %v132, %v124
    %v141 = vpack.c.bf16 %v133, %v125
    %v142 = vpack.c.bf16 %v134, %v126
    %v143 = vpack.c.bf16 %v135, %v127
    %v144 = vpack.c.bf16 %v136, %v128
    %v145 = vpack.c.bf16 %v137, %v129
    %v146 = vld [vmem:[#allocation7] sm:$0xf]
    %v147 = vld [vmem:[#allocation7 + $0x4] sm:$0xf]
    %v148 = vld [vmem:[#allocation7 + $0x8] sm:$0xf]
    %v149 = vld [vmem:[#allocation7 + $0xc] sm:$0xf]
    %v150 = vld [vmem:[#allocation7 + $0x10] sm:$0xf]
    %v151 = vld [vmem:[#allocation7 + $0x14] sm:$0xf]
    %v152 = vld [vmem:[#allocation7 + $0x18] sm:$0xf]
    %v153 = vld [vmem:[#allocation7 + $0x1c] sm:$0xf]
    %v154 = vld [vmem:[#allocation7 + $0x20] sm:$0xf]
    %v155 = vld [vmem:[#allocation7 + $0x24] sm:$0xf]
    %v156 = vld [vmem:[#allocation7 + $0x28] sm:$0xf]
    %v157 = vld [vmem:[#allocation7 + $0x2c] sm:$0xf]
    %v158 = vld [vmem:[#allocation7 + $0x30] sm:$0xf]
    %v159 = vld [vmem:[#allocation7 + $0x34] sm:$0xf]
    %v160 = vld [vmem:[#allocation7 + $0x38] sm:$0xf]
    %v161 = vld [vmem:[#allocation7 + $0x3c] sm:$0xf]
    %v162 = vld [vmem:[#allocation7 + $0x40] sm:$0xf]
    %v163 = vld [vmem:[#allocation7 + $0x44] sm:$0xf]
    %v164 = vld [vmem:[#allocation7 + $0x48] sm:$0xf]
    %v165 = vld [vmem:[#allocation7 + $0x4c] sm:$0xf]
    %v166 = vld [vmem:[#allocation7 + $0x50] sm:$0xf]
    %v167 = vld [vmem:[#allocation7 + $0x54] sm:$0xf]
    %v168 = vld [vmem:[#allocation7 + $0x58] sm:$0xf]
    %v169 = vld [vmem:[#allocation7 + $0x5c] sm:$0xf]
    %v170 = vld [vmem:[#allocation7 + $0x60] sm:$0xf]
    %v171 = vld [vmem:[#allocation7 + $0x64] sm:$0xf]
    %v172 = vld [vmem:[#allocation7 + $0x68] sm:$0xf]
    %v173 = vld [vmem:[#allocation7 + $0x6c] sm:$0xf]
    %v174 = vld [vmem:[#allocation7 + $0x70] sm:$0xf]
    %v175 = vld [vmem:[#allocation7 + $0x74] sm:$0xf]
    %v176 = vld [vmem:[#allocation7 + $0x78] sm:$0xf]
    %v177 = vld [vmem:[#allocation7 + $0x7c] sm:$0xf]
    %v178 = vld [vmem:[#allocation7 + $0x80] sm:$0xf]
    %v179 = vld [vmem:[#allocation7 + $0x84] sm:$0xf]
    %v180 = vld [vmem:[#allocation7 + $0x88] sm:$0xf]
    %v181 = vld [vmem:[#allocation7 + $0x8c] sm:$0xf]
    %v182 = vld [vmem:[#allocation7 + $0x90] sm:$0xf]
    %v183 = vld [vmem:[#allocation7 + $0x94] sm:$0xf]
    %v184 = vld [vmem:[#allocation7 + $0x98] sm:$0xf]
    %v185 = vld [vmem:[#allocation7 + $0x9c] sm:$0xf]
    %v186 = vld [vmem:[#allocation7 + $0xa0] sm:$0xf]
    %v187 = vld [vmem:[#allocation7 + $0xa4] sm:$0xf]
    %v188 = vld [vmem:[#allocation7 + $0xa8] sm:$0xf]
    %v189 = vld [vmem:[#allocation7 + $0xac] sm:$0xf]
    %v190 = vld [vmem:[#allocation7 + $0xb0] sm:$0xf]
    %v191 = vld [vmem:[#allocation7 + $0xb4] sm:$0xf]
    %v192 = vld [vmem:[#allocation7 + $0xb8] sm:$0xf]
    %v193 = vld [vmem:[#allocation7 + $0xbc] sm:$0xf]
    %v194 = vld [vmem:[#allocation7 + $0xc0] sm:$0xf]
    %v195 = vld [vmem:[#allocation7 + $0xc4] sm:$0xf]
    %v196 = vld [vmem:[#allocation7 + $0xc8] sm:$0xf]
    %v197 = vld [vmem:[#allocation7 + $0xcc] sm:$0xf]
    %v198 = vld [vmem:[#allocation7 + $0xd0] sm:$0xf]
    %v199 = vld [vmem:[#allocation7 + $0xd4] sm:$0xf]
    %v200 = vld [vmem:[#allocation7 + $0xd8] sm:$0xf]
    %v201 = vld [vmem:[#allocation7 + $0xdc] sm:$0xf]
    %v202 = vld [vmem:[#allocation7 + $0xe0] sm:$0xf]
    %v203 = vld [vmem:[#allocation7 + $0xe4] sm:$0xf]
    %v204 = vld [vmem:[#allocation7 + $0xe8] sm:$0xf]
    %v205 = vld [vmem:[#allocation7 + $0xec] sm:$0xf]
    %v206 = vld [vmem:[#allocation7 + $0xf0] sm:$0xf]
    %v207 = vld [vmem:[#allocation7 + $0xf4] sm:$0xf]
    %v208 = vld [vmem:[#allocation7 + $0xf8] sm:$0xf]
    %v209 = vld [vmem:[#allocation7 + $0xfc] sm:$0xf]
    %v210 = vld [vmem:[#allocation7 + $0x100] sm:$0xf]
    %v211 = vld [vmem:[#allocation7 + $0x104] sm:$0xf]
    %v212 = vld [vmem:[#allocation7 + $0x108] sm:$0xf]
    %v213 = vld [vmem:[#allocation7 + $0x10c] sm:$0xf]
    %v214 = vld [vmem:[#allocation7 + $0x110] sm:$0xf]
    %v215 = vld [vmem:[#allocation7 + $0x114] sm:$0xf]
    %v216 = vld [vmem:[#allocation7 + $0x118] sm:$0xf]
    %v217 = vld [vmem:[#allocation7 + $0x11c] sm:$0xf]
    %v218 = vld [vmem:[#allocation7 + $0x120] sm:$0xf]
    %v219 = vld [vmem:[#allocation7 + $0x124] sm:$0xf]
    %v220 = vld [vmem:[#allocation7 + $0x128] sm:$0xf]
    %v221 = vld [vmem:[#allocation7 + $0x12c] sm:$0xf]
    %v222 = vld [vmem:[#allocation7 + $0x130] sm:$0xf]
    %v223 = vld [vmem:[#allocation7 + $0x134] sm:$0xf]
    %v224 = vld [vmem:[#allocation7 + $0x138] sm:$0xf]
    %v225 = vld [vmem:[#allocation7 + $0x13c] sm:$0xf]
    %v226 = vld [vmem:[#allocation7 + $0x140] sm:$0xf]
    %v227 = vld [vmem:[#allocation7 + $0x144] sm:$0xf]
    %v228 = vld [vmem:[#allocation7 + $0x148] sm:$0xf]
    %v229 = vld [vmem:[#allocation7 + $0x14c] sm:$0xf]
    %v230 = vld [vmem:[#allocation7 + $0x150] sm:$0xf]
    %v231 = vld [vmem:[#allocation7 + $0x154] sm:$0xf]
    %v232 = vld [vmem:[#allocation7 + $0x158] sm:$0xf]
    %v233 = vld [vmem:[#allocation7 + $0x15c] sm:$0xf]
    %v234 = vld [vmem:[#allocation7 + $0x160] sm:$0xf]
    %v235 = vld [vmem:[#allocation7 + $0x164] sm:$0xf]
    %v236 = vld [vmem:[#allocation7 + $0x168] sm:$0xf]
    %v237 = vld [vmem:[#allocation7 + $0x16c] sm:$0xf]
    %v238 = vld [vmem:[#allocation7 + $0x170] sm:$0xf]
    %v239 = vld [vmem:[#allocation7 + $0x174] sm:$0xf]
    %v240 = vld [vmem:[#allocation7 + $0x178] sm:$0xf]
    %v241 = vld [vmem:[#allocation7 + $0x17c] sm:$0xf]
    %v242 = vld [vmem:[#allocation7 + $0x180] sm:$0xf]
    %v243 = vld [vmem:[#allocation7 + $0x184] sm:$0xf]
    %v244 = vld [vmem:[#allocation7 + $0x188] sm:$0xf]
    %v245 = vld [vmem:[#allocation7 + $0x18c] sm:$0xf]
    %v246 = vld [vmem:[#allocation7 + $0x190] sm:$0xf]
    %v247 = vld [vmem:[#allocation7 + $0x194] sm:$0xf]
    %v248 = vld [vmem:[#allocation7 + $0x198] sm:$0xf]
    %v249 = vld [vmem:[#allocation7 + $0x19c] sm:$0xf]
    %v250 = vld [vmem:[#allocation7 + $0x1a0] sm:$0xf]
    %v251 = vld [vmem:[#allocation7 + $0x1a4] sm:$0xf]
    %v252 = vld [vmem:[#allocation7 + $0x1a8] sm:$0xf]
    %v253 = vld [vmem:[#allocation7 + $0x1ac] sm:$0xf]
    %v254 = vld [vmem:[#allocation7 + $0x1b0] sm:$0xf]
    %v255 = vld [vmem:[#allocation7 + $0x1b4] sm:$0xf]
    %v256 = vld [vmem:[#allocation7 + $0x1b8] sm:$0xf]
    %v257 = vld [vmem:[#allocation7 + $0x1bc] sm:$0xf]
    %v258 = vld [vmem:[#allocation7 + $0x1c0] sm:$0xf]
    %v259 = vld [vmem:[#allocation7 + $0x1c4] sm:$0xf]
    %v260 = vld [vmem:[#allocation7 + $0x1c8] sm:$0xf]
    %v261 = vld [vmem:[#allocation7 + $0x1cc] sm:$0xf]
    %v262 = vld [vmem:[#allocation7 + $0x1d0] sm:$0xf]
    %v263 = vld [vmem:[#allocation7 + $0x1d4] sm:$0xf]
    %v264 = vld [vmem:[#allocation7 + $0x1d8] sm:$0xf]
    %v265 = vld [vmem:[#allocation7 + $0x1dc] sm:$0xf]
    %v266 = vld [vmem:[#allocation7 + $0x1e0] sm:$0xf]
    %v267 = vld [vmem:[#allocation7 + $0x1e4] sm:$0xf]
    %v268 = vld [vmem:[#allocation7 + $0x1e8] sm:$0xf]
    %v269 = vld [vmem:[#allocation7 + $0x1ec] sm:$0xf]
    %v270 = vld [vmem:[#allocation7 + $0x1f0] sm:$0xf]
    %v271 = vld [vmem:[#allocation7 + $0x1f4] sm:$0xf]
    %v272 = vld [vmem:[#allocation7 + $0x1f8] sm:$0xf]
    %v273 = vld [vmem:[#allocation7 + $0x1fc] sm:$0xf]
    %v274 = vld [vmem:[%s3] sm:$0x1]
    %v276 = vlaneseq
    %v277 = vshrl.u32 %v276, 7
    %v278 = vsub.s32 0, %v277
    %v279 = vrot.slane %v274, %v278
    %v409 = vunpack.c.l.b16 %v146
    %v410 = vunpack.c.l.b16 %v147
    %v411 = vunpack.c.l.b16 %v148
    %v412 = vunpack.c.l.b16 %v149
    %v413 = vunpack.c.l.b16 %v150
    %v414 = vunpack.c.l.b16 %v151
    %v415 = vunpack.c.l.b16 %v152
    %v416 = vunpack.c.l.b16 %v153
    %v417 = vunpack.c.l.b16 %v154
    %v418 = vunpack.c.l.b16 %v155
    %v419 = vunpack.c.l.b16 %v156
    %v420 = vunpack.c.l.b16 %v157
    %v421 = vunpack.c.l.b16 %v158
    %v422 = vunpack.c.l.b16 %v159
    %v423 = vunpack.c.l.b16 %v160
    %v424 = vunpack.c.l.b16 %v161
    %v425 = vunpack.c.l.b16 %v162
    %v426 = vunpack.c.l.b16 %v163
    %v427 = vunpack.c.l.b16 %v164
    %v428 = vunpack.c.l.b16 %v165
    %v429 = vunpack.c.l.b16 %v166
    %v430 = vunpack.c.l.b16 %v167
    %v431 = vunpack.c.l.b16 %v168
    %v432 = vunpack.c.l.b16 %v169
    %v433 = vunpack.c.l.b16 %v170
    %v434 = vunpack.c.l.b16 %v171
    %v435 = vunpack.c.l.b16 %v172
    %v436 = vunpack.c.l.b16 %v173
    %v437 = vunpack.c.l.b16 %v174
    %v438 = vunpack.c.l.b16 %v175
    %v439 = vunpack.c.l.b16 %v176
    %v440 = vunpack.c.l.b16 %v177
    %v441 = vunpack.c.l.b16 %v178
    %v442 = vunpack.c.l.b16 %v179
    %v443 = vunpack.c.l.b16 %v180
    %v444 = vunpack.c.l.b16 %v181
    %v445 = vunpack.c.l.b16 %v182
    %v446 = vunpack.c.l.b16 %v183
    %v447 = vunpack.c.l.b16 %v184
    %v448 = vunpack.c.l.b16 %v185
    %v449 = vunpack.c.l.b16 %v186
    %v450 = vunpack.c.l.b16 %v187
    %v451 = vunpack.c.l.b16 %v188
    %v452 = vunpack.c.l.b16 %v189
    %v453 = vunpack.c.l.b16 %v190
    %v454 = vunpack.c.l.b16 %v191
    %v455 = vunpack.c.l.b16 %v192
    %v456 = vunpack.c.l.b16 %v193
    %v457 = vunpack.c.l.b16 %v194
    %v458 = vunpack.c.l.b16 %v195
    %v459 = vunpack.c.l.b16 %v196
    %v460 = vunpack.c.l.b16 %v197
    %v461 = vunpack.c.l.b16 %v198
    %v462 = vunpack.c.l.b16 %v199
    %v463 = vunpack.c.l.b16 %v200
    %v464 = vunpack.c.l.b16 %v201
    %v465 = vunpack.c.l.b16 %v202
    %v466 = vunpack.c.l.b16 %v203
    %v467 = vunpack.c.l.b16 %v204
    %v468 = vunpack.c.l.b16 %v205
    %v469 = vunpack.c.l.b16 %v206
    %v470 = vunpack.c.l.b16 %v207
    %v471 = vunpack.c.l.b16 %v208
    %v472 = vunpack.c.l.b16 %v209
    %v473 = vunpack.c.l.b16 %v210
    %v474 = vunpack.c.l.b16 %v211
    %v475 = vunpack.c.l.b16 %v212
    %v476 = vunpack.c.l.b16 %v213
    %v477 = vunpack.c.l.b16 %v214
    %v478 = vunpack.c.l.b16 %v215
    %v479 = vunpack.c.l.b16 %v216
    %v480 = vunpack.c.l.b16 %v217
    %v481 = vunpack.c.l.b16 %v218
    %v482 = vunpack.c.l.b16 %v219
    %v483 = vunpack.c.l.b16 %v220
    %v484 = vunpack.c.l.b16 %v221
    %v485 = vunpack.c.l.b16 %v222
    %v486 = vunpack.c.l.b16 %v223
    %v487 = vunpack.c.l.b16 %v224
    %v488 = vunpack.c.l.b16 %v225
    %v489 = vunpack.c.l.b16 %v226
    %v490 = vunpack.c.l.b16 %v227
    %v491 = vunpack.c.l.b16 %v228
    %v492 = vunpack.c.l.b16 %v229
    %v493 = vunpack.c.l.b16 %v230
    %v494 = vunpack.c.l.b16 %v231
    %v495 = vunpack.c.l.b16 %v232
    %v496 = vunpack.c.l.b16 %v233
    %v497 = vunpack.c.l.b16 %v234
    %v498 = vunpack.c.l.b16 %v235
    %v499 = vunpack.c.l.b16 %v236
    %v500 = vunpack.c.l.b16 %v237
    %v501 = vunpack.c.l.b16 %v238
    %v502 = vunpack.c.l.b16 %v239
    %v503 = vunpack.c.l.b16 %v240
    %v504 = vunpack.c.l.b16 %v241
    %v505 = vunpack.c.l.b16 %v242
    %v506 = vunpack.c.l.b16 %v243
    %v507 = vunpack.c.l.b16 %v244
    %v508 = vunpack.c.l.b16 %v245
    %v509 = vunpack.c.l.b16 %v246
    %v510 = vunpack.c.l.b16 %v247
    %v511 = vunpack.c.l.b16 %v248
    %v512 = vunpack.c.l.b16 %v249
    %v513 = vunpack.c.l.b16 %v250
    %v514 = vunpack.c.l.b16 %v251
    %v515 = vunpack.c.l.b16 %v252
    %v516 = vunpack.c.l.b16 %v253
    %v517 = vunpack.c.l.b16 %v254
    %v518 = vunpack.c.l.b16 %v255
    %v519 = vunpack.c.l.b16 %v256
    %v520 = vunpack.c.l.b16 %v257
    %v521 = vunpack.c.l.b16 %v258
    %v522 = vunpack.c.l.b16 %v259
    %v523 = vunpack.c.l.b16 %v260
    %v524 = vunpack.c.l.b16 %v261
    %v525 = vunpack.c.l.b16 %v262
    %v526 = vunpack.c.l.b16 %v263
    %v527 = vunpack.c.l.b16 %v264
    %v528 = vunpack.c.l.b16 %v265
    %v529 = vunpack.c.l.b16 %v266
    %v530 = vunpack.c.l.b16 %v267
    %v531 = vunpack.c.l.b16 %v268
    %v532 = vunpack.c.l.b16 %v269
    %v533 = vunpack.c.l.b16 %v270
    %v534 = vunpack.c.l.b16 %v271
    %v535 = vunpack.c.l.b16 %v272
    %v536 = vunpack.c.l.b16 %v273
    %v537 = vpack.c.b16 %v410, %v409
    %v538 = vpack.c.b16 %v412, %v411
    %v539 = vpack.c.b16 %v414, %v413
    %v540 = vpack.c.b16 %v416, %v415
    %v541 = vpack.c.b16 %v418, %v417
    %v542 = vpack.c.b16 %v420, %v419
    %v543 = vpack.c.b16 %v422, %v421
    %v544 = vpack.c.b16 %v424, %v423
    %v545 = vpack.c.b16 %v426, %v425
    %v546 = vpack.c.b16 %v428, %v427
    %v547 = vpack.c.b16 %v430, %v429
    %v548 = vpack.c.b16 %v432, %v431
    %v549 = vpack.c.b16 %v434, %v433
    %v550 = vpack.c.b16 %v436, %v435
    %v551 = vpack.c.b16 %v438, %v437
    %v552 = vpack.c.b16 %v440, %v439
    %v553 = vpack.c.b16 %v442, %v441
    %v554 = vpack.c.b16 %v444, %v443
    %v555 = vpack.c.b16 %v446, %v445
    %v556 = vpack.c.b16 %v448, %v447
    %v557 = vpack.c.b16 %v450, %v449
    %v558 = vpack.c.b16 %v452, %v451
    %v559 = vpack.c.b16 %v454, %v453
    %v560 = vpack.c.b16 %v456, %v455
    %v561 = vpack.c.b16 %v458, %v457
    %v562 = vpack.c.b16 %v460, %v459
    %v563 = vpack.c.b16 %v462, %v461
    %v564 = vpack.c.b16 %v464, %v463
    %v565 = vpack.c.b16 %v466, %v465
    %v566 = vpack.c.b16 %v468, %v467
    %v567 = vpack.c.b16 %v470, %v469
    %v568 = vpack.c.b16 %v472, %v471
    %v569 = vpack.c.b16 %v474, %v473
    %v570 = vpack.c.b16 %v476, %v475
    %v571 = vpack.c.b16 %v478, %v477
    %v572 = vpack.c.b16 %v480, %v479
    %v573 = vpack.c.b16 %v482, %v481
    %v574 = vpack.c.b16 %v484, %v483
    %v575 = vpack.c.b16 %v486, %v485
    %v576 = vpack.c.b16 %v488, %v487
    %v577 = vpack.c.b16 %v490, %v489
    %v578 = vpack.c.b16 %v492, %v491
    %v579 = vpack.c.b16 %v494, %v493
    %v580 = vpack.c.b16 %v496, %v495
    %v581 = vpack.c.b16 %v498, %v497
    %v582 = vpack.c.b16 %v500, %v499
    %v583 = vpack.c.b16 %v502, %v501
    %v584 = vpack.c.b16 %v504, %v503
    %v585 = vpack.c.b16 %v506, %v505
    %v586 = vpack.c.b16 %v508, %v507
    %v587 = vpack.c.b16 %v510, %v509
    %v588 = vpack.c.b16 %v512, %v511
    %v589 = vpack.c.b16 %v514, %v513
    %v590 = vpack.c.b16 %v516, %v515
    %v591 = vpack.c.b16 %v518, %v517
    %v592 = vpack.c.b16 %v520, %v519
    %v593 = vpack.c.b16 %v522, %v521
    %v594 = vpack.c.b16 %v524, %v523
    %v595 = vpack.c.b16 %v526, %v525
    %v596 = vpack.c.b16 %v528, %v527
    %v597 = vpack.c.b16 %v530, %v529
    %v598 = vpack.c.b16 %v532, %v531
    %v599 = vpack.c.b16 %v534, %v533
    %v600 = vpack.c.b16 %v536, %v535
    %665 = vmatprep.subr.bf16.mxu0 0
    %666 = vmatpush1.bf16.msra.mxu0 %v537
    %667 = vmatprep.subr.bf16.mxu0 0
    %668 = vmatpush1.bf16.msra.mxu0 %v538
    %669 = vmatprep.subr.bf16.mxu0 0
    %670 = vmatpush1.bf16.msra.mxu0 %v539
    %671 = vmatprep.subr.bf16.mxu0 0
    %672 = vmatpush1.bf16.msra.mxu0 %v540
    %673 = vmatprep.subr.bf16.mxu0 0
    %674 = vmatpush1.bf16.msra.mxu0 %v541
    %675 = vmatprep.subr.bf16.mxu0 0
    %676 = vmatpush1.bf16.msra.mxu0 %v542
    %677 = vmatprep.subr.bf16.mxu0 0
    %678 = vmatpush1.bf16.msra.mxu0 %v543
    %679 = vmatprep.subr.bf16.mxu0 0
    %680 = vmatpush1.bf16.msra.mxu0 %v544
    %681 = vmatprep.subr.bf16.mxu0 0
    %682 = vmatpush1.bf16.msra.mxu0 %v545
    %683 = vmatprep.subr.bf16.mxu0 0
    %684 = vmatpush1.bf16.msra.mxu0 %v546
    %685 = vmatprep.subr.bf16.mxu0 0
    %686 = vmatpush1.bf16.msra.mxu0 %v547
    %687 = vmatprep.subr.bf16.mxu0 0
    %688 = vmatpush1.bf16.msra.mxu0 %v548
    %689 = vmatprep.subr.bf16.mxu0 0
    %690 = vmatpush1.bf16.msra.mxu0 %v549
    %691 = vmatprep.subr.bf16.mxu0 0
    %692 = vmatpush1.bf16.msra.mxu0 %v550
    %693 = vmatprep.subr.bf16.mxu0 0
    %694 = vmatpush1.bf16.msra.mxu0 %v551
    %695 = vmatprep.subr.bf16.mxu0 0
    %696 = vmatpush1.bf16.msra.mxu0 %v552
    %697 = vmatprep.mubr.bf16.mxu0 %v139
    %698 = vmatmul.mubr.bf16.gmra.mrb[0].mxu0 %v138
    %v699 = vpop.f32.mrb[0].mxu0
    %v700 = vadd.f32 %v279, %v699
    %v701 = vpop.f32.mrb[0].mxu0
    %v702 = vpop.f32.mrb[0].mxu0
    %v703 = vadd.f32 %v279, %v702
    %v704 = vpop.f32.mrb[0].mxu0
    %705 = vdwg.mxu0
    %706 = vmatprep.subr.bf16.mxu0 0
    %707 = vmatpush1.bf16.msra.mxu0 %v553
    %708 = vmatprep.subr.bf16.mxu0 0
    %709 = vmatpush1.bf16.msra.mxu0 %v554
    %710 = vmatprep.subr.bf16.mxu0 0
    %711 = vmatpush1.bf16.msra.mxu0 %v555
    %712 = vmatprep.subr.bf16.mxu0 0
    %713 = vmatpush1.bf16.msra.mxu0 %v556
    %714 = vmatprep.subr.bf16.mxu0 0
    %715 = vmatpush1.bf16.msra.mxu0 %v557
    %716 = vmatprep.subr.bf16.mxu0 0
    %717 = vmatpush1.bf16.msra.mxu0 %v558
    %718 = vmatprep.subr.bf16.mxu0 0
    %719 = vmatpush1.bf16.msra.mxu0 %v559
    %720 = vmatprep.subr.bf16.mxu0 0
    %721 = vmatpush1.bf16.msra.mxu0 %v560
    %722 = vmatprep.subr.bf16.mxu0 0
    %723 = vmatpush1.bf16.msra.mxu0 %v561
    %724 = vmatprep.subr.bf16.mxu0 0
    %725 = vmatpush1.bf16.msra.mxu0 %v562
    %726 = vmatprep.subr.bf16.mxu0 0
    %727 = vmatpush1.bf16.msra.mxu0 %v563
    %728 = vmatprep.subr.bf16.mxu0 0
    %729 = vmatpush1.bf16.msra.mxu0 %v564
    %730 = vmatprep.subr.bf16.mxu0 0
    %731 = vmatpush1.bf16.msra.mxu0 %v565
    %732 = vmatprep.subr.bf16.mxu0 0
    %733 = vmatpush1.bf16.msra.mxu0 %v566
    %734 = vmatprep.subr.bf16.mxu0 0
    %735 = vmatpush1.bf16.msra.mxu0 %v567
    %736 = vmatprep.subr.bf16.mxu0 0
    %737 = vmatpush1.bf16.msra.mxu0 %v568
    %738 = vmatprep.mubr.bf16.mxu0 %v141
    %739 = vmatmul.mubr.bf16.gmra.mrb[0].mxu0 %v140
    %v740 = vpop.f32.mrb[0].mxu0
    %v741 = vadd.f32 %v700, %v740
    %v742 = vpop.f32.mrb[0].mxu0
    %v743 = vpop.f32.mrb[0].mxu0
    %v744 = vadd.f32 %v703, %v743
    %v745 = vpop.f32.mrb[0].mxu0
    %746 = vdwg.mxu0
    %747 = vmatprep.subr.bf16.mxu0 0
    %748 = vmatpush1.bf16.msra.mxu0 %v569
    %749 = vmatprep.subr.bf16.mxu0 0
    %750 = vmatpush1.bf16.msra.mxu0 %v570
    %751 = vmatprep.subr.bf16.mxu0 0
    %752 = vmatpush1.bf16.msra.mxu0 %v571
    %753 = vmatprep.subr.bf16.mxu0 0
    %754 = vmatpush1.bf16.msra.mxu0 %v572
    %755 = vmatprep.subr.bf16.mxu0 0
    %756 = vmatpush1.bf16.msra.mxu0 %v573
    %757 = vmatprep.subr.bf16.mxu0 0
    %758 = vmatpush1.bf16.msra.mxu0 %v574
    %759 = vmatprep.subr.bf16.mxu0 0
    %760 = vmatpush1.bf16.msra.mxu0 %v575
    %761 = vmatprep.subr.bf16.mxu0 0
    %762 = vmatpush1.bf16.msra.mxu0 %v576
    %763 = vmatprep.subr.bf16.mxu0 0
    %764 = vmatpush1.bf16.msra.mxu0 %v577
    %765 = vmatprep.subr.bf16.mxu0 0
    %766 = vmatpush1.bf16.msra.mxu0 %v578
    %767 = vmatprep.subr.bf16.mxu0 0
    %768 = vmatpush1.bf16.msra.mxu0 %v579
    %769 = vmatprep.subr.bf16.mxu0 0
    %770 = vmatpush1.bf16.msra.mxu0 %v580
    %771 = vmatprep.subr.bf16.mxu0 0
    %772 = vmatpush1.bf16.msra.mxu0 %v581
    %773 = vmatprep.subr.bf16.mxu0 0
    %774 = vmatpush1.bf16.msra.mxu0 %v582
    %775 = vmatprep.subr.bf16.mxu0 0
    %776 = vmatpush1.bf16.msra.mxu0 %v583
    %777 = vmatprep.subr.bf16.mxu0 0
    %778 = vmatpush1.bf16.msra.mxu0 %v584
    %779 = vmatprep.mubr.bf16.mxu0 %v143
    %780 = vmatmul.mubr.bf16.gmra.mrb[0].mxu0 %v142
    %v781 = vpop.f32.mrb[0].mxu0
    %v782 = vadd.f32 %v741, %v781
    %v783 = vpop.f32.mrb[0].mxu0
    %v784 = vpop.f32.mrb[0].mxu0
    %v785 = vadd.f32 %v744, %v784
    %v786 = vpop.f32.mrb[0].mxu0
    %787 = vdwg.mxu0
    %788 = vmatprep.subr.bf16.mxu0 0
    %789 = vmatpush1.bf16.msra.mxu0 %v585
    %790 = vmatprep.subr.bf16.mxu0 0
    %791 = vmatpush1.bf16.msra.mxu0 %v586
    %792 = vmatprep.subr.bf16.mxu0 0
    %793 = vmatpush1.bf16.msra.mxu0 %v587
    %794 = vmatprep.subr.bf16.mxu0 0
    %795 = vmatpush1.bf16.msra.mxu0 %v588
    %796 = vmatprep.subr.bf16.mxu0 0
    %797 = vmatpush1.bf16.msra.mxu0 %v589
    %798 = vmatprep.subr.bf16.mxu0 0
    %799 = vmatpush1.bf16.msra.mxu0 %v590
    %800 = vmatprep.subr.bf16.mxu0 0
    %801 = vmatpush1.bf16.msra.mxu0 %v591
    %802 = vmatprep.subr.bf16.mxu0 0
    %803 = vmatpush1.bf16.msra.mxu0 %v592
    %804 = vmatprep.subr.bf16.mxu0 0
    %805 = vmatpush1.bf16.msra.mxu0 %v593
    %806 = vmatprep.subr.bf16.mxu0 0
    %807 = vmatpush1.bf16.msra.mxu0 %v594
    %808 = vmatprep.subr.bf16.mxu0 0
    %809 = vmatpush1.bf16.msra.mxu0 %v595
    %810 = vmatprep.subr.bf16.mxu0 0
    %811 = vmatpush1.bf16.msra.mxu0 %v596
    %812 = vmatprep.subr.bf16.mxu0 0
    %813 = vmatpush1.bf16.msra.mxu0 %v597
    %814 = vmatprep.subr.bf16.mxu0 0
    %815 = vmatpush1.bf16.msra.mxu0 %v598
    %816 = vmatprep.subr.bf16.mxu0 0
    %817 = vmatpush1.bf16.msra.mxu0 %v599
    %818 = vmatprep.subr.bf16.mxu0 0
    %819 = vmatpush1.bf16.msra.mxu0 %v600
    %820 = vmatprep.mubr.bf16.mxu0 %v145
    %821 = vmatmul.mubr.bf16.gmra.mrb[0].mxu0 %v144
    %v822 = vpop.f32.mrb[0].mxu0
    %v823 = vadd.f32 %v782, %v822
    %v824 = vpop.f32.mrb[0].mxu0
    %v825 = vpop.f32.mrb[0].mxu0
    %v826 = vadd.f32 %v785, %v825
    %v827 = vpop.f32.mrb[0].mxu0
    %828 = vdwg.mxu0
    %v829 = vmax.f32 %v823, 0.0
    %v830 = vmax.f32 %v826, 0.0
    %v831 = vpack.c.bf16 %v830, %v829
    %v832 = vld [vmem:[#allocation8] sm:$0xf]
    %v833 = vld [vmem:[#allocation8 + $0x4] sm:$0xf]
    %v834 = vld [vmem:[#allocation8 + $0x8] sm:$0xf]
    %v835 = vld [vmem:[#allocation8 + $0xc] sm:$0xf]
    %v836 = vld [vmem:[#allocation8 + $0x10] sm:$0xf]
    %v837 = vld [vmem:[#allocation8 + $0x14] sm:$0xf]
    %v838 = vld [vmem:[#allocation8 + $0x18] sm:$0xf]
    %v839 = vld [vmem:[#allocation8 + $0x1c] sm:$0xf]
    %v840 = vld [vmem:[#allocation8 + $0x20] sm:$0xf]
    %v841 = vld [vmem:[#allocation8 + $0x24] sm:$0xf]
    %v842 = vld [vmem:[#allocation8 + $0x28] sm:$0xf]
    %v843 = vld [vmem:[#allocation8 + $0x2c] sm:$0xf]
    %v844 = vld [vmem:[#allocation8 + $0x30] sm:$0xf]
    %v845 = vld [vmem:[#allocation8 + $0x34] sm:$0xf]
    %v846 = vld [vmem:[#allocation8 + $0x38] sm:$0xf]
    %v847 = vld [vmem:[#allocation8 + $0x3c] sm:$0xf]
    %v848 = vld [vmem:[%s5] sm:$0x1]
    %v850 = vlaneseq
    %v851 = vshrl.u32 %v850, 7
    %v852 = vsub.s32 0, %v851
    %v853 = vrot.slane %v848, %v852
    %v871 = vunpack.c.l.b16 %v832
    %v872 = vunpack.c.l.b16 %v833
    %v873 = vunpack.c.l.b16 %v834
    %v874 = vunpack.c.l.b16 %v835
    %v875 = vunpack.c.l.b16 %v836
    %v876 = vunpack.c.l.b16 %v837
    %v877 = vunpack.c.l.b16 %v838
    %v878 = vunpack.c.l.b16 %v839
    %v879 = vunpack.c.l.b16 %v840
    %v880 = vunpack.c.l.b16 %v841
    %v881 = vunpack.c.l.b16 %v842
    %v882 = vunpack.c.l.b16 %v843
    %v883 = vunpack.c.l.b16 %v844
    %v884 = vunpack.c.l.b16 %v845
    %v885 = vunpack.c.l.b16 %v846
    %v886 = vunpack.c.l.b16 %v847
    %v887 = vpack.c.b16 %v872, %v871
    %v888 = vpack.c.b16 %v874, %v873
    %v889 = vpack.c.b16 %v876, %v875
    %v890 = vpack.c.b16 %v878, %v877
    %v891 = vpack.c.b16 %v880, %v879
    %v892 = vpack.c.b16 %v882, %v881
    %v893 = vpack.c.b16 %v884, %v883
    %v894 = vpack.c.b16 %v886, %v885
    %903 = vmatprep.subr.bf16.mxu0 0
    %904 = vmatpush1.bf16.msra.mxu0 %v887
    %905 = vmatprep.subr.bf16.mxu0 0
    %906 = vmatpush1.bf16.msra.mxu0 %v888
    %907 = vmatprep.subr.bf16.mxu0 0
    %908 = vmatpush1.bf16.msra.mxu0 %v889
    %909 = vmatprep.subr.bf16.mxu0 0
    %910 = vmatpush1.bf16.msra.mxu0 %v890
    %911 = vmatprep.subr.bf16.mxu0 0
    %912 = vmatpush1.bf16.msra.mxu0 %v891
    %913 = vmatprep.subr.bf16.mxu0 0
    %914 = vmatpush1.bf16.msra.mxu0 %v892
    %915 = vmatprep.subr.bf16.mxu0 0
    %916 = vmatpush1.bf16.msra.mxu0 %v893
    %917 = vmatprep.subr.bf16.mxu0 0
    %918 = vmatpush1.bf16.msra.mxu0 %v894
    %919 = vmatprep.subr.bf16.mxu0 0
    %920 = vmatpush1.bf16.msra.mxu0 0
    %921 = vmatprep.subr.bf16.mxu0 0
    %922 = vmatpush1.bf16.msra.mxu0 0
    %923 = vmatprep.subr.bf16.mxu0 0
    %924 = vmatpush1.bf16.msra.mxu0 0
    %925 = vmatprep.subr.bf16.mxu0 0
    %926 = vmatpush1.bf16.msra.mxu0 0
    %927 = vmatprep.subr.bf16.mxu0 0
    %928 = vmatpush1.bf16.msra.mxu0 0
    %929 = vmatprep.subr.bf16.mxu0 0
    %930 = vmatpush1.bf16.msra.mxu0 0
    %931 = vmatprep.subr.bf16.mxu0 0
    %932 = vmatpush1.bf16.msra.mxu0 0
    %933 = vmatprep.subr.bf16.mxu0 0
    %934 = vmatpush1.bf16.msra.mxu0 0
    %935 = vmatprep.mubr.bf16.mxu0 0
    %936 = vmatmul.mubr.bf16.gmra.mrb[0].mxu0 %v831
    %v937 = vpop.f32.mrb[0].mxu0
    %v938 = vadd.f32 %v853, %v937
    %v939 = vpop.f32.mrb[0].mxu0
    %v940 = vpop.f32.mrb[0].mxu0
    %v941 = vadd.f32 %v853, %v940
    %v942 = vpop.f32.mrb[0].mxu0
    %943 = vdwg.mxu0
    %944 = vst [vmem:[#allocation14] sm:$0xff] %v938
    %945 = vst [vmem:[#allocation14 + $0x8] sm:$0xff] %v941
    %v946 = vlaneseq
    %v947 = vand.u32 %v946, 127
    %vm948 = vcmp.lt.s32.totalorder %v947, 32
    %v949 = vld [vmem:[#allocation5] sm:$0xff]
    %v950 = vld [vmem:[#allocation5 + $0x8] sm:$0xff]
    %v951 = vmul.f32 %v938, 0.5
    %v952 = vmul.f32 %v941, 0.5
    %v953 = vmul.f32 %v951, 1.442695
    %v954 = vpow.pop %v953
    %v955 = vmul.f32 %v952, 1.442695
    %v956 = vpow.pop %v955
    %v957 = vmul.f32 %v949, %v954
    %v958 = vmul.f32 %v950, %v956
    %v959 = vsel %vm948, %v938, %v957
    %v960 = vsel %vm948, %v941, %v958
    %v961 = vpack.c.bf16 %v960, %v959
    %v962 = vld [vmem:[#allocation10] sm:$0xf]
    %v963 = vld [vmem:[#allocation10 + $0x4] sm:$0xf]
    %v964 = vld [vmem:[#allocation10 + $0x8] sm:$0xf]
    %v965 = vld [vmem:[#allocation10 + $0xc] sm:$0xf]
    %v966 = vld [vmem:[#allocation10 + $0x10] sm:$0xf]
    %v967 = vld [vmem:[#allocation10 + $0x14] sm:$0xf]
    %v968 = vld [vmem:[#allocation10 + $0x18] sm:$0xf]
    %v969 = vld [vmem:[#allocation10 + $0x1c] sm:$0xf]
    %v970 = vld [vmem:[#allocation10 + $0x20] sm:$0xf]
    %v971 = vld [vmem:[#allocation10 + $0x24] sm:$0xf]
    %v972 = vld [vmem:[#allocation10 + $0x28] sm:$0xf]
    %v973 = vld [vmem:[#allocation10 + $0x2c] sm:$0xf]
    %v974 = vld [vmem:[#allocation10 + $0x30] sm:$0xf]
    %v975 = vld [vmem:[#allocation10 + $0x34] sm:$0xf]
    %v976 = vld [vmem:[#allocation10 + $0x38] sm:$0xf]
    %v977 = vld [vmem:[#allocation10 + $0x3c] sm:$0xf]
    %v978 = vld [vmem:[%s7] sm:$0x1]
    %v980 = vlaneseq
    %v981 = vshrl.u32 %v980, 7
    %v982 = vsub.s32 0, %v981
    %v983 = vrot.slane %v978, %v982
    %v1001 = vunpack.c.l.b16 %v962
    %v1002 = vunpack.c.l.b16 %v963
    %v1003 = vunpack.c.l.b16 %v964
    %v1004 = vunpack.c.l.b16 %v965
    %v1005 = vunpack.c.l.b16 %v966
    %v1006 = vunpack.c.l.b16 %v967
    %v1007 = vunpack.c.l.b16 %v968
    %v1008 = vunpack.c.l.b16 %v969
    %v1009 = vunpack.c.l.b16 %v970
    %v1010 = vunpack.c.l.b16 %v971
    %v1011 = vunpack.c.l.b16 %v972
    %v1012 = vunpack.c.l.b16 %v973
    %v1013 = vunpack.c.l.b16 %v974
    %v1014 = vunpack.c.l.b16 %v975
    %v1015 = vunpack.c.l.b16 %v976
    %v1016 = vunpack.c.l.b16 %v977
    %v1017 = vpack.c.b16 %v1002, %v1001
    %v1018 = vpack.c.b16 %v1004, %v1003
    %v1019 = vpack.c.b16 %v1006, %v1005
    %v1020 = vpack.c.b16 %v1008, %v1007
    %v1021 = vpack.c.b16 %v1010, %v1009
    %v1022 = vpack.c.b16 %v1012, %v1011
    %v1023 = vpack.c.b16 %v1014, %v1013
    %v1024 = vpack.c.b16 %v1016, %v1015
    %1033 = vmatprep.subr.bf16.mxu0 0
    %1034 = vmatpush1.bf16.msra.mxu0 %v1017
    %1035 = vmatprep.subr.bf16.mxu0 0
    %1036 = vmatpush1.bf16.msra.mxu0 %v1018
    %1037 = vmatprep.subr.bf16.mxu0 0
    %1038 = vmatpush1.bf16.msra.mxu0 %v1019
    %1039 = vmatprep.subr.bf16.mxu0 0
    %1040 = vmatpush1.bf16.msra.mxu0 %v1020
    %1041 = vmatprep.subr.bf16.mxu0 0
    %1042 = vmatpush1.bf16.msra.mxu0 %v1021
    %1043 = vmatprep.subr.bf16.mxu0 0
    %1044 = vmatpush1.bf16.msra.mxu0 %v1022
    %1045 = vmatprep.subr.bf16.mxu0 0
    %1046 = vmatpush1.bf16.msra.mxu0 %v1023
    %1047 = vmatprep.subr.bf16.mxu0 0
    %1048 = vmatpush1.bf16.msra.mxu0 %v1024
    %1049 = vmatprep.subr.bf16.mxu0 0
    %1050 = vmatpush1.bf16.msra.mxu0 0
    %1051 = vmatprep.subr.bf16.mxu0 0
    %1052 = vmatpush1.bf16.msra.mxu0 0
    %1053 = vmatprep.subr.bf16.mxu0 0
    %1054 = vmatpush1.bf16.msra.mxu0 0
    %1055 = vmatprep.subr.bf16.mxu0 0
    %1056 = vmatpush1.bf16.msra.mxu0 0
    %1057 = vmatprep.subr.bf16.mxu0 0
    %1058 = vmatpush1.bf16.msra.mxu0 0
    %1059 = vmatprep.subr.bf16.mxu0 0
    %1060 = vmatpush1.bf16.msra.mxu0 0
    %1061 = vmatprep.subr.bf16.mxu0 0
    %1062 = vmatpush1.bf16.msra.mxu0 0
    %1063 = vmatprep.subr.bf16.mxu0 0
    %1064 = vmatpush1.bf16.msra.mxu0 0
    %1065 = vmatprep.mubr.bf16.mxu0 0
    %1066 = vmatmul.mubr.bf16.gmra.mrb[0].mxu0 %v961
    %v1067 = vpop.f32.mrb[0].mxu0
    %v1068 = vadd.f32 %v983, %v1067
    %v1069 = vpop.f32.mrb[0].mxu0
    %v1070 = vpop.f32.mrb[0].mxu0
    %v1071 = vadd.f32 %v983, %v1070
    %v1072 = vpop.f32.mrb[0].mxu0
    %1073 = vdwg.mxu0
    %v1074 = vmax.f32 %v1068, 0.0
    %v1075 = vmax.f32 %v1071, 0.0
    %v1076 = vpack.c.bf16 %v1075, %v1074
    %v1077 = vld [vmem:[#allocation11] sm:$0xff]
    %v1078 = vld [vmem:[#allocation11 + $0x8] sm:$0xff]
    %v1079 = vld [vmem:[#allocation11 + $0x10] sm:$0xff]
    %v1080 = vld [vmem:[#allocation11 + $0x18] sm:$0xff]
    %v1081 = vld [vmem:[#allocation11 + $0x20] sm:$0xff]
    %v1082 = vld [vmem:[#allocation11 + $0x28] sm:$0xff]
    %v1083 = vld [vmem:[#allocation11 + $0x30] sm:$0xff]
    %v1084 = vld [vmem:[#allocation11 + $0x38] sm:$0xff]
    %v1085 = vld [vmem:[#allocation11 + $0x40] sm:$0xff]
    %v1086 = vld [vmem:[#allocation11 + $0x48] sm:$0xff]
    %v1087 = vld [vmem:[#allocation11 + $0x50] sm:$0xff]
    %v1088 = vld [vmem:[#allocation11 + $0x58] sm:$0xff]
    %v1089 = vld [vmem:[#allocation11 + $0x60] sm:$0xff]
    %v1090 = vld [vmem:[#allocation11 + $0x68] sm:$0xff]
    %v1091 = vld [vmem:[#allocation11 + $0x70] sm:$0xff]
    %v1092 = vld [vmem:[#allocation11 + $0x78] sm:$0xff]
    %v1093 = vld [vmem:[#allocation11 + $0x80] sm:$0xff]
    %v1094 = vld [vmem:[#allocation11 + $0x88] sm:$0xff]
    %v1095 = vld [vmem:[#allocation11 + $0x90] sm:$0xff]
    %v1096 = vld [vmem:[#allocation11 + $0x98] sm:$0xff]
    %v1097 = vld [vmem:[#allocation11 + $0xa0] sm:$0xff]
    %v1098 = vld [vmem:[#allocation11 + $0xa8] sm:$0xff]
    %v1099 = vld [vmem:[#allocation11 + $0xb0] sm:$0xff]
    %v1100 = vld [vmem:[#allocation11 + $0xb8] sm:$0xff]
    %v1101 = vld [vmem:[#allocation11 + $0xc0] sm:$0xff]
    %v1102 = vld [vmem:[#allocation11 + $0xc8] sm:$0xff]
    %v1103 = vld [vmem:[#allocation11 + $0xd0] sm:$0xff]
    %v1104 = vld [vmem:[#allocation11 + $0xd8] sm:$0xff]
    %v1105 = vld [vmem:[#allocation11 + $0xe0] sm:$0xff]
    %v1106 = vld [vmem:[#allocation11 + $0xe8] sm:$0xff]
    %v1107 = vld [vmem:[#allocation11 + $0xf0] sm:$0xff]
    %v1108 = vld [vmem:[#allocation11 + $0xf8] sm:$0xff]
    %v1109 = vld [vmem:[#allocation11 + $0x100] sm:$0xff]
    %v1110 = vld [vmem:[#allocation11 + $0x108] sm:$0xff]
    %v1111 = vld [vmem:[#allocation11 + $0x110] sm:$0xff]
    %v1112 = vld [vmem:[#allocation11 + $0x118] sm:$0xff]
    %v1113 = vld [vmem:[#allocation11 + $0x120] sm:$0xff]
    %v1114 = vld [vmem:[#allocation11 + $0x128] sm:$0xff]
    %v1115 = vld [vmem:[#allocation11 + $0x130] sm:$0xff]
    %v1116 = vld [vmem:[#allocation11 + $0x138] sm:$0xff]
    %v1117 = vld [vmem:[#allocation11 + $0x140] sm:$0xff]
    %v1118 = vld [vmem:[#allocation11 + $0x148] sm:$0xff]
    %v1119 = vld [vmem:[#allocation11 + $0x150] sm:$0xff]
    %v1120 = vld [vmem:[#allocation11 + $0x158] sm:$0xff]
    %v1121 = vld [vmem:[#allocation11 + $0x160] sm:$0xff]
    %v1122 = vld [vmem:[#allocation11 + $0x168] sm:$0xff]
    %v1123 = vld [vmem:[#allocation11 + $0x170] sm:$0xff]
    %v1124 = vld [vmem:[#allocation11 + $0x178] sm:$0xff]
    %v1125 = vld [vmem:[#allocation11 + $0x180] sm:$0xff]
    %v1126 = vld [vmem:[#allocation11 + $0x188] sm:$0xff]
    %v1127 = vld [vmem:[#allocation11 + $0x190] sm:$0xff]
    %v1128 = vld [vmem:[#allocation11 + $0x198] sm:$0xff]
    %v1129 = vld [vmem:[#allocation11 + $0x1a0] sm:$0xff]
    %v1130 = vld [vmem:[#allocation11 + $0x1a8] sm:$0xff]
    %v1131 = vld [vmem:[#allocation11 + $0x1b0] sm:$0xff]
    %v1132 = vld [vmem:[#allocation11 + $0x1b8] sm:$0xff]
    %v1133 = vld [vmem:[#allocation11 + $0x1c0] sm:$0xff]
    %v1134 = vld [vmem:[#allocation11 + $0x1c8] sm:$0xff]
    %v1135 = vld [vmem:[#allocation11 + $0x1d0] sm:$0xff]
    %v1136 = vld [vmem:[#allocation11 + $0x1d8] sm:$0xff]
    %v1137 = vld [vmem:[#allocation11 + $0x1e0] sm:$0xff]
    %v1138 = vld [vmem:[#allocation11 + $0x1e8] sm:$0xff]
    %v1139 = vld [vmem:[#allocation11 + $0x1f0] sm:$0xff]
    %v1140 = vld [vmem:[#allocation11 + $0x1f8] sm:$0xff]
    %v1141 = vld [vmem:[%s9] sm:$0xff]
    %v1143 = vlaneseq
    %v1144 = vshrl.u32 %v1143, 7
    %v1145 = vsub.s32 0, %v1144
    %v1146 = vrot.slane %v1141, %v1145
    %v1147 = vlaneseq
    %v1148 = vshrl.u32 %v1147, 7
    %v1149 = vsub.s32 1, %v1148
    %v1150 = vrot.slane %v1141, %v1149
    %v1151 = vlaneseq
    %v1152 = vshrl.u32 %v1151, 7
    %v1153 = vsub.s32 2, %v1152
    %v1154 = vrot.slane %v1141, %v1153
    %v1155 = vlaneseq
    %v1156 = vshrl.u32 %v1155, 7
    %v1157 = vsub.s32 3, %v1156
    %v1158 = vrot.slane %v1141, %v1157
    %v1159 = vlaneseq
    %v1160 = vshrl.u32 %v1159, 7
    %v1161 = vsub.s32 4, %v1160
    %v1162 = vrot.slane %v1141, %v1161
    %v1163 = vlaneseq
    %v1164 = vshrl.u32 %v1163, 7
    %v1165 = vsub.s32 5, %v1164
    %v1166 = vrot.slane %v1141, %v1165
    %v1167 = vlaneseq
    %v1168 = vshrl.u32 %v1167, 7
    %v1169 = vsub.s32 6, %v1168
    %v1170 = vrot.slane %v1141, %v1169
    %v1171 = vlaneseq
    %v1172 = vshrl.u32 %v1171, 7
    %v1173 = vsub.s32 7, %v1172
    %v1174 = vrot.slane %v1141, %v1173
    %v1247 = vunpack.c.l.b16 %v1077
    %v1248 = vunpack.c.h.b16 %v1077
    %v1249 = vunpack.c.l.b16 %v1078
    %v1250 = vunpack.c.h.b16 %v1078
    %v1251 = vunpack.c.l.b16 %v1079
    %v1252 = vunpack.c.h.b16 %v1079
    %v1253 = vunpack.c.l.b16 %v1080
    %v1254 = vunpack.c.h.b16 %v1080
    %v1255 = vunpack.c.l.b16 %v1081
    %v1256 = vunpack.c.h.b16 %v1081
    %v1257 = vunpack.c.l.b16 %v1082
    %v1258 = vunpack.c.h.b16 %v1082
    %v1259 = vunpack.c.l.b16 %v1083
    %v1260 = vunpack.c.h.b16 %v1083
    %v1261 = vunpack.c.l.b16 %v1084
    %v1262 = vunpack.c.h.b16 %v1084
    %v1263 = vunpack.c.l.b16 %v1085
    %v1264 = vunpack.c.h.b16 %v1085
    %v1265 = vunpack.c.l.b16 %v1086
    %v1266 = vunpack.c.h.b16 %v1086
    %v1267 = vunpack.c.l.b16 %v1087
    %v1268 = vunpack.c.h.b16 %v1087
    %v1269 = vunpack.c.l.b16 %v1088
    %v1270 = vunpack.c.h.b16 %v1088
    %v1271 = vunpack.c.l.b16 %v1089
    %v1272 = vunpack.c.h.b16 %v1089
    %v1273 = vunpack.c.l.b16 %v1090
    %v1274 = vunpack.c.h.b16 %v1090
    %v1275 = vunpack.c.l.b16 %v1091
    %v1276 = vunpack.c.h.b16 %v1091
    %v1277 = vunpack.c.l.b16 %v1092
    %v1278 = vunpack.c.h.b16 %v1092
    %v1279 = vunpack.c.l.b16 %v1093
    %v1280 = vunpack.c.h.b16 %v1093
    %v1281 = vunpack.c.l.b16 %v1094
    %v1282 = vunpack.c.h.b16 %v1094
    %v1283 = vunpack.c.l.b16 %v1095
    %v1284 = vunpack.c.h.b16 %v1095
    %v1285 = vunpack.c.l.b16 %v1096
    %v1286 = vunpack.c.h.b16 %v1096
    %v1287 = vunpack.c.l.b16 %v1097
    %v1288 = vunpack.c.h.b16 %v1097
    %v1289 = vunpack.c.l.b16 %v1098
    %v1290 = vunpack.c.h.b16 %v1098
    %v1291 = vunpack.c.l.b16 %v1099
    %v1292 = vunpack.c.h.b16 %v1099
    %v1293 = vunpack.c.l.b16 %v1100
    %v1294 = vunpack.c.h.b16 %v1100
    %v1295 = vunpack.c.l.b16 %v1101
    %v1296 = vunpack.c.h.b16 %v1101
    %v1297 = vunpack.c.l.b16 %v1102
    %v1298 = vunpack.c.h.b16 %v1102
    %v1299 = vunpack.c.l.b16 %v1103
    %v1300 = vunpack.c.h.b16 %v1103
    %v1301 = vunpack.c.l.b16 %v1104
    %v1302 = vunpack.c.h.b16 %v1104
    %v1303 = vunpack.c.l.b16 %v1105
    %v1304 = vunpack.c.h.b16 %v1105
    %v1305 = vunpack.c.l.b16 %v1106
    %v1306 = vunpack.c.h.b16 %v1106
    %v1307 = vunpack.c.l.b16 %v1107
    %v1308 = vunpack.c.h.b16 %v1107
    %v1309 = vunpack.c.l.b16 %v1108
    %v1310 = vunpack.c.h.b16 %v1108
    %v1311 = vunpack.c.l.b16 %v1109
    %v1312 = vunpack.c.h.b16 %v1109
    %v1313 = vunpack.c.l.b16 %v1110
    %v1314 = vunpack.c.h.b16 %v1110
    %v1315 = vunpack.c.l.b16 %v1111
    %v1316 = vunpack.c.h.b16 %v1111
    %v1317 = vunpack.c.l.b16 %v1112
    %v1318 = vunpack.c.h.b16 %v1112
    %v1319 = vunpack.c.l.b16 %v1113
    %v1320 = vunpack.c.h.b16 %v1113
    %v1321 = vunpack.c.l.b16 %v1114
    %v1322 = vunpack.c.h.b16 %v1114
    %v1323 = vunpack.c.l.b16 %v1115
    %v1324 = vunpack.c.h.b16 %v1115
    %v1325 = vunpack.c.l.b16 %v1116
    %v1326 = vunpack.c.h.b16 %v1116
    %v1327 = vunpack.c.l.b16 %v1117
    %v1328 = vunpack.c.h.b16 %v1117
    %v1329 = vunpack.c.l.b16 %v1118
    %v1330 = vunpack.c.h.b16 %v1118
    %v1331 = vunpack.c.l.b16 %v1119
    %v1332 = vunpack.c.h.b16 %v1119
    %v1333 = vunpack.c.l.b16 %v1120
    %v1334 = vunpack.c.h.b16 %v1120
    %v1335 = vunpack.c.l.b16 %v1121
    %v1336 = vunpack.c.h.b16 %v1121
    %v1337 = vunpack.c.l.b16 %v1122
    %v1338 = vunpack.c.h.b16 %v1122
    %v1339 = vunpack.c.l.b16 %v1123
    %v1340 = vunpack.c.h.b16 %v1123
    %v1341 = vunpack.c.l.b16 %v1124
    %v1342 = vunpack.c.h.b16 %v1124
    %v1343 = vunpack.c.l.b16 %v1125
    %v1344 = vunpack.c.h.b16 %v1125
    %v1345 = vunpack.c.l.b16 %v1126
    %v1346 = vunpack.c.h.b16 %v1126
    %v1347 = vunpack.c.l.b16 %v1127
    %v1348 = vunpack.c.h.b16 %v1127
    %v1349 = vunpack.c.l.b16 %v1128
    %v1350 = vunpack.c.h.b16 %v1128
    %v1351 = vunpack.c.l.b16 %v1129
    %v1352 = vunpack.c.h.b16 %v1129
    %v1353 = vunpack.c.l.b16 %v1130
    %v1354 = vunpack.c.h.b16 %v1130
    %v1355 = vunpack.c.l.b16 %v1131
    %v1356 = vunpack.c.h.b16 %v1131
    %v1357 = vunpack.c.l.b16 %v1132
    %v1358 = vunpack.c.h.b16 %v1132
    %v1359 = vunpack.c.l.b16 %v1133
    %v1360 = vunpack.c.h.b16 %v1133
    %v1361 = vunpack.c.l.b16 %v1134
    %v1362 = vunpack.c.h.b16 %v1134
    %v1363 = vunpack.c.l.b16 %v1135
    %v1364 = vunpack.c.h.b16 %v1135
    %v1365 = vunpack.c.l.b16 %v1136
    %v1366 = vunpack.c.h.b16 %v1136
    %v1367 = vunpack.c.l.b16 %v1137
    %v1368 = vunpack.c.h.b16 %v1137
    %v1369 = vunpack.c.l.b16 %v1138
    %v1370 = vunpack.c.h.b16 %v1138
    %v1371 = vunpack.c.l.b16 %v1139
    %v1372 = vunpack.c.h.b16 %v1139
    %v1373 = vunpack.c.l.b16 %v1140
    %v1374 = vunpack.c.h.b16 %v1140
    %v1375 = vpack.c.b16 %v1255, %v1247
    %v1376 = vpack.c.b16 %v1256, %v1248
    %v1377 = vpack.c.b16 %v1257, %v1249
    %v1378 = vpack.c.b16 %v1258, %v1250
    %v1379 = vpack.c.b16 %v1259, %v1251
    %v1380 = vpack.c.b16 %v1260, %v1252
    %v1381 = vpack.c.b16 %v1261, %v1253
    %v1382 = vpack.c.b16 %v1262, %v1254
    %v1383 = vpack.c.b16 %v1271, %v1263
    %v1384 = vpack.c.b16 %v1272, %v1264
    %v1385 = vpack.c.b16 %v1273, %v1265
    %v1386 = vpack.c.b16 %v1274, %v1266
    %v1387 = vpack.c.b16 %v1275, %v1267
    %v1388 = vpack.c.b16 %v1276, %v1268
    %v1389 = vpack.c.b16 %v1277, %v1269
    %v1390 = vpack.c.b16 %v1278, %v1270
    %v1391 = vpack.c.b16 %v1287, %v1279
    %v1392 = vpack.c.b16 %v1288, %v1280
    %v1393 = vpack.c.b16 %v1289, %v1281
    %v1394 = vpack.c.b16 %v1290, %v1282
    %v1395 = vpack.c.b16 %v1291, %v1283
    %v1396 = vpack.c.b16 %v1292, %v1284
    %v1397 = vpack.c.b16 %v1293, %v1285
    %v1398 = vpack.c.b16 %v1294, %v1286
    %v1399 = vpack.c.b16 %v1303, %v1295
    %v1400 = vpack.c.b16 %v1304, %v1296
    %v1401 = vpack.c.b16 %v1305, %v1297
    %v1402 = vpack.c.b16 %v1306, %v1298
    %v1403 = vpack.c.b16 %v1307, %v1299
    %v1404 = vpack.c.b16 %v1308, %v1300
    %v1405 = vpack.c.b16 %v1309, %v1301
    %v1406 = vpack.c.b16 %v1310, %v1302
    %v1407 = vpack.c.b16 %v1319, %v1311
    %v1408 = vpack.c.b16 %v1320, %v1312
    %v1409 = vpack.c.b16 %v1321, %v1313
    %v1410 = vpack.c.b16 %v1322, %v1314
    %v1411 = vpack.c.b16 %v1323, %v1315
    %v1412 = vpack.c.b16 %v1324, %v1316
    %v1413 = vpack.c.b16 %v1325, %v1317
    %v1414 = vpack.c.b16 %v1326, %v1318
    %v1415 = vpack.c.b16 %v1335, %v1327
    %v1416 = vpack.c.b16 %v1336, %v1328
    %v1417 = vpack.c.b16 %v1337, %v1329
    %v1418 = vpack.c.b16 %v1338, %v1330
    %v1419 = vpack.c.b16 %v1339, %v1331
    %v1420 = vpack.c.b16 %v1340, %v1332
    %v1421 = vpack.c.b16 %v1341, %v1333
    %v1422 = vpack.c.b16 %v1342, %v1334
    %v1423 = vpack.c.b16 %v1351, %v1343
    %v1424 = vpack.c.b16 %v1352, %v1344
    %v1425 = vpack.c.b16 %v1353, %v1345
    %v1426 = vpack.c.b16 %v1354, %v1346
    %v1427 = vpack.c.b16 %v1355, %v1347
    %v1428 = vpack.c.b16 %v1356, %v1348
    %v1429 = vpack.c.b16 %v1357, %v1349
    %v1430 = vpack.c.b16 %v1358, %v1350
    %v1431 = vpack.c.b16 %v1367, %v1359
    %v1432 = vpack.c.b16 %v1368, %v1360
    %v1433 = vpack.c.b16 %v1369, %v1361
    %v1434 = vpack.c.b16 %v1370, %v1362
    %v1435 = vpack.c.b16 %v1371, %v1363
    %v1436 = vpack.c.b16 %v1372, %v1364
    %v1437 = vpack.c.b16 %v1373, %v1365
    %v1438 = vpack.c.b16 %v1374, %v1366
    %1503 = vmatprep.subr.bf16.mxu0 %v1376
    %1504 = vmatpush1.bf16.msra.mxu0 %v1375
    %1505 = vmatprep.subr.bf16.mxu0 %v1384
    %1506 = vmatpush1.bf16.msra.mxu0 %v1383
    %1507 = vmatprep.subr.bf16.mxu0 %v1392
    %1508 = vmatpush1.bf16.msra.mxu0 %v1391
    %1509 = vmatprep.subr.bf16.mxu0 %v1400
    %1510 = vmatpush1.bf16.msra.mxu0 %v1399
    %1511 = vmatprep.subr.bf16.mxu0 %v1408
    %1512 = vmatpush1.bf16.msra.mxu0 %v1407
    %1513 = vmatprep.subr.bf16.mxu0 %v1416
    %1514 = vmatpush1.bf16.msra.mxu0 %v1415
    %1515 = vmatprep.subr.bf16.mxu0 %v1424
    %1516 = vmatpush1.bf16.msra.mxu0 %v1423
    %1517 = vmatprep.subr.bf16.mxu0 %v1432
    %1518 = vmatpush1.bf16.msra.mxu0 %v1431
    %1519 = vmatprep.subr.bf16.mxu0 0
    %1520 = vmatpush1.bf16.msra.mxu0 0
    %1521 = vmatprep.subr.bf16.mxu0 0
    %1522 = vmatpush1.bf16.msra.mxu0 0
    %1523 = vmatprep.subr.bf16.mxu0 0
    %1524 = vmatpush1.bf16.msra.mxu0 0
    %1525 = vmatprep.subr.bf16.mxu0 0
    %1526 = vmatpush1.bf16.msra.mxu0 0
    %1527 = vmatprep.subr.bf16.mxu0 0
    %1528 = vmatpush1.bf16.msra.mxu0 0
    %1529 = vmatprep.subr.bf16.mxu0 0
    %1530 = vmatpush1.bf16.msra.mxu0 0
    %1531 = vmatprep.subr.bf16.mxu0 0
    %1532 = vmatpush1.bf16.msra.mxu0 0
    %1533 = vmatprep.subr.bf16.mxu0 0
    %1534 = vmatpush1.bf16.msra.mxu0 0
    %1535 = vmatprep.mubr.bf16.mxu0 0
    %1536 = vmatmul.mubr.bf16.gmra.mrb[0].mxu0 %v1076
    %v1537 = vpop.f32.mrb[0].mxu0
    %v1538 = vadd.f32 %v1146, %v1537
    %v1539 = vpop.f32.mrb[0].mxu0
    %v1540 = vadd.f32 %v1150, %v1539
    %v1541 = vpop.f32.mrb[0].mxu0
    %v1542 = vadd.f32 %v1146, %v1541
    %v1543 = vpop.f32.mrb[0].mxu0
    %v1544 = vadd.f32 %v1150, %v1543
    %1545 = vdwg.mxu0
    %1546 = vmatprep.subr.bf16.mxu0 %v1378
    %1547 = vmatpush1.bf16.msra.mxu0 %v1377
    %1548 = vmatprep.subr.bf16.mxu0 %v1386
    %1549 = vmatpush1.bf16.msra.mxu0 %v1385
    %1550 = vmatprep.subr.bf16.mxu0 %v1394
    %1551 = vmatpush1.bf16.msra.mxu0 %v1393
    %1552 = vmatprep.subr.bf16.mxu0 %v1402
    %1553 = vmatpush1.bf16.msra.mxu0 %v1401
    %1554 = vmatprep.subr.bf16.mxu0 %v1410
    %1555 = vmatpush1.bf16.msra.mxu0 %v1409
    %1556 = vmatprep.subr.bf16.mxu0 %v1418
    %1557 = vmatpush1.bf16.msra.mxu0 %v1417
    %1558 = vmatprep.subr.bf16.mxu0 %v1426
    %1559 = vmatpush1.bf16.msra.mxu0 %v1425
    %1560 = vmatprep.subr.bf16.mxu0 %v1434
    %1561 = vmatpush1.bf16.msra.mxu0 %v1433
    %1562 = vmatprep.subr.bf16.mxu0 0
    %1563 = vmatpush1.bf16.msra.mxu0 0
    %1564 = vmatprep.subr.bf16.mxu0 0
    %1565 = vmatpush1.bf16.msra.mxu0 0
    %1566 = vmatprep.subr.bf16.mxu0 0
    %1567 = vmatpush1.bf16.msra.mxu0 0
    %1568 = vmatprep.subr.bf16.mxu0 0
    %1569 = vmatpush1.bf16.msra.mxu0 0
    %1570 = vmatprep.subr.bf16.mxu0 0
    %1571 = vmatpush1.bf16.msra.mxu0 0
    %1572 = vmatprep.subr.bf16.mxu0 0
    %1573 = vmatpush1.bf16.msra.mxu0 0
    %1574 = vmatprep.subr.bf16.mxu0 0
    %1575 = vmatpush1.bf16.msra.mxu0 0
    %1576 = vmatprep.subr.bf16.mxu0 0
    %1577 = vmatpush1.bf16.msra.mxu0 0
    %1578 = vmatprep.mubr.bf16.mxu0 0
    %1579 = vmatmul.mubr.bf16.gmra.mrb[0].mxu0 %v1076
    %v1580 = vpop.f32.mrb[0].mxu0
    %v1581 = vadd.f32 %v1154, %v1580
    %v1582 = vpop.f32.mrb[0].mxu0
    %v1583 = vadd.f32 %v1158, %v1582
    %v1584 = vpop.f32.mrb[0].mxu0
    %v1585 = vadd.f32 %v1154, %v1584
    %v1586 = vpop.f32.mrb[0].mxu0
    %v1587 = vadd.f32 %v1158, %v1586
    %1588 = vdwg.mxu0
    %1589 = vmatprep.subr.bf16.mxu0 %v1380
    %1590 = vmatpush1.bf16.msra.mxu0 %v1379
    %1591 = vmatprep.subr.bf16.mxu0 %v1388
    %1592 = vmatpush1.bf16.msra.mxu0 %v1387
    %1593 = vmatprep.subr.bf16.mxu0 %v1396
    %1594 = vmatpush1.bf16.msra.mxu0 %v1395
    %1595 = vmatprep.subr.bf16.mxu0 %v1404
    %1596 = vmatpush1.bf16.msra.mxu0 %v1403
    %1597 = vmatprep.subr.bf16.mxu0 %v1412
    %1598 = vmatpush1.bf16.msra.mxu0 %v1411
    %1599 = vmatprep.subr.bf16.mxu0 %v1420
    %1600 = vmatpush1.bf16.msra.mxu0 %v1419
    %1601 = vmatprep.subr.bf16.mxu0 %v1428
    %1602 = vmatpush1.bf16.msra.mxu0 %v1427
    %1603 = vmatprep.subr.bf16.mxu0 %v1436
    %1604 = vmatpush1.bf16.msra.mxu0 %v1435
    %1605 = vmatprep.subr.bf16.mxu0 0
    %1606 = vmatpush1.bf16.msra.mxu0 0
    %1607 = vmatprep.subr.bf16.mxu0 0
    %1608 = vmatpush1.bf16.msra.mxu0 0
    %1609 = vmatprep.subr.bf16.mxu0 0
    %1610 = vmatpush1.bf16.msra.mxu0 0
    %1611 = vmatprep.subr.bf16.mxu0 0
    %1612 = vmatpush1.bf16.msra.mxu0 0
    %1613 = vmatprep.subr.bf16.mxu0 0
    %1614 = vmatpush1.bf16.msra.mxu0 0
    %1615 = vmatprep.subr.bf16.mxu0 0
    %1616 = vmatpush1.bf16.msra.mxu0 0
    %1617 = vmatprep.subr.bf16.mxu0 0
    %1618 = vmatpush1.bf16.msra.mxu0 0
    %1619 = vmatprep.subr.bf16.mxu0 0
    %1620 = vmatpush1.bf16.msra.mxu0 0
    %1621 = vmatprep.mubr.bf16.mxu0 0
    %1622 = vmatmul.mubr.bf16.gmra.mrb[0].mxu0 %v1076
    %v1623 = vpop.f32.mrb[0].mxu0
    %v1624 = vadd.f32 %v1162, %v1623
    %v1625 = vpop.f32.mrb[0].mxu0
    %v1626 = vadd.f32 %v1166, %v1625
    %v1627 = vpop.f32.mrb[0].mxu0
    %v1628 = vadd.f32 %v1162, %v1627
    %v1629 = vpop.f32.mrb[0].mxu0
    %v1630 = vadd.f32 %v1166, %v1629
    %1631 = vdwg.mxu0
    %1632 = vmatprep.subr.bf16.mxu0 %v1382
    %1633 = vmatpush1.bf16.msra.mxu0 %v1381
    %1634 = vmatprep.subr.bf16.mxu0 %v1390
    %1635 = vmatpush1.bf16.msra.mxu0 %v1389
    %1636 = vmatprep.subr.bf16.mxu0 %v1398
    %1637 = vmatpush1.bf16.msra.mxu0 %v1397
    %1638 = vmatprep.subr.bf16.mxu0 %v1406
    %1639 = vmatpush1.bf16.msra.mxu0 %v1405
    %1640 = vmatprep.subr.bf16.mxu0 %v1414
    %1641 = vmatpush1.bf16.msra.mxu0 %v1413
    %1642 = vmatprep.subr.bf16.mxu0 %v1422
    %1643 = vmatpush1.bf16.msra.mxu0 %v1421
    %1644 = vmatprep.subr.bf16.mxu0 %v1430
    %1645 = vmatpush1.bf16.msra.mxu0 %v1429
    %1646 = vmatprep.subr.bf16.mxu0 %v1438
    %1647 = vmatpush1.bf16.msra.mxu0 %v1437
    %1648 = vmatprep.subr.bf16.mxu0 0
    %1649 = vmatpush1.bf16.msra.mxu0 0
    %1650 = vmatprep.subr.bf16.mxu0 0
    %1651 = vmatpush1.bf16.msra.mxu0 0
    %1652 = vmatprep.subr.bf16.mxu0 0
    %1653 = vmatpush1.bf16.msra.mxu0 0
    %1654 = vmatprep.subr.bf16.mxu0 0
    %1655 = vmatpush1.bf16.msra.mxu0 0
    %1656 = vmatprep.subr.bf16.mxu0 0
    %1657 = vmatpush1.bf16.msra.mxu0 0
    %1658 = vmatprep.subr.bf16.mxu0 0
    %1659 = vmatpush1.bf16.msra.mxu0 0
    %1660 = vmatprep.subr.bf16.mxu0 0
    %1661 = vmatpush1.bf16.msra.mxu0 0
    %1662 = vmatprep.subr.bf16.mxu0 0
    %1663 = vmatpush1.bf16.msra.mxu0 0
    %1664 = vmatprep.mubr.bf16.mxu0 0
    %1665 = vmatmul.mubr.bf16.gmra.mrb[0].mxu0 %v1076
    %v1666 = vpop.f32.mrb[0].mxu0
    %v1667 = vadd.f32 %v1170, %v1666
    %v1668 = vpop.f32.mrb[0].mxu0
    %v1669 = vadd.f32 %v1174, %v1668
    %v1670 = vpop.f32.mrb[0].mxu0
    %v1671 = vadd.f32 %v1170, %v1670
    %v1672 = vpop.f32.mrb[0].mxu0
    %v1673 = vadd.f32 %v1174, %v1672
    %1674 = vdwg.mxu0
    %v1675 = vpack.c.bf16 %v1542, %v1538
    %v1676 = vpack.c.bf16 %v1544, %v1540
    %v1677 = vpack.c.bf16 %v1585, %v1581
    %v1678 = vpack.c.bf16 %v1587, %v1583
    %v1679 = vpack.c.bf16 %v1628, %v1624
    %v1680 = vpack.c.bf16 %v1630, %v1626
    %v1681 = vpack.c.bf16 %v1671, %v1667
    %v1682 = vpack.c.bf16 %v1673, %v1669
    %v1691 = vunpack.c.l.b16 %v1675
    %v1692 = vunpack.c.l.b16 %v1676
    %v1693 = vunpack.c.l.b16 %v1677
    %v1694 = vunpack.c.l.b16 %v1678
    %v1695 = vunpack.c.l.b16 %v1679
    %v1696 = vunpack.c.l.b16 %v1680
    %v1697 = vunpack.c.l.b16 %v1681
    %v1698 = vunpack.c.l.b16 %v1682
    %v1699 = vunpack.c.h.b16 %v1675
    %v1700 = vunpack.c.h.b16 %v1676
    %v1701 = vunpack.c.h.b16 %v1677
    %v1702 = vunpack.c.h.b16 %v1678
    %v1703 = vunpack.c.h.b16 %v1679
    %v1704 = vunpack.c.h.b16 %v1680
    %v1705 = vunpack.c.h.b16 %v1681
    %v1706 = vunpack.c.h.b16 %v1682
    %v1707 = vpack.c.b16 %v1692, %v1691
    %v1708 = vpack.c.b16 %v1694, %v1693
    %v1709 = vpack.c.b16 %v1696, %v1695
    %v1710 = vpack.c.b16 %v1698, %v1697
    %v1711 = vpack.c.b16 %v1700, %v1699
    %v1712 = vpack.c.b16 %v1702, %v1701
    %v1713 = vpack.c.b16 %v1704, %v1703
    %v1714 = vpack.c.b16 %v1706, %v1705
    %1723 = vst [vmem:[#allocation13] sm:$0xff] %v1707
    %1724 = vst [vmem:[#allocation13 + $0x8] sm:$0xff] %v1708
    %1725 = vst [vmem:[#allocation13 + $0x10] sm:$0xff] %v1709
    %1726 = vst [vmem:[#allocation13 + $0x18] sm:$0xff] %v1710
    %1727 = vst [vmem:[#allocation13 + $0x20] sm:$0xff] %v1711
    %1728 = vst [vmem:[#allocation13 + $0x28] sm:$0xff] %v1712
    %1729 = vst [vmem:[#allocation13 + $0x30] sm:$0xff] %v1713
    %1730 = vst [vmem:[#allocation13 + $0x38] sm:$0xff] %v1714
    // Predicated region
    $region66: #{tpu_custom_call.1} parent=1 // pred_check
      _
    $region67: #{tpu_custom_call.1} parent=1 // pred_check_branch
      %1732 = sbr.rel (0) target = $region69
    $region68: #{tpu_custom_call.1} parent=1 // pred_region
      %s1734 = ssub.s32 1024, 1024
      %1735 = vsyncadd [#allocation4], %s1734
      %s1736 = sshll.u32 [#allocation13], 4
      %s1737 = int_to_ptr.vmem [resolvable:$true] %s1736
      %1742 = dma.vmem_to_hbm [thread:$0]  %s1737, 1024, %s10, [#allocation4], 512, 512, 32
    $region69: #{tpu_custom_call.1} parent=1 // pred_fallthru
      _
    // Predicated region
    $region70: #{tpu_custom_call.1} parent=1 // pred_check
      _
    $region71: #{tpu_custom_call.1} parent=1 // pred_check_branch
      %1744 = sbr.rel (0) target = $region73
    $region72: #{tpu_custom_call.1} parent=1 // pred_region
      %s1746 = ssub.s32 256, 256
      %1747 = vsyncadd [#allocation15], %s1746
      %s1748 = sshll.u32 [#allocation14], 4
      %s1749 = int_to_ptr.vmem [resolvable:$true] %s1748
      %1754 = dma.vmem_to_hbm [thread:$0]  %s1749, 256, %s11, [#allocation15], 128, 128, 8
    $region73: #{tpu_custom_call.1} parent=1 // pred_fallthru
      _
    // Predicated region
    $region74: #{tpu_custom_call.1} parent=1 // pred_check
      _
    $region75: #{tpu_custom_call.1} parent=1 // pred_check_branch
      %1756 = sbr.rel (0) target = $region77
    $region76: #{tpu_custom_call.1} parent=1 // pred_region
      %1757 = dma.done [#allocation4], 1024
    $region77: #{tpu_custom_call.1} parent=1 // pred_fallthru
      _
    // Predicated region
    $region78: #{tpu_custom_call.1} parent=1 // pred_check
      _
    $region79: #{tpu_custom_call.1} parent=1 // pred_check_branch
      %1759 = sbr.rel (0) target = $region81
    $region80: #{tpu_custom_call.1} parent=1 // pred_region
      %1760 = dma.done [#allocation15], 256
    $region81: #{tpu_custom_call.1} parent=1 // pred_fallthru
      _
    %1761 = vsyncpa [#allocation3], 1
    %1762 = vsyncpa [#allocation6], 1
    %1763 = vsyncpa [#allocation9], 1
    %1764 = vsyncpa [#allocation12], 1
    %1765 = vsyncpa [#allocation4], 1
    %1766 = vsyncpa [#allocation15], 1

// kernel: tpu_custom_call.1
$region0: #{tpu_custom_call.1}
  #allocation0 [shape = 'u32[]', space=smem, size = 0x4, offset = 0x4, fixed_abs, tag = 'smem constant byte address 0x4 - core index']
  #allocation1 [shape = 'u32[144,128]{1,0:T(1,128)}', space=vmem, size = 0x12000, scoped, tag = 'internal scratch']
  %s0 = inlined_call_operand.hbm [shape: f32[16,1024], index: 0, kind: input, shape index: {}]
  %s1 = inlined_call_operand.hbm [shape: f32[16,128], index: 1, kind: input, shape index: {}]
  %s2 = inlined_call_operand.hbm [shape: bf16[1024,128], index: 2, kind: input, shape index: {}]
  %s3 = inlined_call_operand.vmem [shape: f32[1,128], index: 3, kind: input, shape index: {}]
  %s4 = inlined_call_operand.hbm [shape: bf16[128,128], index: 4, kind: input, shape index: {}]
  %s5 = inlined_call_operand.vmem [shape: f32[1,128], index: 5, kind: input, shape index: {}]
  %s6 = inlined_call_operand.hbm [shape: bf16[128,128], index: 6, kind: input, shape index: {}]
  %s7 = inlined_call_operand.vmem [shape: f32[1,128], index: 7, kind: input, shape index: {}]
  %s8 = inlined_call_operand.hbm [shape: bf16[128,1024], index: 8, kind: input, shape index: {}]
  %s9 = inlined_call_operand.vmem [shape: f32[1,1024], index: 9, kind: input, shape index: {}]
  %s10 = inlined_call_operand.hbm [shape: bf16[16,1024], index: 10, kind: output, shape index: {0}]
  %s11 = inlined_call_operand.hbm [shape: f32[16,128], index: 11, kind: output, shape index: {1}]
  %12 = xla_tuple %s10, %s11
  %s13 = sld [smem:[#allocation0]]
  $region82: #{tpu_custom_call.1} parent=0
    _
  %s15 = ssub.s32 1, %s13
  %s16 = scalar_select 0, %s15, %s13
  $region1: #{tpu_custom_call.1} parent=0
    #allocation2 [shape = 'u8[65536]{0}', space=vmem, size = 0x10000, scoped, tag = 'input window, operand 0, single buffered']
    #allocation3 [shape = 's32[1]{0}', space=sflag, size = 0x4, scoped, tag = 'scoped memory for tpu_custom_call.1']
    #allocation4 [shape = 's32[1]{0}', space=sflag, size = 0x4, scoped, tag = 'scoped memory for tpu_custom_call.1']
    #allocation5 [shape = 'u8[8192]{0}', space=vmem, size = 0x2000, scoped, tag = 'input window, operand 1, single buffered']
    #allocation6 [shape = 's32[1]{0}', space=sflag, size = 0x4, scoped, tag = 'scoped memory for tpu_custom_call.1']
    #allocation7 [shape = 'u8[262144]{0}', space=vmem, size = 0x40000, scoped, tag = 'input window, operand 2, single buffered']
    #allocation8 [shape = 'u8[32768]{0}', space=vmem, size = 0x8000, scoped, tag = 'input window, operand 4, single buffered']
    #allocation9 [shape = 's32[1]{0}', space=sflag, size = 0x4, scoped, tag = 'scoped memory for tpu_custom_call.1']
    #allocation10 [shape = 'u8[32768]{0}', space=vmem, size = 0x8000, scoped, tag = 'input window, operand 6, single buffered']
    #allocation11 [shape = 'u8[262144]{0}', space=vmem, size = 0x40000, scoped, tag = 'input window, operand 8, single buffered']
    #allocation12 [shape = 's32[1]{0}', space=sflag, size = 0x4, scoped, tag = 'scoped memory for tpu_custom_call.1']
    #allocation13 [shape = 'u8[32768]{0}', space=vmem, size = 0x8000, scoped, tag = 'output window, operand 0, single buffered']
    #allocation14 [shape = 'u8[8192]{0}', space=vmem, size = 0x2000, scoped, tag = 'output window, operand 1, single buffered']
    #allocation15 [shape = 's32[1]{0}', space=sflag, size = 0x4, scoped, tag = 'scoped memory for tpu_custom_call.1']
    %17 = vsyncpa [#allocation3], 0
    %18 = vsyncpa [#allocation6], 0
    %19 = vsyncpa [#allocation9], 0
    %20 = vsyncpa [#allocation12], 0
    %21 = vsyncpa [#allocation4], 0
    %22 = vsyncpa [#allocation15], 0
    // Predicated region
    $region2: #{tpu_custom_call.1} parent=1 // pred_check
      _
    $region3: #{tpu_custom_call.1} parent=1 // pred_check_branch
      %24 = sbr.rel (0) target = $region5
    $region4: #{tpu_custom_call.1} parent=1 // pred_region
      %s26 = ssub.s32 2048, 2048
      %27 = vsyncadd [#allocation3], %s26
      %s28 = sshll.u32 [#allocation2], 4
      %s29 = int_to_ptr.vmem [resolvable:$true] %s28
      %34 = dma.hbm_to_vmem [thread:$0]  %s0, 2048, %s29, [#allocation3], 1024, 1024, 64
    $region5: #{tpu_custom_call.1} parent=1 // pred_fallthru
      _
    // Predicated region
    $region6: #{tpu_custom_call.1} parent=1 // pred_check
      _
    $region7: #{tpu_custom_call.1} parent=1 // pred_check_branch
      %36 = sbr.rel (0) target = $region9
    $region8: #{tpu_custom_call.1} parent=1 // pred_region
      %s38 = ssub.s32 256, 256
      %39 = vsyncadd [#allocation6], %s38
      %s40 = sshll.u32 [#allocation5], 4
      %s41 = int_to_ptr.vmem [resolvable:$true] %s40
      %46 = dma.hbm_to_vmem [thread:$0]  %s1, 256, %s41, [#allocation6], 128, 128, 8
    $region9: #{tpu_custom_call.1} parent=1 // pred_fallthru
      _
    // Predicated region
    $region10: #{tpu_custom_call.1} parent=1 // pred_check
      _
    $region11: #{tpu_custom_call.1} parent=1 // pred_check_branch
      %48 = sbr.rel (0) target = $region13
    $region12: #{tpu_custom_call.1} parent=1 // pred_region
      %s50 = ssub.s32 8192, 8192
      %51 = vsyncadd [#allocation6], %s50
      %s52 = sshll.u32 [#allocation7], 4
      %s53 = int_to_ptr.vmem [resolvable:$true] %s52
      %58 = dma.hbm_to_vmem [thread:$0]  %s2, 8192, %s53, [#allocation6], 64, 64, 4
    $region13: #{tpu_custom_call.1} parent=1 // pred_fallthru
      _
    // Predicated region
    $region14: #{tpu_custom_call.1} parent=1 // pred_check
      _
    $region15: #{tpu_custom_call.1} parent=1 // pred_check_branch
      %60 = sbr.rel (0) target = $region17
    $region16: #{tpu_custom_call.1} parent=1 // pred_region
      _
    $region17: #{tpu_custom_call.1} parent=1 // pred_fallthru
      _
    // Predicated region
    $region18: #{tpu_custom_call.1} parent=1 // pred_check
      _
    $region19: #{tpu_custom_call.1} parent=1 // pred_check_branch
      %62 = sbr.rel (0) target = $region21
    $region20: #{tpu_custom_call.1} parent=1 // pred_region
      %s64 = ssub.s32 1024, 1024
      %65 = vsyncadd [#allocation9], %s64
      %s66 = sshll.u32 [#allocation8], 4
      %s67 = int_to_ptr.vmem [resolvable:$true] %s66
      %72 = dma.hbm_to_vmem [thread:$0]  %s4, 1024, %s67, [#allocation9], 64, 64, 4
    $region21: #{tpu_custom_call.1} parent=1 // pred_fallthru
      _
    // Predicated region
    $region22: #{tpu_custom_call.1} parent=1 // pred_check
      _
    $region23: #{tpu_custom_call.1} parent=1 // pred_check_branch
      %74 = sbr.rel (0) target = $region25
    $region24: #{tpu_custom_call.1} parent=1 // pred_region
      _
    $region25: #{tpu_custom_call.1} parent=1 // pred_fallthru
      _
    // Predicated region
    $region26: #{tpu_custom_call.1} parent=1 // pred_check
      _
    $region27: #{tpu_custom_call.1} parent=1 // pred_check_branch
      %76 = sbr.rel (0) target = $region29
    $region28: #{tpu_custom_call.1} parent=1 // pred_region
      %s78 = ssub.s32 1024, 1024
      %79 = vsyncadd [#allocation9], %s78
      %s80 = sshll.u32 [#allocation10], 4
      %s81 = int_to_ptr.vmem [resolvable:$true] %s80
      %86 = dma.hbm_to_vmem [thread:$0]  %s6, 1024, %s81, [#allocation9], 64, 64, 4
    $region29: #{tpu_custom_call.1} parent=1 // pred_fallthru
      _
    // Predicated region
    $region30: #{tpu_custom_call.1} parent=1 // pred_check
      _
    $region31: #{tpu_custom_call.1} parent=1 // pred_check_branch
      %88 = sbr.rel (0) target = $region33
    $region32: #{tpu_custom_call.1} parent=1 // pred_region
      _
    $region33: #{tpu_custom_call.1} parent=1 // pred_fallthru
      _
    // Predicated region
    $region34: #{tpu_custom_call.1} parent=1 // pred_check
      _
    $region35: #{tpu_custom_call.1} parent=1 // pred_check_branch
      %90 = sbr.rel (0) target = $region37
    $region36: #{tpu_custom_call.1} parent=1 // pred_region
      %s92 = ssub.s32 8192, 8192
      %93 = vsyncadd [#allocation12], %s92
      %s94 = sshll.u32 [#allocation11], 4
      %s95 = int_to_ptr.vmem [resolvable:$true] %s94
      %100 = dma.hbm_to_vmem [thread:$0]  %s8, 8192, %s95, [#allocation12], 512, 512, 32
    $region37: #{tpu_custom_call.1} parent=1 // pred_fallthru
      _
    // Predicated region
    $region38: #{tpu_custom_call.1} parent=1 // pred_check
      _
    $region39: #{tpu_custom_call.1} parent=1 // pred_check_branch
      %102 = sbr.rel (0) target = $region41
    $region40: #{tpu_custom_call.1} parent=1 // pred_region
      _
    $region41: #{tpu_custom_call.1} parent=1 // pred_fallthru
      _
    // Predicated region
    $region42: #{tpu_custom_call.1} parent=1 // pred_check
      _
    $region43: #{tpu_custom_call.1} parent=1 // pred_check_branch
      %104 = sbr.rel (0) target = $region45
    $region44: #{tpu_custom_call.1} parent=1 // pred_region
      %105 = dma.done [#allocation3], 2048
    $region45: #{tpu_custom_call.1} parent=1 // pred_fallthru
      _
    // Predicated region
    $region46: #{tpu_custom_call.1} parent=1 // pred_check
      _
    $region47: #{tpu_custom_call.1} parent=1 // pred_check_branch
      %107 = sbr.rel (0) target = $region49
    $region48: #{tpu_custom_call.1} parent=1 // pred_region
      %108 = dma.done [#allocation6], 256
    $region49: #{tpu_custom_call.1} parent=1 // pred_fallthru
      _
    // Predicated region
    $region50: #{tpu_custom_call.1} parent=1 // pred_check
      _
    $region51: #{tpu_custom_call.1} parent=1 // pred_check_branch
      %110 = sbr.rel (0) target = $region53
    $region52: #{tpu_custom_call.1} parent=1 // pred_region
      %111 = dma.done [#allocation6], 8192
    $region53: #{tpu_custom_call.1} parent=1 // pred_fallthru
      _
    // Predicated region
    $region54: #{tpu_custom_call.1} parent=1 // pred_check
      _
    $region55: #{tpu_custom_call.1} parent=1 // pred_check_branch
      %113 = sbr.rel (0) target = $region57
    $region56: #{tpu_custom_call.1} parent=1 // pred_region
      %114 = dma.done [#allocation9], 1024
    $region57: #{tpu_custom_call.1} parent=1 // pred_fallthru
      _
    // Predicated region
    $region58: #{tpu_custom_call.1} parent=1 // pred_check
      _
    $region59: #{tpu_custom_call.1} parent=1 // pred_check_branch
      %116 = sbr.rel (0) target = $region61
    $region60: #{tpu_custom_call.1} parent=1 // pred_region
      %117 = dma.done [#allocation9], 1024
    $region61: #{tpu_custom_call.1} parent=1 // pred_fallthru
      _
    // Predicated region
    $region62: #{tpu_custom_call.1} parent=1 // pred_check
      _
    $region63: #{tpu_custom_call.1} parent=1 // pred_check_branch
      %119 = sbr.rel (0) target = $region65
    $region64: #{tpu_custom_call.1} parent=1 // pred_region
      %120 = dma.done [#allocation12], 8192
    $region65: #{tpu_custom_call.1} parent=1 // pred_fallthru
      _
    %v122 = vld [vmem:[#allocation2] sm:$0xff]
    %v123 = vld [vmem:[#allocation2 + $0x8] sm:$0xff]
    %v124 = vld [vmem:[#allocation2 + $0x10] sm:$0xff]
    %v125 = vld [vmem:[#allocation2 + $0x18] sm:$0xff]
    %v126 = vld [vmem:[#allocation2 + $0x20] sm:$0xff]
    %v127 = vld [vmem:[#allocation2 + $0x28] sm:$0xff]
    %v128 = vld [vmem:[#allocation2 + $0x30] sm:$0xff]
    %v129 = vld [vmem:[#allocation2 + $0x38] sm:$0xff]
    %v130 = vld [vmem:[#allocation2 + $0x40] sm:$0xff]
    %v131 = vld [vmem:[#allocation2 + $0x48] sm:$0xff]
    %v132 = vld [vmem:[#allocation2 + $0x50] sm:$0xff]
    %v133 = vld [vmem:[#allocation2 + $0x58] sm:$0xff]
    %v134 = vld [vmem:[#allocation2 + $0x60] sm:$0xff]
    %v135 = vld [vmem:[#allocation2 + $0x68] sm:$0xff]
    %v136 = vld [vmem:[#allocation2 + $0x70] sm:$0xff]
    %v137 = vld [vmem:[#allocation2 + $0x78] sm:$0xff]
    %v138 = vpack.c.bf16 %v130, %v122
    %v139 = vpack.c.bf16 %v131, %v123
    %v140 = vpack.c.bf16 %v132, %v124
    %v141 = vpack.c.bf16 %v133, %v125
    %v142 = vpack.c.bf16 %v134, %v126
    %v143 = vpack.c.bf16 %v135, %v127
    %v144 = vpack.c.bf16 %v136, %v128
    %v145 = vpack.c.bf16 %v137, %v129
    %v146 = vld [vmem:[#allocation7] sm:$0xf]
    %v147 = vld [vmem:[#allocation7 + $0x4] sm:$0xf]
    %v148 = vld [vmem:[#allocation7 + $0x8] sm:$0xf]
    %v149 = vld [vmem:[#allocation7 + $0xc] sm:$0xf]
    %v150 = vld [vmem:[#allocation7 + $0x10] sm:$0xf]
    %v151 = vld [vmem:[#allocation7 + $0x14] sm:$0xf]
    %v152 = vld [vmem:[#allocation7 + $0x18] sm:$0xf]
    %v153 = vld [vmem:[#allocation7 + $0x1c] sm:$0xf]
    %v154 = vld [vmem:[#allocation7 + $0x20] sm:$0xf]
    %v155 = vld [vmem:[#allocation7 + $0x24] sm:$0xf]
    %v156 = vld [vmem:[#allocation7 + $0x28] sm:$0xf]
    %v157 = vld [vmem:[#allocation7 + $0x2c] sm:$0xf]
    %v158 = vld [vmem:[#allocation7 + $0x30] sm:$0xf]
    %v159 = vld [vmem:[#allocation7 + $0x34] sm:$0xf]
    %v160 = vld [vmem:[#allocation7 + $0x38] sm:$0xf]
    %v161 = vld [vmem:[#allocation7 + $0x3c] sm:$0xf]
    %v162 = vld [vmem:[#allocation7 + $0x40] sm:$0xf]
    %v163 = vld [vmem:[#allocation7 + $0x44] sm:$0xf]
    %v164 = vld [vmem:[#allocation7 + $0x48] sm:$0xf]
    %v165 = vld [vmem:[#allocation7 + $0x4c] sm:$0xf]
    %v166 = vld [vmem:[#allocation7 + $0x50] sm:$0xf]
    %v167 = vld [vmem:[#allocation7 + $0x54] sm:$0xf]
    %v168 = vld [vmem:[#allocation7 + $0x58] sm:$0xf]
    %v169 = vld [vmem:[#allocation7 + $0x5c] sm:$0xf]
    %v170 = vld [vmem:[#allocation7 + $0x60] sm:$0xf]
    %v171 = vld [vmem:[#allocation7 + $0x64] sm:$0xf]
    %v172 = vld [vmem:[#allocation7 + $0x68] sm:$0xf]
    %v173 = vld [vmem:[#allocation7 + $0x6c] sm:$0xf]
    %v174 = vld [vmem:[#allocation7 + $0x70] sm:$0xf]
    %v175 = vld [vmem:[#allocation7 + $0x74] sm:$0xf]
    %v176 = vld [vmem:[#allocation7 + $0x78] sm:$0xf]
    %v177 = vld [vmem:[#allocation7 + $0x7c] sm:$0xf]
    %v178 = vld [vmem:[#allocation7 + $0x80] sm:$0xf]
    %v179 = vld [vmem:[#allocation7 + $0x84] sm:$0xf]
    %v180 = vld [vmem:[#allocation7 + $0x88] sm:$0xf]
    %v181 = vld [vmem:[#allocation7 + $0x8c] sm:$0xf]
    %v182 = vld [vmem:[#allocation7 + $0x90] sm:$0xf]
    %v183 = vld [vmem:[#allocation7 + $0x94] sm:$0xf]
    %v184 = vld [vmem:[#allocation7 + $0x98] sm:$0xf]
    %v185 = vld [vmem:[#allocation7 + $0x9c] sm:$0xf]
    %v186 = vld [vmem:[#allocation7 + $0xa0] sm:$0xf]
    %v187 = vld [vmem:[#allocation7 + $0xa4] sm:$0xf]
    %v188 = vld [vmem:[#allocation7 + $0xa8] sm:$0xf]
    %v189 = vld [vmem:[#allocation7 + $0xac] sm:$0xf]
    %v190 = vld [vmem:[#allocation7 + $0xb0] sm:$0xf]
    %v191 = vld [vmem:[#allocation7 + $0xb4] sm:$0xf]
    %v192 = vld [vmem:[#allocation7 + $0xb8] sm:$0xf]
    %v193 = vld [vmem:[#allocation7 + $0xbc] sm:$0xf]
    %v194 = vld [vmem:[#allocation7 + $0xc0] sm:$0xf]
    %v195 = vld [vmem:[#allocation7 + $0xc4] sm:$0xf]
    %v196 = vld [vmem:[#allocation7 + $0xc8] sm:$0xf]
    %v197 = vld [vmem:[#allocation7 + $0xcc] sm:$0xf]
    %v198 = vld [vmem:[#allocation7 + $0xd0] sm:$0xf]
    %v199 = vld [vmem:[#allocation7 + $0xd4] sm:$0xf]
    %v200 = vld [vmem:[#allocation7 + $0xd8] sm:$0xf]
    %v201 = vld [vmem:[#allocation7 + $0xdc] sm:$0xf]
    %v202 = vld [vmem:[#allocation7 + $0xe0] sm:$0xf]
    %v203 = vld [vmem:[#allocation7 + $0xe4] sm:$0xf]
    %v204 = vld [vmem:[#allocation7 + $0xe8] sm:$0xf]
    %v205 = vld [vmem:[#allocation7 + $0xec] sm:$0xf]
    %v206 = vld [vmem:[#allocation7 + $0xf0] sm:$0xf]
    %v207 = vld [vmem:[#allocation7 + $0xf4] sm:$0xf]
    %v208 = vld [vmem:[#allocation7 + $0xf8] sm:$0xf]
    %v209 = vld [vmem:[#allocation7 + $0xfc] sm:$0xf]
    %v210 = vld [vmem:[#allocation7 + $0x100] sm:$0xf]
    %v211 = vld [vmem:[#allocation7 + $0x104] sm:$0xf]
    %v212 = vld [vmem:[#allocation7 + $0x108] sm:$0xf]
    %v213 = vld [vmem:[#allocation7 + $0x10c] sm:$0xf]
    %v214 = vld [vmem:[#allocation7 + $0x110] sm:$0xf]
    %v215 = vld [vmem:[#allocation7 + $0x114] sm:$0xf]
    %v216 = vld [vmem:[#allocation7 + $0x118] sm:$0xf]
    %v217 = vld [vmem:[#allocation7 + $0x11c] sm:$0xf]
    %v218 = vld [vmem:[#allocation7 + $0x120] sm:$0xf]
    %v219 = vld [vmem:[#allocation7 + $0x124] sm:$0xf]
    %v220 = vld [vmem:[#allocation7 + $0x128] sm:$0xf]
    %v221 = vld [vmem:[#allocation7 + $0x12c] sm:$0xf]
    %v222 = vld [vmem:[#allocation7 + $0x130] sm:$0xf]
    %v223 = vld [vmem:[#allocation7 + $0x134] sm:$0xf]
    %v224 = vld [vmem:[#allocation7 + $0x138] sm:$0xf]
    %v225 = vld [vmem:[#allocation7 + $0x13c] sm:$0xf]
    %v226 = vld [vmem:[#allocation7 + $0x140] sm:$0xf]
    %v227 = vld [vmem:[#allocation7 + $0x144] sm:$0xf]
    %v228 = vld [vmem:[#allocation7 + $0x148] sm:$0xf]
    %v229 = vld [vmem:[#allocation7 + $0x14c] sm:$0xf]
    %v230 = vld [vmem:[#allocation7 + $0x150] sm:$0xf]
    %v231 = vld [vmem:[#allocation7 + $0x154] sm:$0xf]
    %v232 = vld [vmem:[#allocation7 + $0x158] sm:$0xf]
    %v233 = vld [vmem:[#allocation7 + $0x15c] sm:$0xf]
    %v234 = vld [vmem:[#allocation7 + $0x160] sm:$0xf]
    %v235 = vld [vmem:[#allocation7 + $0x164] sm:$0xf]
    %v236 = vld [vmem:[#allocation7 + $0x168] sm:$0xf]
    %v237 = vld [vmem:[#allocation7 + $0x16c] sm:$0xf]
    %v238 = vld [vmem:[#allocation7 + $0x170] sm:$0xf]
    %v239 = vld [vmem:[#allocation7 + $0x174] sm:$0xf]
    %v240 = vld [vmem:[#allocation7 + $0x178] sm:$0xf]
    %v241 = vld [vmem:[#allocation7 + $0x17c] sm:$0xf]
    %v242 = vld [vmem:[#allocation7 + $0x180] sm:$0xf]
    %v243 = vld [vmem:[#allocation7 + $0x184] sm:$0xf]
    %v244 = vld [vmem:[#allocation7 + $0x188] sm:$0xf]
    %v245 = vld [vmem:[#allocation7 + $0x18c] sm:$0xf]
    %v246 = vld [vmem:[#allocation7 + $0x190] sm:$0xf]
    %v247 = vld [vmem:[#allocation7 + $0x194] sm:$0xf]
    %v248 = vld [vmem:[#allocation7 + $0x198] sm:$0xf]
    %v249 = vld [vmem:[#allocation7 + $0x19c] sm:$0xf]
    %v250 = vld [vmem:[#allocation7 + $0x1a0] sm:$0xf]
    %v251 = vld [vmem:[#allocation7 + $0x1a4] sm:$0xf]
    %v252 = vld [vmem:[#allocation7 + $0x1a8] sm:$0xf]
    %v253 = vld [vmem:[#allocation7 + $0x1ac] sm:$0xf]
    %v254 = vld [vmem:[#allocation7 + $0x1b0] sm:$0xf]
    %v255 = vld [vmem:[#allocation7 + $0x1b4] sm:$0xf]
    %v256 = vld [vmem:[#allocation7 + $0x1b8] sm:$0xf]
    %v257 = vld [vmem:[#allocation7 + $0x1bc] sm:$0xf]
    %v258 = vld [vmem:[#allocation7 + $0x1c0] sm:$0xf]
    %v259 = vld [vmem:[#allocation7 + $0x1c4] sm:$0xf]
    %v260 = vld [vmem:[#allocation7 + $0x1c8] sm:$0xf]
    %v261 = vld [vmem:[#allocation7 + $0x1cc] sm:$0xf]
    %v262 = vld [vmem:[#allocation7 + $0x1d0] sm:$0xf]
    %v263 = vld [vmem:[#allocation7 + $0x1d4] sm:$0xf]
    %v264 = vld [vmem:[#allocation7 + $0x1d8] sm:$0xf]
    %v265 = vld [vmem:[#allocation7 + $0x1dc] sm:$0xf]
    %v266 = vld [vmem:[#allocation7 + $0x1e0] sm:$0xf]
    %v267 = vld [vmem:[#allocation7 + $0x1e4] sm:$0xf]
    %v268 = vld [vmem:[#allocation7 + $0x1e8] sm:$0xf]
    %v269 = vld [vmem:[#allocation7 + $0x1ec] sm:$0xf]
    %v270 = vld [vmem:[#allocation7 + $0x1f0] sm:$0xf]
    %v271 = vld [vmem:[#allocation7 + $0x1f4] sm:$0xf]
    %v272 = vld [vmem:[#allocation7 + $0x1f8] sm:$0xf]
    %v273 = vld [vmem:[#allocation7 + $0x1fc] sm:$0xf]
    %v274 = vld [vmem:[%s3] sm:$0x1]
    %v276 = vlaneseq
    %v277 = vshrl.u32 %v276, 7
    %v278 = vsub.s32 0, %v277
    %v279 = vrot.slane %v274, %v278
    %v409 = vunpack.c.l.b16 %v146
    %v410 = vunpack.c.l.b16 %v147
    %v411 = vunpack.c.l.b16 %v148
    %v412 = vunpack.c.l.b16 %v149
    %v413 = vunpack.c.l.b16 %v150
    %v414 = vunpack.c.l.b16 %v151
    %v415 = vunpack.c.l.b16 %v152
    %v416 = vunpack.c.l.b16 %v153
    %v417 = vunpack.c.l.b16 %v154
    %v418 = vunpack.c.l.b16 %v155
    %v419 = vunpack.c.l.b16 %v156
    %v420 = vunpack.c.l.b16 %v157
    %v421 = vunpack.c.l.b16 %v158
    %v422 = vunpack.c.l.b16 %v159
    %v423 = vunpack.c.l.b16 %v160
    %v424 = vunpack.c.l.b16 %v161
    %v425 = vunpack.c.l.b16 %v162
    %v426 = vunpack.c.l.b16 %v163
    %v427 = vunpack.c.l.b16 %v164
    %v428 = vunpack.c.l.b16 %v165
    %v429 = vunpack.c.l.b16 %v166
    %v430 = vunpack.c.l.b16 %v167
    %v431 = vunpack.c.l.b16 %v168
    %v432 = vunpack.c.l.b16 %v169
    %v433 = vunpack.c.l.b16 %v170
    %v434 = vunpack.c.l.b16 %v171
    %v435 = vunpack.c.l.b16 %v172
    %v436 = vunpack.c.l.b16 %v173
    %v437 = vunpack.c.l.b16 %v174
    %v438 = vunpack.c.l.b16 %v175
    %v439 = vunpack.c.l.b16 %v176
    %v440 = vunpack.c.l.b16 %v177
    %v441 = vunpack.c.l.b16 %v178
    %v442 = vunpack.c.l.b16 %v179
    %v443 = vunpack.c.l.b16 %v180
    %v444 = vunpack.c.l.b16 %v181
    %v445 = vunpack.c.l.b16 %v182
    %v446 = vunpack.c.l.b16 %v183
    %v447 = vunpack.c.l.b16 %v184
    %v448 = vunpack.c.l.b16 %v185
    %v449 = vunpack.c.l.b16 %v186
    %v450 = vunpack.c.l.b16 %v187
    %v451 = vunpack.c.l.b16 %v188
    %v452 = vunpack.c.l.b16 %v189
    %v453 = vunpack.c.l.b16 %v190
    %v454 = vunpack.c.l.b16 %v191
    %v455 = vunpack.c.l.b16 %v192
    %v456 = vunpack.c.l.b16 %v193
    %v457 = vunpack.c.l.b16 %v194
    %v458 = vunpack.c.l.b16 %v195
    %v459 = vunpack.c.l.b16 %v196
    %v460 = vunpack.c.l.b16 %v197
    %v461 = vunpack.c.l.b16 %v198
    %v462 = vunpack.c.l.b16 %v199
    %v463 = vunpack.c.l.b16 %v200
    %v464 = vunpack.c.l.b16 %v201
    %v465 = vunpack.c.l.b16 %v202
    %v466 = vunpack.c.l.b16 %v203
    %v467 = vunpack.c.l.b16 %v204
    %v468 = vunpack.c.l.b16 %v205
    %v469 = vunpack.c.l.b16 %v206
    %v470 = vunpack.c.l.b16 %v207
    %v471 = vunpack.c.l.b16 %v208
    %v472 = vunpack.c.l.b16 %v209
    %v473 = vunpack.c.l.b16 %v210
    %v474 = vunpack.c.l.b16 %v211
    %v475 = vunpack.c.l.b16 %v212
    %v476 = vunpack.c.l.b16 %v213
    %v477 = vunpack.c.l.b16 %v214
    %v478 = vunpack.c.l.b16 %v215
    %v479 = vunpack.c.l.b16 %v216
    %v480 = vunpack.c.l.b16 %v217
    %v481 = vunpack.c.l.b16 %v218
    %v482 = vunpack.c.l.b16 %v219
    %v483 = vunpack.c.l.b16 %v220
    %v484 = vunpack.c.l.b16 %v221
    %v485 = vunpack.c.l.b16 %v222
    %v486 = vunpack.c.l.b16 %v223
    %v487 = vunpack.c.l.b16 %v224
    %v488 = vunpack.c.l.b16 %v225
    %v489 = vunpack.c.l.b16 %v226
    %v490 = vunpack.c.l.b16 %v227
    %v491 = vunpack.c.l.b16 %v228
    %v492 = vunpack.c.l.b16 %v229
    %v493 = vunpack.c.l.b16 %v230
    %v494 = vunpack.c.l.b16 %v231
    %v495 = vunpack.c.l.b16 %v232
    %v496 = vunpack.c.l.b16 %v233
    %v497 = vunpack.c.l.b16 %v234
    %v498 = vunpack.c.l.b16 %v235
    %v499 = vunpack.c.l.b16 %v236
    %v500 = vunpack.c.l.b16 %v237
    %v501 = vunpack.c.l.b16 %v238
    %v502 = vunpack.c.l.b16 %v239
    %v503 = vunpack.c.l.b16 %v240
    %v504 = vunpack.c.l.b16 %v241
    %v505 = vunpack.c.l.b16 %v242
    %v506 = vunpack.c.l.b16 %v243
    %v507 = vunpack.c.l.b16 %v244
    %v508 = vunpack.c.l.b16 %v245
    %v509 = vunpack.c.l.b16 %v246
    %v510 = vunpack.c.l.b16 %v247
    %v511 = vunpack.c.l.b16 %v248
    %v512 = vunpack.c.l.b16 %v249
    %v513 = vunpack.c.l.b16 %v250
    %v514 = vunpack.c.l.b16 %v251
    %v515 = vunpack.c.l.b16 %v252
    %v516 = vunpack.c.l.b16 %v253
    %v517 = vunpack.c.l.b16 %v254
    %v518 = vunpack.c.l.b16 %v255
    %v519 = vunpack.c.l.b16 %v256
    %v520 = vunpack.c.l.b16 %v257
    %v521 = vunpack.c.l.b16 %v258
    %v522 = vunpack.c.l.b16 %v259
    %v523 = vunpack.c.l.b16 %v260
    %v524 = vunpack.c.l.b16 %v261
    %v525 = vunpack.c.l.b16 %v262
    %v526 = vunpack.c.l.b16 %v263
    %v527 = vunpack.c.l.b16 %v264
    %v528 = vunpack.c.l.b16 %v265
    %v529 = vunpack.c.l.b16 %v266
    %v530 = vunpack.c.l.b16 %v267
    %v531 = vunpack.c.l.b16 %v268
    %v532 = vunpack.c.l.b16 %v269
    %v533 = vunpack.c.l.b16 %v270
    %v534 = vunpack.c.l.b16 %v271
    %v535 = vunpack.c.l.b16 %v272
    %v536 = vunpack.c.l.b16 %v273
    %v537 = vpack.c.b16 %v410, %v409
    %v538 = vpack.c.b16 %v412, %v411
    %v539 = vpack.c.b16 %v414, %v413
    %v540 = vpack.c.b16 %v416, %v415
    %v541 = vpack.c.b16 %v418, %v417
    %v542 = vpack.c.b16 %v420, %v419
    %v543 = vpack.c.b16 %v422, %v421
    %v544 = vpack.c.b16 %v424, %v423
    %v545 = vpack.c.b16 %v426, %v425
    %v546 = vpack.c.b16 %v428, %v427
    %v547 = vpack.c.b16 %v430, %v429
    %v548 = vpack.c.b16 %v432, %v431
    %v549 = vpack.c.b16 %v434, %v433
    %v550 = vpack.c.b16 %v436, %v435
    %v551 = vpack.c.b16 %v438, %v437
    %v552 = vpack.c.b16 %v440, %v439
    %v553 = vpack.c.b16 %v442, %v441
    %v554 = vpack.c.b16 %v444, %v443
    %v555 = vpack.c.b16 %v446, %v445
    %v556 = vpack.c.b16 %v448, %v447
    %v557 = vpack.c.b16 %v450, %v449
    %v558 = vpack.c.b16 %v452, %v451
    %v559 = vpack.c.b16 %v454, %v453
    %v560 = vpack.c.b16 %v456, %v455
    %v561 = vpack.c.b16 %v458, %v457
    %v562 = vpack.c.b16 %v460, %v459
    %v563 = vpack.c.b16 %v462, %v461
    %v564 = vpack.c.b16 %v464, %v463
    %v565 = vpack.c.b16 %v466, %v465
    %v566 = vpack.c.b16 %v468, %v467
    %v567 = vpack.c.b16 %v470, %v469
    %v568 = vpack.c.b16 %v472, %v471
    %v569 = vpack.c.b16 %v474, %v473
    %v570 = vpack.c.b16 %v476, %v475
    %v571 = vpack.c.b16 %v478, %v477
    %v572 = vpack.c.b16 %v480, %v479
    %v573 = vpack.c.b16 %v482, %v481
    %v574 = vpack.c.b16 %v484, %v483
    %v575 = vpack.c.b16 %v486, %v485
    %v576 = vpack.c.b16 %v488, %v487
    %v577 = vpack.c.b16 %v490, %v489
    %v578 = vpack.c.b16 %v492, %v491
    %v579 = vpack.c.b16 %v494, %v493
    %v580 = vpack.c.b16 %v496, %v495
    %v581 = vpack.c.b16 %v498, %v497
    %v582 = vpack.c.b16 %v500, %v499
    %v583 = vpack.c.b16 %v502, %v501
    %v584 = vpack.c.b16 %v504, %v503
    %v585 = vpack.c.b16 %v506, %v505
    %v586 = vpack.c.b16 %v508, %v507
    %v587 = vpack.c.b16 %v510, %v509
    %v588 = vpack.c.b16 %v512, %v511
    %v589 = vpack.c.b16 %v514, %v513
    %v590 = vpack.c.b16 %v516, %v515
    %v591 = vpack.c.b16 %v518, %v517
    %v592 = vpack.c.b16 %v520, %v519
    %v593 = vpack.c.b16 %v522, %v521
    %v594 = vpack.c.b16 %v524, %v523
    %v595 = vpack.c.b16 %v526, %v525
    %v596 = vpack.c.b16 %v528, %v527
    %v597 = vpack.c.b16 %v530, %v529
    %v598 = vpack.c.b16 %v532, %v531
    %v599 = vpack.c.b16 %v534, %v533
    %v600 = vpack.c.b16 %v536, %v535
    %665 = vmatprep.subr.bf16.mxu0 0
    %666 = vmatpush1.bf16.msra.mxu0 %v537
    %667 = vmatprep.subr.bf16.mxu0 0
    %668 = vmatpush1.bf16.msra.mxu0 %v538
    %669 = vmatprep.subr.bf16.mxu0 0
    %670 = vmatpush1.bf16.msra.mxu0 %v539
    %671 = vmatprep.subr.bf16.mxu0 0
    %672 = vmatpush1.bf16.msra.mxu0 %v540
    %673 = vmatprep.subr.bf16.mxu0 0
    %674 = vmatpush1.bf16.msra.mxu0 %v541
    %675 = vmatprep.subr.bf16.mxu0 0
    %676 = vmatpush1.bf16.msra.mxu0 %v542
    %677 = vmatprep.subr.bf16.mxu0 0
    %678 = vmatpush1.bf16.msra.mxu0 %v543
    %679 = vmatprep.subr.bf16.mxu0 0
    %680 = vmatpush1.bf16.msra.mxu0 %v544
    %681 = vmatprep.subr.bf16.mxu0 0
    %682 = vmatpush1.bf16.msra.mxu0 %v545
    %683 = vmatprep.subr.bf16.mxu0 0
    %684 = vmatpush1.bf16.msra.mxu0 %v546
    %685 = vmatprep.subr.bf16.mxu0 0
    %686 = vmatpush1.bf16.msra.mxu0 %v547
    %687 = vmatprep.subr.bf16.mxu0 0
    %688 = vmatpush1.bf16.msra.mxu0 %v548
    %689 = vmatprep.subr.bf16.mxu0 0
    %690 = vmatpush1.bf16.msra.mxu0 %v549
    %691 = vmatprep.subr.bf16.mxu0 0
    %692 = vmatpush1.bf16.msra.mxu0 %v550
    %693 = vmatprep.subr.bf16.mxu0 0
    %694 = vmatpush1.bf16.msra.mxu0 %v551
    %695 = vmatprep.subr.bf16.mxu0 0
    %696 = vmatpush1.bf16.msra.mxu0 %v552
    %697 = vmatprep.mubr.bf16.mxu0 %v139
    %698 = vmatmul.mubr.bf16.gmra.mrb[0].mxu0 %v138
    %v699 = vpop.f32.mrb[0].mxu0
    %v700 = vadd.f32 %v279, %v699
    %v701 = vpop.f32.mrb[0].mxu0
    %v702 = vpop.f32.mrb[0].mxu0
    %v703 = vadd.f32 %v279, %v702
    %v704 = vpop.f32.mrb[0].mxu0
    %705 = vdwg.mxu0
    %706 = vmatprep.subr.bf16.mxu0 0
    %707 = vmatpush1.bf16.msra.mxu0 %v553
    %708 = vmatprep.subr.bf16.mxu0 0
    %709 = vmatpush1.bf16.msra.mxu0 %v554
    %710 = vmatprep.subr.bf16.mxu0 0
    %711 = vmatpush1.bf16.msra.mxu0 %v555
    %712 = vmatprep.subr.bf16.mxu0 0
    %713 = vmatpush1.bf16.msra.mxu0 %v556
    %714 = vmatprep.subr.bf16.mxu0 0
    %715 = vmatpush1.bf16.msra.mxu0 %v557
    %716 = vmatprep.subr.bf16.mxu0 0
    %717 = vmatpush1.bf16.msra.mxu0 %v558
    %718 = vmatprep.subr.bf16.mxu0 0
    %719 = vmatpush1.bf16.msra.mxu0 %v559
    %720 = vmatprep.subr.bf16.mxu0 0
    %721 = vmatpush1.bf16.msra.mxu0 %v560
    %722 = vmatprep.subr.bf16.mxu0 0
    %723 = vmatpush1.bf16.msra.mxu0 %v561
    %724 = vmatprep.subr.bf16.mxu0 0
    %725 = vmatpush1.bf16.msra.mxu0 %v562
    %726 = vmatprep.subr.bf16.mxu0 0
    %727 = vmatpush1.bf16.msra.mxu0 %v563
    %728 = vmatprep.subr.bf16.mxu0 0
    %729 = vmatpush1.bf16.msra.mxu0 %v564
    %730 = vmatprep.subr.bf16.mxu0 0
    %731 = vmatpush1.bf16.msra.mxu0 %v565
    %732 = vmatprep.subr.bf16.mxu0 0
    %733 = vmatpush1.bf16.msra.mxu0 %v566
    %734 = vmatprep.subr.bf16.mxu0 0
    %735 = vmatpush1.bf16.msra.mxu0 %v567
    %736 = vmatprep.subr.bf16.mxu0 0
    %737 = vmatpush1.bf16.msra.mxu0 %v568
    %738 = vmatprep.mubr.bf16.mxu0 %v141
    %739 = vmatmul.mubr.bf16.gmra.mrb[0].mxu0 %v140
    %v740 = vpop.f32.mrb[0].mxu0
    %v741 = vadd.f32 %v700, %v740
    %v742 = vpop.f32.mrb[0].mxu0
    %v743 = vpop.f32.mrb[0].mxu0
    %v744 = vadd.f32 %v703, %v743
    %v745 = vpop.f32.mrb[0].mxu0
    %746 = vdwg.mxu0
    %747 = vmatprep.subr.bf16.mxu0 0
    %748 = vmatpush1.bf16.msra.mxu0 %v569
    %749 = vmatprep.subr.bf16.mxu0 0
    %750 = vmatpush1.bf16.msra.mxu0 %v570
    %751 = vmatprep.subr.bf16.mxu0 0
    %752 = vmatpush1.bf16.msra.mxu0 %v571
    %753 = vmatprep.subr.bf16.mxu0 0
    %754 = vmatpush1.bf16.msra.mxu0 %v572
    %755 = vmatprep.subr.bf16.mxu0 0
    %756 = vmatpush1.bf16.msra.mxu0 %v573
    %757 = vmatprep.subr.bf16.mxu0 0
    %758 = vmatpush1.bf16.msra.mxu0 %v574
    %759 = vmatprep.subr.bf16.mxu0 0
    %760 = vmatpush1.bf16.msra.mxu0 %v575
    %761 = vmatprep.subr.bf16.mxu0 0
    %762 = vmatpush1.bf16.msra.mxu0 %v576
    %763 = vmatprep.subr.bf16.mxu0 0
    %764 = vmatpush1.bf16.msra.mxu0 %v577
    %765 = vmatprep.subr.bf16.mxu0 0
    %766 = vmatpush1.bf16.msra.mxu0 %v578
    %767 = vmatprep.subr.bf16.mxu0 0
    %768 = vmatpush1.bf16.msra.mxu0 %v579
    %769 = vmatprep.subr.bf16.mxu0 0
    %770 = vmatpush1.bf16.msra.mxu0 %v580
    %771 = vmatprep.subr.bf16.mxu0 0
    %772 = vmatpush1.bf16.msra.mxu0 %v581
    %773 = vmatprep.subr.bf16.mxu0 0
    %774 = vmatpush1.bf16.msra.mxu0 %v582
    %775 = vmatprep.subr.bf16.mxu0 0
    %776 = vmatpush1.bf16.msra.mxu0 %v583
    %777 = vmatprep.subr.bf16.mxu0 0
    %778 = vmatpush1.bf16.msra.mxu0 %v584
    %779 = vmatprep.mubr.bf16.mxu0 %v143
    %780 = vmatmul.mubr.bf16.gmra.mrb[0].mxu0 %v142
    %v781 = vpop.f32.mrb[0].mxu0
    %v782 = vadd.f32 %v741, %v781
    %v783 = vpop.f32.mrb[0].mxu0
    %v784 = vpop.f32.mrb[0].mxu0
    %v785 = vadd.f32 %v744, %v784
    %v786 = vpop.f32.mrb[0].mxu0
    %787 = vdwg.mxu0
    %788 = vmatprep.subr.bf16.mxu0 0
    %789 = vmatpush1.bf16.msra.mxu0 %v585
    %790 = vmatprep.subr.bf16.mxu0 0
    %791 = vmatpush1.bf16.msra.mxu0 %v586
    %792 = vmatprep.subr.bf16.mxu0 0
    %793 = vmatpush1.bf16.msra.mxu0 %v587
    %794 = vmatprep.subr.bf16.mxu0 0
    %795 = vmatpush1.bf16.msra.mxu0 %v588
    %796 = vmatprep.subr.bf16.mxu0 0
    %797 = vmatpush1.bf16.msra.mxu0 %v589
    %798 = vmatprep.subr.bf16.mxu0 0
    %799 = vmatpush1.bf16.msra.mxu0 %v590
    %800 = vmatprep.subr.bf16.mxu0 0
    %801 = vmatpush1.bf16.msra.mxu0 %v591
    %802 = vmatprep.subr.bf16.mxu0 0
    %803 = vmatpush1.bf16.msra.mxu0 %v592
    %804 = vmatprep.subr.bf16.mxu0 0
    %805 = vmatpush1.bf16.msra.mxu0 %v593
    %806 = vmatprep.subr.bf16.mxu0 0
    %807 = vmatpush1.bf16.msra.mxu0 %v594
    %808 = vmatprep.subr.bf16.mxu0 0
    %809 = vmatpush1.bf16.msra.mxu0 %v595
    %810 = vmatprep.subr.bf16.mxu0 0
    %811 = vmatpush1.bf16.msra.mxu0 %v596
    %812 = vmatprep.subr.bf16.mxu0 0
    %813 = vmatpush1.bf16.msra.mxu0 %v597
    %814 = vmatprep.subr.bf16.mxu0 0
    %815 = vmatpush1.bf16.msra.mxu0 %v598
    %816 = vmatprep.subr.bf16.mxu0 0
    %817 = vmatpush1.bf16.msra.mxu0 %v599
    %818 = vmatprep.subr.bf16.mxu0 0
    %819 = vmatpush1.bf16.msra.mxu0 %v600
    %820 = vmatprep.mubr.bf16.mxu0 %v145
    %821 = vmatmul.mubr.bf16.gmra.mrb[0].mxu0 %v144
    %v822 = vpop.f32.mrb[0].mxu0
    %v823 = vadd.f32 %v782, %v822
    %v824 = vpop.f32.mrb[0].mxu0
    %v825 = vpop.f32.mrb[0].mxu0
    %v826 = vadd.f32 %v785, %v825
    %v827 = vpop.f32.mrb[0].mxu0
    %828 = vdwg.mxu0
    %v829 = vmax.f32 %v823, 0.0
    %v830 = vmax.f32 %v826, 0.0
    %v831 = vpack.c.bf16 %v830, %v829
    %v832 = vld [vmem:[#allocation8] sm:$0xf]
    %v833 = vld [vmem:[#allocation8 + $0x4] sm:$0xf]
    %v834 = vld [vmem:[#allocation8 + $0x8] sm:$0xf]
    %v835 = vld [vmem:[#allocation8 + $0xc] sm:$0xf]
    %v836 = vld [vmem:[#allocation8 + $0x10] sm:$0xf]
    %v837 = vld [vmem:[#allocation8 + $0x14] sm:$0xf]
    %v838 = vld [vmem:[#allocation8 + $0x18] sm:$0xf]
    %v839 = vld [vmem:[#allocation8 + $0x1c] sm:$0xf]
    %v840 = vld [vmem:[#allocation8 + $0x20] sm:$0xf]
    %v841 = vld [vmem:[#allocation8 + $0x24] sm:$0xf]
    %v842 = vld [vmem:[#allocation8 + $0x28] sm:$0xf]
    %v843 = vld [vmem:[#allocation8 + $0x2c] sm:$0xf]
    %v844 = vld [vmem:[#allocation8 + $0x30] sm:$0xf]
    %v845 = vld [vmem:[#allocation8 + $0x34] sm:$0xf]
    %v846 = vld [vmem:[#allocation8 + $0x38] sm:$0xf]
    %v847 = vld [vmem:[#allocation8 + $0x3c] sm:$0xf]
    %v848 = vld [vmem:[%s5] sm:$0x1]
    %v850 = vlaneseq
    %v851 = vshrl.u32 %v850, 7
    %v852 = vsub.s32 0, %v851
    %v853 = vrot.slane %v848, %v852
    %v871 = vunpack.c.l.b16 %v832
    %v872 = vunpack.c.l.b16 %v833
    %v873 = vunpack.c.l.b16 %v834
    %v874 = vunpack.c.l.b16 %v835
    %v875 = vunpack.c.l.b16 %v836
    %v876 = vunpack.c.l.b16 %v837
    %v877 = vunpack.c.l.b16 %v838
    %v878 = vunpack.c.l.b16 %v839
    %v879 = vunpack.c.l.b16 %v840
    %v880 = vunpack.c.l.b16 %v841
    %v881 = vunpack.c.l.b16 %v842
    %v882 = vunpack.c.l.b16 %v843
    %v883 = vunpack.c.l.b16 %v844
    %v884 = vunpack.c.l.b16 %v845
    %v885 = vunpack.c.l.b16 %v846
    %v886 = vunpack.c.l.b16 %v847
    %v887 = vpack.c.b16 %v872, %v871
    %v888 = vpack.c.b16 %v874, %v873
    %v889 = vpack.c.b16 %v876, %v875
    %v890 = vpack.c.b16 %v878, %v877
    %v891 = vpack.c.b16 %v880, %v879
    %v892 = vpack.c.b16 %v882, %v881
    %v893 = vpack.c.b16 %v884, %v883
    %v894 = vpack.c.b16 %v886, %v885
    %903 = vmatprep.subr.bf16.mxu0 0
    %904 = vmatpush1.bf16.msra.mxu0 %v887
    %905 = vmatprep.subr.bf16.mxu0 0
    %906 = vmatpush1.bf16.msra.mxu0 %v888
    %907 = vmatprep.subr.bf16.mxu0 0
    %908 = vmatpush1.bf16.msra.mxu0 %v889
    %909 = vmatprep.subr.bf16.mxu0 0
    %910 = vmatpush1.bf16.msra.mxu0 %v890
    %911 = vmatprep.subr.bf16.mxu0 0
    %912 = vmatpush1.bf16.msra.mxu0 %v891
    %913 = vmatprep.subr.bf16.mxu0 0
    %914 = vmatpush1.bf16.msra.mxu0 %v892
    %915 = vmatprep.subr.bf16.mxu0 0
    %916 = vmatpush1.bf16.msra.mxu0 %v893
    %917 = vmatprep.subr.bf16.mxu0 0
    %918 = vmatpush1.bf16.msra.mxu0 %v894
    %919 = vmatprep.subr.bf16.mxu0 0
    %920 = vmatpush1.bf16.msra.mxu0 0
    %921 = vmatprep.subr.bf16.mxu0 0
    %922 = vmatpush1.bf16.msra.mxu0 0
    %923 = vmatprep.subr.bf16.mxu0 0
    %924 = vmatpush1.bf16.msra.mxu0 0
    %925 = vmatprep.subr.bf16.mxu0 0
    %926 = vmatpush1.bf16.msra.mxu0 0
    %927 = vmatprep.subr.bf16.mxu0 0
    %928 = vmatpush1.bf16.msra.mxu0 0
    %929 = vmatprep.subr.bf16.mxu0 0
    %930 = vmatpush1.bf16.msra.mxu0 0
    %931 = vmatprep.subr.bf16.mxu0 0
    %932 = vmatpush1.bf16.msra.mxu0 0
    %933 = vmatprep.subr.bf16.mxu0 0
    %934 = vmatpush1.bf16.msra.mxu0 0
    %935 = vmatprep.mubr.bf16.mxu0 0
    %936 = vmatmul.mubr.bf16.gmra.mrb[0].mxu0 %v831
    %v937 = vpop.f32.mrb[0].mxu0
    %v938 = vadd.f32 %v853, %v937
    %v939 = vpop.f32.mrb[0].mxu0
    %v940 = vpop.f32.mrb[0].mxu0
    %v941 = vadd.f32 %v853, %v940
    %v942 = vpop.f32.mrb[0].mxu0
    %943 = vdwg.mxu0
    %944 = vst [vmem:[#allocation14] sm:$0xff] %v938
    %945 = vst [vmem:[#allocation14 + $0x8] sm:$0xff] %v941
    %v946 = vlaneseq
    %v947 = vand.u32 %v946, 127
    %vm948 = vcmp.lt.s32.totalorder %v947, 32
    %v949 = vld [vmem:[#allocation5] sm:$0xff]
    %v950 = vld [vmem:[#allocation5 + $0x8] sm:$0xff]
    %v951 = vmul.f32 %v938, 0.5
    %v952 = vmul.f32 %v941, 0.5
    %v953 = vmul.f32 %v951, 1.442695
    %v954 = vpow.pop %v953
    %v955 = vmul.f32 %v952, 1.442695
    %v956 = vpow.pop %v955
    %v957 = vmul.f32 %v949, %v954
    %v958 = vmul.f32 %v950, %v956
    %v959 = vsel %vm948, %v938, %v957
    %v960 = vsel %vm948, %v941, %v958
    %v961 = vpack.c.bf16 %v960, %v959
    %v962 = vld [vmem:[#allocation10] sm:$0xf]
    %v963 = vld [vmem:[#allocation10 + $0x4] sm:$0xf]
    %v964 = vld [vmem:[#allocation10 + $0x8] sm:$0xf]
    %v965 = vld [vmem:[#allocation10 + $0xc] sm:$0xf]
    %v966 = vld [vmem:[#allocation10 + $0x10] sm:$0xf]
    %v967 = vld [vmem:[#allocation10 + $0x14] sm:$0xf]
    %v968 = vld [vmem:[#allocation10 + $0x18] sm:$0xf]
    %v969 = vld [vmem:[#allocation10 + $0x1c] sm:$0xf]
    %v970 = vld [vmem:[#allocation10 + $0x20] sm:$0xf]
    %v971 = vld [vmem:[#allocation10 + $0x24] sm:$0xf]
    %v972 = vld [vmem:[#allocation10 + $0x28] sm:$0xf]
    %v973 = vld [vmem:[#allocation10 + $0x2c] sm:$0xf]
    %v974 = vld [vmem:[#allocation10 + $0x30] sm:$0xf]
    %v975 = vld [vmem:[#allocation10 + $0x34] sm:$0xf]
    %v976 = vld [vmem:[#allocation10 + $0x38] sm:$0xf]
    %v977 = vld [vmem:[#allocation10 + $0x3c] sm:$0xf]
    %v978 = vld [vmem:[%s7] sm:$0x1]
    %v980 = vlaneseq
    %v981 = vshrl.u32 %v980, 7
    %v982 = vsub.s32 0, %v981
    %v983 = vrot.slane %v978, %v982
    %v1001 = vunpack.c.l.b16 %v962
    %v1002 = vunpack.c.l.b16 %v963
    %v1003 = vunpack.c.l.b16 %v964
    %v1004 = vunpack.c.l.b16 %v965
    %v1005 = vunpack.c.l.b16 %v966
    %v1006 = vunpack.c.l.b16 %v967
    %v1007 = vunpack.c.l.b16 %v968
    %v1008 = vunpack.c.l.b16 %v969
    %v1009 = vunpack.c.l.b16 %v970
    %v1010 = vunpack.c.l.b16 %v971
    %v1011 = vunpack.c.l.b16 %v972
    %v1012 = vunpack.c.l.b16 %v973
    %v1013 = vunpack.c.l.b16 %v974
    %v1014 = vunpack.c.l.b16 %v975
    %v1015 = vunpack.c.l.b16 %v976
    %v1016 = vunpack.c.l.b16 %v977
    %v1017 = vpack.c.b16 %v1002, %v1001
    %v1018 = vpack.c.b16 %v1004, %v1003
    %v1019 = vpack.c.b16 %v1006, %v1005
    %v1020 = vpack.c.b16 %v1008, %v1007
    %v1021 = vpack.c.b16 %v1010, %v1009
    %v1022 = vpack.c.b16 %v1012, %v1011
    %v1023 = vpack.c.b16 %v1014, %v1013
    %v1024 = vpack.c.b16 %v1016, %v1015
    %1033 = vmatprep.subr.bf16.mxu0 0
    %1034 = vmatpush1.bf16.msra.mxu0 %v1017
    %1035 = vmatprep.subr.bf16.mxu0 0
    %1036 = vmatpush1.bf16.msra.mxu0 %v1018
    %1037 = vmatprep.subr.bf16.mxu0 0
    %1038 = vmatpush1.bf16.msra.mxu0 %v1019
    %1039 = vmatprep.subr.bf16.mxu0 0
    %1040 = vmatpush1.bf16.msra.mxu0 %v1020
    %1041 = vmatprep.subr.bf16.mxu0 0
    %1042 = vmatpush1.bf16.msra.mxu0 %v1021
    %1043 = vmatprep.subr.bf16.mxu0 0
    %1044 = vmatpush1.bf16.msra.mxu0 %v1022
    %1045 = vmatprep.subr.bf16.mxu0 0
    %1046 = vmatpush1.bf16.msra.mxu0 %v1023
    %1047 = vmatprep.subr.bf16.mxu0 0
    %1048 = vmatpush1.bf16.msra.mxu0 %v1024
    %1049 = vmatprep.subr.bf16.mxu0 0
    %1050 = vmatpush1.bf16.msra.mxu0 0
    %1051 = vmatprep.subr.bf16.mxu0 0
    %1052 = vmatpush1.bf16.msra.mxu0 0
    %1053 = vmatprep.subr.bf16.mxu0 0
    %1054 = vmatpush1.bf16.msra.mxu0 0
    %1055 = vmatprep.subr.bf16.mxu0 0
    %1056 = vmatpush1.bf16.msra.mxu0 0
    %1057 = vmatprep.subr.bf16.mxu0 0
    %1058 = vmatpush1.bf16.msra.mxu0 0
    %1059 = vmatprep.subr.bf16.mxu0 0
    %1060 = vmatpush1.bf16.msra.mxu0 0
    %1061 = vmatprep.subr.bf16.mxu0 0
    %1062 = vmatpush1.bf16.msra.mxu0 0
    %1063 = vmatprep.subr.bf16.mxu0 0
    %1064 = vmatpush1.bf16.msra.mxu0 0
    %1065 = vmatprep.mubr.bf16.mxu0 0
    %1066 = vmatmul.mubr.bf16.gmra.mrb[0].mxu0 %v961
    %v1067 = vpop.f32.mrb[0].mxu0
    %v1068 = vadd.f32 %v983, %v1067
    %v1069 = vpop.f32.mrb[0].mxu0
    %v1070 = vpop.f32.mrb[0].mxu0
    %v1071 = vadd.f32 %v983, %v1070
    %v1072 = vpop.f32.mrb[0].mxu0
    %1073 = vdwg.mxu0
    %v1074 = vmax.f32 %v1068, 0.0
    %v1075 = vmax.f32 %v1071, 0.0
    %v1076 = vpack.c.bf16 %v1075, %v1074
    %v1077 = vld [vmem:[#allocation11] sm:$0xff]
    %v1078 = vld [vmem:[#allocation11 + $0x8] sm:$0xff]
    %v1079 = vld [vmem:[#allocation11 + $0x10] sm:$0xff]
    %v1080 = vld [vmem:[#allocation11 + $0x18] sm:$0xff]
    %v1081 = vld [vmem:[#allocation11 + $0x20] sm:$0xff]
    %v1082 = vld [vmem:[#allocation11 + $0x28] sm:$0xff]
    %v1083 = vld [vmem:[#allocation11 + $0x30] sm:$0xff]
    %v1084 = vld [vmem:[#allocation11 + $0x38] sm:$0xff]
    %v1085 = vld [vmem:[#allocation11 + $0x40] sm:$0xff]
    %v1086 = vld [vmem:[#allocation11 + $0x48] sm:$0xff]
    %v1087 = vld [vmem:[#allocation11 + $0x50] sm:$0xff]
    %v1088 = vld [vmem:[#allocation11 + $0x58] sm:$0xff]
    %v1089 = vld [vmem:[#allocation11 + $0x60] sm:$0xff]
    %v1090 = vld [vmem:[#allocation11 + $0x68] sm:$0xff]
    %v1091 = vld [vmem:[#allocation11 + $0x70] sm:$0xff]
    %v1092 = vld [vmem:[#allocation11 + $0x78] sm:$0xff]
    %v1093 = vld [vmem:[#allocation11 + $0x80] sm:$0xff]
    %v1094 = vld [vmem:[#allocation11 + $0x88] sm:$0xff]
    %v1095 = vld [vmem:[#allocation11 + $0x90] sm:$0xff]
    %v1096 = vld [vmem:[#allocation11 + $0x98] sm:$0xff]
    %v1097 = vld [vmem:[#allocation11 + $0xa0] sm:$0xff]
    %v1098 = vld [vmem:[#allocation11 + $0xa8] sm:$0xff]
    %v1099 = vld [vmem:[#allocation11 + $0xb0] sm:$0xff]
    %v1100 = vld [vmem:[#allocation11 + $0xb8] sm:$0xff]
    %v1101 = vld [vmem:[#allocation11 + $0xc0] sm:$0xff]
    %v1102 = vld [vmem:[#allocation11 + $0xc8] sm:$0xff]
    %v1103 = vld [vmem:[#allocation11 + $0xd0] sm:$0xff]
    %v1104 = vld [vmem:[#allocation11 + $0xd8] sm:$0xff]
    %v1105 = vld [vmem:[#allocation11 + $0xe0] sm:$0xff]
    %v1106 = vld [vmem:[#allocation11 + $0xe8] sm:$0xff]
    %v1107 = vld [vmem:[#allocation11 + $0xf0] sm:$0xff]
    %v1108 = vld [vmem:[#allocation11 + $0xf8] sm:$0xff]
    %v1109 = vld [vmem:[#allocation11 + $0x100] sm:$0xff]
    %v1110 = vld [vmem:[#allocation11 + $0x108] sm:$0xff]
    %v1111 = vld [vmem:[#allocation11 + $0x110] sm:$0xff]
    %v1112 = vld [vmem:[#allocation11 + $0x118] sm:$0xff]
    %v1113 = vld [vmem:[#allocation11 + $0x120] sm:$0xff]
    %v1114 = vld [vmem:[#allocation11 + $0x128] sm:$0xff]
    %v1115 = vld [vmem:[#allocation11 + $0x130] sm:$0xff]
    %v1116 = vld [vmem:[#allocation11 + $0x138] sm:$0xff]
    %v1117 = vld [vmem:[#allocation11 + $0x140] sm:$0xff]
    %v1118 = vld [vmem:[#allocation11 + $0x148] sm:$0xff]
    %v1119 = vld [vmem:[#allocation11 + $0x150] sm:$0xff]
    %v1120 = vld [vmem:[#allocation11 + $0x158] sm:$0xff]
    %v1121 = vld [vmem:[#allocation11 + $0x160] sm:$0xff]
    %v1122 = vld [vmem:[#allocation11 + $0x168] sm:$0xff]
    %v1123 = vld [vmem:[#allocation11 + $0x170] sm:$0xff]
    %v1124 = vld [vmem:[#allocation11 + $0x178] sm:$0xff]
    %v1125 = vld [vmem:[#allocation11 + $0x180] sm:$0xff]
    %v1126 = vld [vmem:[#allocation11 + $0x188] sm:$0xff]
    %v1127 = vld [vmem:[#allocation11 + $0x190] sm:$0xff]
    %v1128 = vld [vmem:[#allocation11 + $0x198] sm:$0xff]
    %v1129 = vld [vmem:[#allocation11 + $0x1a0] sm:$0xff]
    %v1130 = vld [vmem:[#allocation11 + $0x1a8] sm:$0xff]
    %v1131 = vld [vmem:[#allocation11 + $0x1b0] sm:$0xff]
    %v1132 = vld [vmem:[#allocation11 + $0x1b8] sm:$0xff]
    %v1133 = vld [vmem:[#allocation11 + $0x1c0] sm:$0xff]
    %v1134 = vld [vmem:[#allocation11 + $0x1c8] sm:$0xff]
    %v1135 = vld [vmem:[#allocation11 + $0x1d0] sm:$0xff]
    %v1136 = vld [vmem:[#allocation11 + $0x1d8] sm:$0xff]
    %v1137 = vld [vmem:[#allocation11 + $0x1e0] sm:$0xff]
    %v1138 = vld [vmem:[#allocation11 + $0x1e8] sm:$0xff]
    %v1139 = vld [vmem:[#allocation11 + $0x1f0] sm:$0xff]
    %v1140 = vld [vmem:[#allocation11 + $0x1f8] sm:$0xff]
    %v1141 = vld [vmem:[%s9] sm:$0xff]
    %v1143 = vlaneseq
    %v1144 = vshrl.u32 %v1143, 7
    %v1145 = vsub.s32 0, %v1144
    %v1146 = vrot.slane %v1141, %v1145
    %v1147 = vlaneseq
    %v1148 = vshrl.u32 %v1147, 7
    %v1149 = vsub.s32 1, %v1148
    %v1150 = vrot.slane %v1141, %v1149
    %v1151 = vlaneseq
    %v1152 = vshrl.u32 %v1151, 7
    %v1153 = vsub.s32 2, %v1152
    %v1154 = vrot.slane %v1141, %v1153
    %v1155 = vlaneseq
    %v1156 = vshrl.u32 %v1155, 7
    %v1157 = vsub.s32 3, %v1156
    %v1158 = vrot.slane %v1141, %v1157
    %v1159 = vlaneseq
    %v1160 = vshrl.u32 %v1159, 7
    %v1161 = vsub.s32 4, %v1160
    %v1162 = vrot.slane %v1141, %v1161
    %v1163 = vlaneseq
    %v1164 = vshrl.u32 %v1163, 7
    %v1165 = vsub.s32 5, %v1164
    %v1166 = vrot.slane %v1141, %v1165
    %v1167 = vlaneseq
    %v1168 = vshrl.u32 %v1167, 7
    %v1169 = vsub.s32 6, %v1168
    %v1170 = vrot.slane %v1141, %v1169
    %v1171 = vlaneseq
    %v1172 = vshrl.u32 %v1171, 7
    %v1173 = vsub.s32 7, %v1172
    %v1174 = vrot.slane %v1141, %v1173
    %v1247 = vunpack.c.l.b16 %v1077
    %v1248 = vunpack.c.h.b16 %v1077
    %v1249 = vunpack.c.l.b16 %v1078
    %v1250 = vunpack.c.h.b16 %v1078
    %v1251 = vunpack.c.l.b16 %v1079
    %v1252 = vunpack.c.h.b16 %v1079
    %v1253 = vunpack.c.l.b16 %v1080
    %v1254 = vunpack.c.h.b16 %v1080
    %v1255 = vunpack.c.l.b16 %v1081
    %v1256 = vunpack.c.h.b16 %v1081
    %v1257 = vunpack.c.l.b16 %v1082
    %v1258 = vunpack.c.h.b16 %v1082
    %v1259 = vunpack.c.l.b16 %v1083
    %v1260 = vunpack.c.h.b16 %v1083
    %v1261 = vunpack.c.l.b16 %v1084
    %v1262 = vunpack.c.h.b16 %v1084
    %v1263 = vunpack.c.l.b16 %v1085
    %v1264 = vunpack.c.h.b16 %v1085
    %v1265 = vunpack.c.l.b16 %v1086
    %v1266 = vunpack.c.h.b16 %v1086
    %v1267 = vunpack.c.l.b16 %v1087
    %v1268 = vunpack.c.h.b16 %v1087
    %v1269 = vunpack.c.l.b16 %v1088
    %v1270 = vunpack.c.h.b16 %v1088
    %v1271 = vunpack.c.l.b16 %v1089
    %v1272 = vunpack.c.h.b16 %v1089
    %v1273 = vunpack.c.l.b16 %v1090
    %v1274 = vunpack.c.h.b16 %v1090
    %v1275 = vunpack.c.l.b16 %v1091
    %v1276 = vunpack.c.h.b16 %v1091
    %v1277 = vunpack.c.l.b16 %v1092
    %v1278 = vunpack.c.h.b16 %v1092
    %v1279 = vunpack.c.l.b16 %v1093
    %v1280 = vunpack.c.h.b16 %v1093
    %v1281 = vunpack.c.l.b16 %v1094
    %v1282 = vunpack.c.h.b16 %v1094
    %v1283 = vunpack.c.l.b16 %v1095
    %v1284 = vunpack.c.h.b16 %v1095
    %v1285 = vunpack.c.l.b16 %v1096
    %v1286 = vunpack.c.h.b16 %v1096
    %v1287 = vunpack.c.l.b16 %v1097
    %v1288 = vunpack.c.h.b16 %v1097
    %v1289 = vunpack.c.l.b16 %v1098
    %v1290 = vunpack.c.h.b16 %v1098
    %v1291 = vunpack.c.l.b16 %v1099
    %v1292 = vunpack.c.h.b16 %v1099
    %v1293 = vunpack.c.l.b16 %v1100
    %v1294 = vunpack.c.h.b16 %v1100
    %v1295 = vunpack.c.l.b16 %v1101
    %v1296 = vunpack.c.h.b16 %v1101
    %v1297 = vunpack.c.l.b16 %v1102
    %v1298 = vunpack.c.h.b16 %v1102
    %v1299 = vunpack.c.l.b16 %v1103
    %v1300 = vunpack.c.h.b16 %v1103
    %v1301 = vunpack.c.l.b16 %v1104
    %v1302 = vunpack.c.h.b16 %v1104
    %v1303 = vunpack.c.l.b16 %v1105
    %v1304 = vunpack.c.h.b16 %v1105
    %v1305 = vunpack.c.l.b16 %v1106
    %v1306 = vunpack.c.h.b16 %v1106
    %v1307 = vunpack.c.l.b16 %v1107
    %v1308 = vunpack.c.h.b16 %v1107
    %v1309 = vunpack.c.l.b16 %v1108
    %v1310 = vunpack.c.h.b16 %v1108
    %v1311 = vunpack.c.l.b16 %v1109
    %v1312 = vunpack.c.h.b16 %v1109
    %v1313 = vunpack.c.l.b16 %v1110
    %v1314 = vunpack.c.h.b16 %v1110
    %v1315 = vunpack.c.l.b16 %v1111
    %v1316 = vunpack.c.h.b16 %v1111
    %v1317 = vunpack.c.l.b16 %v1112
    %v1318 = vunpack.c.h.b16 %v1112
    %v1319 = vunpack.c.l.b16 %v1113
    %v1320 = vunpack.c.h.b16 %v1113
    %v1321 = vunpack.c.l.b16 %v1114
    %v1322 = vunpack.c.h.b16 %v1114
    %v1323 = vunpack.c.l.b16 %v1115
    %v1324 = vunpack.c.h.b16 %v1115
    %v1325 = vunpack.c.l.b16 %v1116
    %v1326 = vunpack.c.h.b16 %v1116
    %v1327 = vunpack.c.l.b16 %v1117
    %v1328 = vunpack.c.h.b16 %v1117
    %v1329 = vunpack.c.l.b16 %v1118
    %v1330 = vunpack.c.h.b16 %v1118
    %v1331 = vunpack.c.l.b16 %v1119
    %v1332 = vunpack.c.h.b16 %v1119
    %v1333 = vunpack.c.l.b16 %v1120
    %v1334 = vunpack.c.h.b16 %v1120
    %v1335 = vunpack.c.l.b16 %v1121
    %v1336 = vunpack.c.h.b16 %v1121
    %v1337 = vunpack.c.l.b16 %v1122
    %v1338 = vunpack.c.h.b16 %v1122
    %v1339 = vunpack.c.l.b16 %v1123
    %v1340 = vunpack.c.h.b16 %v1123
    %v1341 = vunpack.c.l.b16 %v1124
    %v1342 = vunpack.c.h.b16 %v1124
    %v1343 = vunpack.c.l.b16 %v1125
    %v1344 = vunpack.c.h.b16 %v1125
    %v1345 = vunpack.c.l.b16 %v1126
    %v1346 = vunpack.c.h.b16 %v1126
    %v1347 = vunpack.c.l.b16 %v1127
    %v1348 = vunpack.c.h.b16 %v1127
    %v1349 = vunpack.c.l.b16 %v1128
    %v1350 = vunpack.c.h.b16 %v1128
    %v1351 = vunpack.c.l.b16 %v1129
    %v1352 = vunpack.c.h.b16 %v1129
    %v1353 = vunpack.c.l.b16 %v1130
    %v1354 = vunpack.c.h.b16 %v1130
    %v1355 = vunpack.c.l.b16 %v1131
    %v1356 = vunpack.c.h.b16 %v1131
    %v1357 = vunpack.c.l.b16 %v1132
    %v1358 = vunpack.c.h.b16 %v1132
    %v1359 = vunpack.c.l.b16 %v1133
    %v1360 = vunpack.c.h.b16 %v1133
    %v1361 = vunpack.c.l.b16 %v1134
    %v1362 = vunpack.c.h.b16 %v1134
    %v1363 = vunpack.c.l.b16 %v1135
    %v1364 = vunpack.c.h.b16 %v1135
    %v1365 = vunpack.c.l.b16 %v1136
    %v1366 = vunpack.c.h.b16 %v1136
    %v1367 = vunpack.c.l.b16 %v1137
    %v1368 = vunpack.c.h.b16 %v1137
    %v1369 = vunpack.c.l.b16 %v1138
    %v1370 = vunpack.c.h.b16 %v1138
    %v1371 = vunpack.c.l.b16 %v1139
    %v1372 = vunpack.c.h.b16 %v1139
    %v1373 = vunpack.c.l.b16 %v1140
    %v1374 = vunpack.c.h.b16 %v1140
    %v1375 = vpack.c.b16 %v1255, %v1247
    %v1376 = vpack.c.b16 %v1256, %v1248
    %v1377 = vpack.c.b16 %v1257, %v1249
    %v1378 = vpack.c.b16 %v1258, %v1250
    %v1379 = vpack.c.b16 %v1259, %v1251
    %v1380 = vpack.c.b16 %v1260, %v1252
    %v1381 = vpack.c.b16 %v1261, %v1253
    %v1382 = vpack.c.b16 %v1262, %v1254
    %v1383 = vpack.c.b16 %v1271, %v1263
    %v1384 = vpack.c.b16 %v1272, %v1264
    %v1385 = vpack.c.b16 %v1273, %v1265
    %v1386 = vpack.c.b16 %v1274, %v1266
    %v1387 = vpack.c.b16 %v1275, %v1267
    %v1388 = vpack.c.b16 %v1276, %v1268
    %v1389 = vpack.c.b16 %v1277, %v1269
    %v1390 = vpack.c.b16 %v1278, %v1270
    %v1391 = vpack.c.b16 %v1287, %v1279
    %v1392 = vpack.c.b16 %v1288, %v1280
    %v1393 = vpack.c.b16 %v1289, %v1281
    %v1394 = vpack.c.b16 %v1290, %v1282
    %v1395 = vpack.c.b16 %v1291, %v1283
    %v1396 = vpack.c.b16 %v1292, %v1284
    %v1397 = vpack.c.b16 %v1293, %v1285
    %v1398 = vpack.c.b16 %v1294, %v1286
    %v1399 = vpack.c.b16 %v1303, %v1295
    %v1400 = vpack.c.b16 %v1304, %v1296
    %v1401 = vpack.c.b16 %v1305, %v1297
    %v1402 = vpack.c.b16 %v1306, %v1298
    %v1403 = vpack.c.b16 %v1307, %v1299
    %v1404 = vpack.c.b16 %v1308, %v1300
    %v1405 = vpack.c.b16 %v1309, %v1301
    %v1406 = vpack.c.b16 %v1310, %v1302
    %v1407 = vpack.c.b16 %v1319, %v1311
    %v1408 = vpack.c.b16 %v1320, %v1312
    %v1409 = vpack.c.b16 %v1321, %v1313
    %v1410 = vpack.c.b16 %v1322, %v1314
    %v1411 = vpack.c.b16 %v1323, %v1315
    %v1412 = vpack.c.b16 %v1324, %v1316
    %v1413 = vpack.c.b16 %v1325, %v1317
    %v1414 = vpack.c.b16 %v1326, %v1318
    %v1415 = vpack.c.b16 %v1335, %v1327
    %v1416 = vpack.c.b16 %v1336, %v1328
    %v1417 = vpack.c.b16 %v1337, %v1329
    %v1418 = vpack.c.b16 %v1338, %v1330
    %v1419 = vpack.c.b16 %v1339, %v1331
    %v1420 = vpack.c.b16 %v1340, %v1332
    %v1421 = vpack.c.b16 %v1341, %v1333
    %v1422 = vpack.c.b16 %v1342, %v1334
    %v1423 = vpack.c.b16 %v1351, %v1343
    %v1424 = vpack.c.b16 %v1352, %v1344
    %v1425 = vpack.c.b16 %v1353, %v1345
    %v1426 = vpack.c.b16 %v1354, %v1346
    %v1427 = vpack.c.b16 %v1355, %v1347
    %v1428 = vpack.c.b16 %v1356, %v1348
    %v1429 = vpack.c.b16 %v1357, %v1349
    %v1430 = vpack.c.b16 %v1358, %v1350
    %v1431 = vpack.c.b16 %v1367, %v1359
    %v1432 = vpack.c.b16 %v1368, %v1360
    %v1433 = vpack.c.b16 %v1369, %v1361
    %v1434 = vpack.c.b16 %v1370, %v1362
    %v1435 = vpack.c.b16 %v1371, %v1363
    %v1436 = vpack.c.b16 %v1372, %v1364
    %v1437 = vpack.c.b16 %v1373, %v1365
    %v1438 = vpack.c.b16 %v1374, %v1366
    %1503 = vmatprep.subr.bf16.mxu0 %v1376
    %1504 = vmatpush1.bf16.msra.mxu0 %v1375
    %1505 = vmatprep.subr.bf16.mxu0 %v1384
    %1506 = vmatpush1.bf16.msra.mxu0 %v1383
    %1507 = vmatprep.subr.bf16.mxu0 %v1392
    %1508 = vmatpush1.bf16.msra.mxu0 %v1391
    %1509 = vmatprep.subr.bf16.mxu0 %v1400
    %1510 = vmatpush1.bf16.msra.mxu0 %v1399
    %1511 = vmatprep.subr.bf16.mxu0 %v1408
    %1512 = vmatpush1.bf16.msra.mxu0 %v1407
    %1513 = vmatprep.subr.bf16.mxu0 %v1416
    %1514 = vmatpush1.bf16.msra.mxu0 %v1415
    %1515 = vmatprep.subr.bf16.mxu0 %v1424
    %1516 = vmatpush1.bf16.msra.mxu0 %v1423
    %1517 = vmatprep.subr.bf16.mxu0 %v1432
    %1518 = vmatpush1.bf16.msra.mxu0 %v1431
    %1519 = vmatprep.subr.bf16.mxu0 0
    %1520 = vmatpush1.bf16.msra.mxu0 0
    %1521 = vmatprep.subr.bf16.mxu0 0
    %1522 = vmatpush1.bf16.msra.mxu0 0
    %1523 = vmatprep.subr.bf16.mxu0 0
    %1524 = vmatpush1.bf16.msra.mxu0 0
    %1525 = vmatprep.subr.bf16.mxu0 0
    %1526 = vmatpush1.bf16.msra.mxu0 0
    %1527 = vmatprep.subr.bf16.mxu0 0
    %1528 = vmatpush1.bf16.msra.mxu0 0
    %1529 = vmatprep.subr.bf16.mxu0 0
    %1530 = vmatpush1.bf16.msra.mxu0 0
    %1531 = vmatprep.subr.bf16.mxu0 0
    %1532 = vmatpush1.bf16.msra.mxu0 0
    %1533 = vmatprep.subr.bf16.mxu0 0
    %1534 = vmatpush1.bf16.msra.mxu0 0
    %1535 = vmatprep.mubr.bf16.mxu0 0
    %1536 = vmatmul.mubr.bf16.gmra.mrb[0].mxu0 %v1076
    %v1537 = vpop.f32.mrb[0].mxu0
    %v1538 = vadd.f32 %v1146, %v1537
    %v1539 = vpop.f32.mrb[0].mxu0
    %v1540 = vadd.f32 %v1150, %v1539
    %v1541 = vpop.f32.mrb[0].mxu0
    %v1542 = vadd.f32 %v1146, %v1541
    %v1543 = vpop.f32.mrb[0].mxu0
    %v1544 = vadd.f32 %v1150, %v1543
    %1545 = vdwg.mxu0
    %1546 = vmatprep.subr.bf16.mxu0 %v1378
    %1547 = vmatpush1.bf16.msra.mxu0 %v1377
    %1548 = vmatprep.subr.bf16.mxu0 %v1386
    %1549 = vmatpush1.bf16.msra.mxu0 %v1385
    %1550 = vmatprep.subr.bf16.mxu0 %v1394
    %1551 = vmatpush1.bf16.msra.mxu0 %v1393
    %1552 = vmatprep.subr.bf16.mxu0 %v1402
    %1553 = vmatpush1.bf16.msra.mxu0 %v1401
    %1554 = vmatprep.subr.bf16.mxu0 %v1410
    %1555 = vmatpush1.bf16.msra.mxu0 %v1409
    %1556 = vmatprep.subr.bf16.mxu0 %v1418
    %1557 = vmatpush1.bf16.msra.mxu0 %v1417
    %1558 = vmatprep.subr.bf16.mxu0 %v1426
    %1559 = vmatpush1.bf16.msra.mxu0 %v1425
    %1560 = vmatprep.subr.bf16.mxu0 %v1434
    %1561 = vmatpush1.bf16.msra.mxu0 %v1433
    %1562 = vmatprep.subr.bf16.mxu0 0
    %1563 = vmatpush1.bf16.msra.mxu0 0
    %1564 = vmatprep.subr.bf16.mxu0 0
    %1565 = vmatpush1.bf16.msra.mxu0 0
    %1566 = vmatprep.subr.bf16.mxu0 0
    %1567 = vmatpush1.bf16.msra.mxu0 0
    %1568 = vmatprep.subr.bf16.mxu0 0
    %1569 = vmatpush1.bf16.msra.mxu0 0
    %1570 = vmatprep.subr.bf16.mxu0 0
    %1571 = vmatpush1.bf16.msra.mxu0 0
    %1572 = vmatprep.subr.bf16.mxu0 0
    %1573 = vmatpush1.bf16.msra.mxu0 0
    %1574 = vmatprep.subr.bf16.mxu0 0
    %1575 = vmatpush1.bf16.msra.mxu0 0
    %1576 = vmatprep.subr.bf16.mxu0 0
    %1577 = vmatpush1.bf16.msra.mxu0 0
    %1578 = vmatprep.mubr.bf16.mxu0 0
    %1579 = vmatmul.mubr.bf16.gmra.mrb[0].mxu0 %v1076
    %v1580 = vpop.f32.mrb[0].mxu0
    %v1581 = vadd.f32 %v1154, %v1580
    %v1582 = vpop.f32.mrb[0].mxu0
    %v1583 = vadd.f32 %v1158, %v1582
    %v1584 = vpop.f32.mrb[0].mxu0
    %v1585 = vadd.f32 %v1154, %v1584
    %v1586 = vpop.f32.mrb[0].mxu0
    %v1587 = vadd.f32 %v1158, %v1586
    %1588 = vdwg.mxu0
    %1589 = vmatprep.subr.bf16.mxu0 %v1380
    %1590 = vmatpush1.bf16.msra.mxu0 %v1379
    %1591 = vmatprep.subr.bf16.mxu0 %v1388
    %1592 = vmatpush1.bf16.msra.mxu0 %v1387
    %1593 = vmatprep.subr.bf16.mxu0 %v1396
    %1594 = vmatpush1.bf16.msra.mxu0 %v1395
    %1595 = vmatprep.subr.bf16.mxu0 %v1404
    %1596 = vmatpush1.bf16.msra.mxu0 %v1403
    %1597 = vmatprep.subr.bf16.mxu0 %v1412
    %1598 = vmatpush1.bf16.msra.mxu0 %v1411
    %1599 = vmatprep.subr.bf16.mxu0 %v1420
    %1600 = vmatpush1.bf16.msra.mxu0 %v1419
    %1601 = vmatprep.subr.bf16.mxu0 %v1428
    %1602 = vmatpush1.bf16.msra.mxu0 %v1427
    %1603 = vmatprep.subr.bf16.mxu0 %v1436
    %1604 = vmatpush1.bf16.msra.mxu0 %v1435
    %1605 = vmatprep.subr.bf16.mxu0 0
    %1606 = vmatpush1.bf16.msra.mxu0 0
    %1607 = vmatprep.subr.bf16.mxu0 0
    %1608 = vmatpush1.bf16.msra.mxu0 0
    %1609 = vmatprep.subr.bf16.mxu0 0
    %1610 = vmatpush1.bf16.msra.mxu0 0
    %1611 = vmatprep.subr.bf16.mxu0 0
    %1612 = vmatpush1.bf16.msra.mxu0 0
    %1613 = vmatprep.subr.bf16.mxu0 0
    %1614 = vmatpush1.bf16.msra.mxu0 0
    %1615 = vmatprep.subr.bf16.mxu0 0
    %1616 = vmatpush1.bf16.msra.mxu0 0
    %1617 = vmatprep.subr.bf16.mxu0 0
    %1618 = vmatpush1.bf16.msra.mxu0 0
    %1619 = vmatprep.subr.bf16.mxu0 0
    %1620 = vmatpush1.bf16.msra.mxu0 0
    %1621 = vmatprep.mubr.bf16.mxu0 0
    %1622 = vmatmul.mubr.bf16.gmra.mrb[0].mxu0 %v1076
    %v1623 = vpop.f32.mrb[0].mxu0
    %v1624 = vadd.f32 %v1162, %v1623
    %v1625 = vpop.f32.mrb[0].mxu0
    %v1626 = vadd.f32 %v1166, %v1625
    %v1627 = vpop.f32.mrb[0].mxu0
    %v1628 = vadd.f32 %v1162, %v1627
    %v1629 = vpop.f32.mrb[0].mxu0
    %v1630 = vadd.f32 %v1166, %v1629
    %1631 = vdwg.mxu0
    %1632 = vmatprep.subr.bf16.mxu0 %v1382
    %1633 = vmatpush1.bf16.msra.mxu0 %v1381
    %1634 = vmatprep.subr.bf16.mxu0 %v1390
    %1635 = vmatpush1.bf16.msra.mxu0 %v1389
    %1636 = vmatprep.subr.bf16.mxu0 %v1398
    %1637 = vmatpush1.bf16.msra.mxu0 %v1397
    %1638 = vmatprep.subr.bf16.mxu0 %v1406
    %1639 = vmatpush1.bf16.msra.mxu0 %v1405
    %1640 = vmatprep.subr.bf16.mxu0 %v1414
    %1641 = vmatpush1.bf16.msra.mxu0 %v1413
    %1642 = vmatprep.subr.bf16.mxu0 %v1422
    %1643 = vmatpush1.bf16.msra.mxu0 %v1421
    %1644 = vmatprep.subr.bf16.mxu0 %v1430
    %1645 = vmatpush1.bf16.msra.mxu0 %v1429
    %1646 = vmatprep.subr.bf16.mxu0 %v1438
    %1647 = vmatpush1.bf16.msra.mxu0 %v1437
    %1648 = vmatprep.subr.bf16.mxu0 0
    %1649 = vmatpush1.bf16.msra.mxu0 0
    %1650 = vmatprep.subr.bf16.mxu0 0
    %1651 = vmatpush1.bf16.msra.mxu0 0
    %1652 = vmatprep.subr.bf16.mxu0 0
    %1653 = vmatpush1.bf16.msra.mxu0 0
    %1654 = vmatprep.subr.bf16.mxu0 0
    %1655 = vmatpush1.bf16.msra.mxu0 0
    %1656 = vmatprep.subr.bf16.mxu0 0
    %1657 = vmatpush1.bf16.msra.mxu0 0
    %1658 = vmatprep.subr.bf16.mxu0 0
    %1659 = vmatpush1.bf16.msra.mxu0 0
    %1660 = vmatprep.subr.bf16.mxu0 0
    %1661 = vmatpush1.bf16.msra.mxu0 0
    %1662 = vmatprep.subr.bf16.mxu0 0
    %1663 = vmatpush1.bf16.msra.mxu0 0
    %1664 = vmatprep.mubr.bf16.mxu0 0
    %1665 = vmatmul.mubr.bf16.gmra.mrb[0].mxu0 %v1076
    %v1666 = vpop.f32.mrb[0].mxu0
    %v1667 = vadd.f32 %v1170, %v1666
    %v1668 = vpop.f32.mrb[0].mxu0
    %v1669 = vadd.f32 %v1174, %v1668
    %v1670 = vpop.f32.mrb[0].mxu0
    %v1671 = vadd.f32 %v1170, %v1670
    %v1672 = vpop.f32.mrb[0].mxu0
    %v1673 = vadd.f32 %v1174, %v1672
    %1674 = vdwg.mxu0
    %v1675 = vpack.c.bf16 %v1542, %v1538
    %v1676 = vpack.c.bf16 %v1544, %v1540
    %v1677 = vpack.c.bf16 %v1585, %v1581
    %v1678 = vpack.c.bf16 %v1587, %v1583
    %v1679 = vpack.c.bf16 %v1628, %v1624
    %v1680 = vpack.c.bf16 %v1630, %v1626
    %v1681 = vpack.c.bf16 %v1671, %v1667
    %v1682 = vpack.c.bf16 %v1673, %v1669
    %v1691 = vunpack.c.l.b16 %v1675
    %v1692 = vunpack.c.l.b16 %v1676
    %v1693 = vunpack.c.l.b16 %v1677
    %v1694 = vunpack.c.l.b16 %v1678
    %v1695 = vunpack.c.l.b16 %v1679
    %v1696 = vunpack.c.l.b16 %v1680
    %v1697 = vunpack.c.l.b16 %v1681
    %v1698 = vunpack.c.l.b16 %v1682
    %v1699 = vunpack.c.h.b16 %v1675
    %v1700 = vunpack.c.h.b16 %v1676
    %v1701 = vunpack.c.h.b16 %v1677
    %v1702 = vunpack.c.h.b16 %v1678
    %v1703 = vunpack.c.h.b16 %v1679
    %v1704 = vunpack.c.h.b16 %v1680
    %v1705 = vunpack.c.h.b16 %v1681
    %v1706 = vunpack.c.h.b16 %v1682
    %v1707 = vpack.c.b16 %v1692, %v1691
    %v1708 = vpack.c.b16 %v1694, %v1693
    %v1709 = vpack.c.b16 %v1696, %v1695
    %v1710 = vpack.c.b16 %v1698, %v1697
    %v1711 = vpack.c.b16 %v1700, %v1699
    %v1712 = vpack.c.b16 %v1702, %v1701
    %v1713 = vpack.c.b16 %v1704, %v1703
    %v1714 = vpack.c.b16 %v1706, %v1705
    %1723 = vst [vmem:[#allocation13] sm:$0xff] %v1707
    %1724 = vst [vmem:[#allocation13 + $0x8] sm:$0xff] %v1708
    %1725 = vst [vmem:[#allocation13 + $0x10] sm:$0xff] %v1709
    %1726 = vst [vmem:[#allocation13 + $0x18] sm:$0xff] %v1710
    %1727 = vst [vmem:[#allocation13 + $0x20] sm:$0xff] %v1711
    %1728 = vst [vmem:[#allocation13 + $0x28] sm:$0xff] %v1712
    %1729 = vst [vmem:[#allocation13 + $0x30] sm:$0xff] %v1713
    %1730 = vst [vmem:[#allocation13 + $0x38] sm:$0xff] %v1714
    // Predicated region
    $region66: #{tpu_custom_call.1} parent=1 // pred_check
      _
    $region67: #{tpu_custom_call.1} parent=1 // pred_check_branch
      %1732 = sbr.rel (0) target = $region69
    $region68: #{tpu_custom_call.1} parent=1 // pred_region
      %s1734 = ssub.s32 1024, 1024
      %1735 = vsyncadd [#allocation4], %s1734
      %s1736 = sshll.u32 [#allocation13], 4
      %s1737 = int_to_ptr.vmem [resolvable:$true] %s1736
      %1742 = dma.vmem_to_hbm [thread:$0]  %s1737, 1024, %s10, [#allocation4], 512, 512, 32
    $region69: #{tpu_custom_call.1} parent=1 // pred_fallthru
      _
    // Predicated region
    $region70: #{tpu_custom_call.1} parent=1 // pred_check
      _
    $region71: #{tpu_custom_call.1} parent=1 // pred_check_branch
      %1744 = sbr.rel (0) target = $region73
    $region72: #{tpu_custom_call.1} parent=1 // pred_region
      %s1746 = ssub.s32 256, 256
      %1747 = vsyncadd [#allocation15], %s1746
      %s1748 = sshll.u32 [#allocation14], 4
      %s1749 = int_to_ptr.vmem [resolvable:$true] %s1748
      %1754 = dma.vmem_to_hbm [thread:$0]  %s1749, 256, %s11, [#allocation15], 128, 128, 8
    $region73: #{tpu_custom_call.1} parent=1 // pred_fallthru
      _
    // Predicated region
    $region74: #{tpu_custom_call.1} parent=1 // pred_check
      _
    $region75: #{tpu_custom_call.1} parent=1 // pred_check_branch
      %1756 = sbr.rel (0) target = $region77
    $region76: #{tpu_custom_call.1} parent=1 // pred_region
      %1757 = dma.done [#allocation4], 1024
    $region77: #{tpu_custom_call.1} parent=1 // pred_fallthru
      _
    // Predicated region
    $region78: #{tpu_custom_call.1} parent=1 // pred_check
      _
    $region79: #{tpu_custom_call.1} parent=1 // pred_check_branch
      %1759 = sbr.rel (0) target = $region81
    $region80: #{tpu_custom_call.1} parent=1 // pred_region
      %1760 = dma.done [#allocation15], 256
    $region81: #{tpu_custom_call.1} parent=1 // pred_fallthru
      _
    %1761 = vsyncpa [#allocation3], 1
    %1762 = vsyncpa [#allocation6], 1
    %1763 = vsyncpa [#allocation9], 1
    %1764 = vsyncpa [#allocation12], 1
    %1765 = vsyncpa [#allocation4], 1
    %1766 = vsyncpa [#allocation15], 1

</llo_original>
